<compile_context>
chip_gen: v5e
topology: v5e:2x2
jax: 0.10.0
libtpu: 0.0.40
codegen_flags: <defaults>
</compile_context>

<pallas_src>
import functools

import jax
import jax.numpy as jnp
from jax import lax
from jax.experimental import pallas as pl
from jax.experimental.pallas import tpu as pltpu

LANE = 128


def _round_up(n, m):
    return ((n + m - 1) // m) * m


def _pick_tile_h(H, Wp, Cp):
    """Largest row tile (divisor of H, multiple of 8) whose activation slab is small."""
    budget = 4 * 1024 * 1024            # bytes for one (TH, Wp, Cp) f32 slab
    best = H
    for cand in (64, 32, 16, 8):
        if H % cand == 0:
            best = cand
            if cand * Wp * Cp * 4 <= budget:
                return cand
    return best


# ----------------------------- Pallas kernel --------------------------------

def _residual_block_kernel(xc_ref, xt_ref, xb_ref,
                           w1_ref, b1_ref, w2_ref, b2_ref, w3_ref, b3_ref,
                           o_ref, *, W, Wp, TH):
    # xc_ref : (1, TH, Wp, Cp) f32   center rows of this tile
    # xt_ref : (1, 1, Wp, Cp)  f32   row above the tile (clamped at the top edge)
    # xb_ref : (1, 1, Wp, Cp)  f32   row below the tile (clamped at the bottom edge)
    # o_ref  : (1, TH, Wp, Cp) f32
    r = pl.program_id(1)
    nr = pl.num_programs(1)

    Cp = xc_ref.shape[-1]
    C2p = w1_ref.shape[-1]
    THW = TH * Wp
    R = (TH + 2) * Wp                   # flat rows including the +/-1 row halo

    w1 = w1_ref[...]
    b1 = b1_ref[...]

    # ---- conv1 (1x1) + folded BN + ReLU --------------------------------
    xc = xc_ref[0].reshape(THW, Cp)                       # f32, reused for residual
    h1_mid = jnp.maximum(
        jnp.dot(xc.astype(jnp.bfloat16), w1, preferred_element_type=jnp.float32) + b1,
        0.0)

    # 1-row halos; where they fall outside the image the 3x3 conv sees zero
    # padding, so only these small (Wp, C2p) slabs are zeroed (scalar multiply).
    xt = xt_ref[0, 0].astype(jnp.bfloat16)                # (Wp, Cp)
    xb = xb_ref[0, 0].astype(jnp.bfloat16)
    h1_top = jnp.maximum(jnp.dot(xt, w1, preferred_element_type=jnp.float32) + b1, 0.0)
    h1_bot = jnp.maximum(jnp.dot(xb, w1, preferred_element_type=jnp.float32) + b1, 0.0)
    h1_top = h1_top * (r > 0).astype(jnp.float32)
    h1_bot = h1_bot * (r < nr - 1).astype(jnp.float32)

    h1 = jnp.concatenate([h1_top, h1_mid, h1_bot], axis=0)    # (R, C2p) f32

    # ---- conv2 (3x3, pad=1) + folded BN + ReLU -------------------------
    w_idx = lax.broadcasted_iota(jnp.int32, (R, 1), 0) % Wp
    if Wp > W:                          # static: zero the padded-width columns
        h1 = jnp.where(w_idx < W, h1, 0.0)
    # Column (+/-1) taps via XLU roll + edge mask; the wrap across row
    # boundaries lands exactly on the masked columns.
    # TODO(synk): build taps from a single bf16 copy (packed bf16 sublane roll)
    # once verified on the target chip; f32 roll kept for portability.
    h1_l = jnp.where(w_idx > 0, pltpu.roll(h1, shift=1, axis=0), 0.0)      # in[., w-1]
    h1_r = jnp.where(w_idx < Wp - 1, pltpu.roll(h1, shift=R - 1, axis=0), 0.0)  # in[., w+1]

    # Fuse the three dx taps along K: (R, 3*C2p) bf16 -> 3 matmuls with K = 3*C2p.
    h1cat = jnp.concatenate([h1_l.astype(jnp.bfloat16),
                             h1.astype(jnp.bfloat16),
                             h1_r.astype(jnp.bfloat16)], axis=1)

    acc = jnp.dot(h1cat[0:THW, :], w2_ref[0], preferred_element_type=jnp.float32)
    for dy in range(1, 3):                                 # static unroll
        lo = dy * Wp                                       # 8-aligned sublane offset
        acc = acc + jnp.dot(h1cat[lo:lo + THW, :], w2_ref[dy],
                            preferred_element_type=jnp.float32)
    h2 = jnp.maximum(acc + b2_ref[...], 0.0)

    # ---- conv3 (1x1) + folded BN (no activation) + residual add --------
    h3 = jnp.dot(h2.astype(jnp.bfloat16), w3_ref[...],
                 preferred_element_type=jnp.float32) + b3_ref[...]
    o_ref[0] = (xc + h3).reshape(TH, Wp, Cp)


def residual_block_pallas(x, w1, b1, w2, b2, w3, b3, *, W, tile_h):
    """x: (N, H, Wp, Cp) f32, channel- and width-padded (zeros)."""
    N, H, Wp, Cp = x.shape
    C2p = w1.shape[-1]
    TH = tile_h
    assert H % TH == 0, "H must be divisible by the row tile"
    grid = (N, H // TH)

    kernel = functools.partial(_residual_block_kernel, W=W, Wp=Wp, TH=TH)

    def x_mid_map(n, r):
        return (n, r, 0, 0)

    def x_top_map(n, r):                # row above the tile; clamped (content
        return (n, jnp.maximum(r * TH - 1, 0), 0, 0)   # unused/zeroed at r == 0)

    def x_bot_map(n, r):                # row below the tile; clamped at the bottom
        return (n, jnp.minimum(r * TH + TH, H - 1), 0, 0)

    flops = 2 * N * H * Wp * (Cp * C2p + 9 * C2p * C2p + C2p * Cp)
    bytes_accessed = (N * H * Wp * Cp * 4                       # x center read
                      + N * (H // TH) * 2 * Wp * Cp * 4         # halo rows
                      + N * H * Wp * Cp * 4                     # output write
                      + (w1.size + w2.size + w3.size) * 2
                      + (b1.size + b2.size + b3.size) * 4)

    return pl.pallas_call(
        kernel,
        out_shape=jax.ShapeDtypeStruct((N, H, Wp, Cp), jnp.float32),
        grid_spec=pltpu.PrefetchScalarGridSpec(
            num_scalar_prefetch=0,
            grid=grid,
            in_specs=[
                pl.BlockSpec((1, TH, Wp, Cp), x_mid_map),
                pl.BlockSpec((1, 1, Wp, Cp), x_top_map),
                pl.BlockSpec((1, 1, Wp, Cp), x_bot_map),
                # Weights/biases: constant index maps -> fetched once, stay resident.
                pl.BlockSpec((Cp, C2p), lambda n, r: (0, 0)),
                pl.BlockSpec((1, C2p), lambda n, r: (0, 0)),
                pl.BlockSpec((3, 3 * C2p, C2p), lambda n, r: (0, 0, 0)),
                pl.BlockSpec((1, C2p), lambda n, r: (0, 0)),
                pl.BlockSpec((C2p, Cp), lambda n, r: (0, 0)),
                pl.BlockSpec((1, Cp), lambda n, r: (0, 0)),
            ],
            out_specs=pl.BlockSpec((1, TH, Wp, Cp), lambda n, r: (n, r, 0, 0)),
        ),
        compiler_params=pltpu.CompilerParams(
            # Row tiles are fully independent -> both axes parallel (v7x megacore).
            dimension_semantics=("parallel", "parallel"),
            vmem_limit_bytes=48 * 1024 * 1024,
        ),
        cost_estimate=pl.CostEstimate(flops=flops, transcendentals=0,
                                      bytes_accessed=bytes_accessed),
    )(x, x, x, w1, b1, w2, b2, w3, b3)


@jax.jit
def residual_block_forward_nhwc(x_nhwc, folded):
    """x_nhwc: (N, H, W, C) f32 -> (N, H, W, C) f32."""
    N, H, W, C = x_nhwc.shape
    Cp = folded[0].shape[0]
    Wp = _round_up(W, 8)
    TH = _pick_tile_h(H, Wp, Cp)
    # Lane-pad channels and sublane-pad width once, outside the kernel.
    # TODO(synk): optionally keep activations in bf16 at the kernel boundary on
    # v5e (mem-bound) if the accuracy budget allows.
    x_p = jnp.pad(x_nhwc, ((0, 0), (0, 0), (0, Wp - W), (0, Cp - C)))
    y = residual_block_pallas(x_p, *folded, W=W, tile_h=TH)
    return y[:, :, :W, :C]


# ---------------- parameter construction (deterministic, synthetic) ----------------

def _conv_w(key, out_c, in_c, kh, kw):
    fan_in = in_c * kh * kw
    return jax.random.normal(key, (out_c, in_c, kh, kw), jnp.float32) / jnp.sqrt(fan_in)


def _bn_params(key, c):
    k1, k2, k3, k4 = jax.random.split(key, 4)
    gamma = 0.5 + jax.random.uniform(k1, (c,), jnp.float32)
    beta = 0.1 * jax.random.normal(k2, (c,), jnp.float32)
    rmean = 0.1 * jax.random.normal(k3, (c,), jnp.float32)
    rvar = 0.5 + jax.random.uniform(k4, (c,), jnp.float32)
    return gamma, beta, rmean, rvar


def _fold_bn(w_oihw, b, gamma, beta, rmean, rvar, eps=1e-5):
    scale = gamma / jnp.sqrt(rvar + eps)
    return w_oihw * scale[:, None, None, None], (b - rmean) * scale + beta


def init_params(key, num_filters):
    C, C2 = num_filters, num_filters // 2
    ks = jax.random.split(key, 9)
    return {
        "w1": _conv_w(ks[0], C2, C, 1, 1), "b1": 0.1 * jax.random.normal(ks[1], (C2,), jnp.float32),
        "bn1": _bn_params(ks[2], C2),
        "w2": _conv_w(ks[3], C2, C2, 3, 3), "b2": 0.1 * jax.random.normal(ks[4], (C2,), jnp.float32),
        "bn2": _bn_params(ks[5], C2),
        "w3": _conv_w(ks[6], C, C2, 1, 1), "b3": 0.1 * jax.random.normal(ks[7], (C,), jnp.float32),
        "bn3": _bn_params(ks[8], C),
    }


def fold_for_kernel(p):
    """Fold BN (eval mode) into convs, lane-pad channels, pre-pack w2 for the fused
    3-tap (K = 3*C2p) conv2 matmuls, cast weights to bf16.  Done once, offline.
    Padded weight/bias entries are zero so padded lanes stay exactly zero."""
    w1f, b1f = _fold_bn(p["w1"], p["b1"], *p["bn1"])
    w2f, b2f = _fold_bn(p["w2"], p["b2"], *p["bn2"])
    w3f, b3f = _fold_bn(p["w3"], p["b3"], *p["bn3"])
    C2 = w1f.shape[0]
    C = w3f.shape[0]
    Cp, C2p = _round_up(C, LANE), _round_up(C2, LANE)

    w1k = jnp.zeros((Cp, C2p), jnp.float32).at[:C, :C2].set(w1f[:, :, 0, 0].T)
    # w2 packed as (dy, dx*K, out): rows [dx*C2p : dx*C2p+C2] of w2k[dy] are the
    # (in -> out) weights of tap (dy, dx); matches the kernel's lane-concat order
    # [left (w-1), center (w), right (w+1)].
    w2t = jnp.transpose(w2f, (2, 3, 1, 0))                 # (dy, dx, in, out)
    w2k = jnp.zeros((3, 3 * C2p, C2p), jnp.float32)
    for dx in range(3):
        w2k = w2k.at[:, dx * C2p:dx * C2p + C2, :C2].set(w2t[:, dx])
    w3k = jnp.zeros((C2p, Cp), jnp.float32).at[:C2, :C].set(w3f[:, :, 0, 0].T)
    b1k = jnp.zeros((1, C2p), jnp.float32).at[0, :C2].set(b1f)
    b2k = jnp.zeros((1, C2p), jnp.float32).at[0, :C2].set(b2f)
    b3k = jnp.zeros((1, Cp), jnp.float32).at[0, :C].set(b3f)
    return (w1k.astype(jnp.bfloat16), b1k, w2k.astype(jnp.bfloat16), b2k,
            w3k.astype(jnp.bfloat16), b3k)


# ---------------- pure-JAX reference (un-fused, for verification) ----------------

def ref_forward_nhwc(x, p, eps=1e-5):
    def conv(x, w_oihw, b, pad):
        w_hwio = jnp.transpose(w_oihw, (2, 3, 1, 0))
        y = lax.conv_general_dilated(x, w_hwio, (1, 1), [(pad, pad), (pad, pad)],
                                     dimension_numbers=("NHWC", "HWIO", "NHWC"))
        return y + b

    def bn(x, stats):
        g, bt, rm, rv = stats
        return (x - rm) / jnp.sqrt(rv + eps) * g + bt

    h = jax.nn.relu(bn(conv(x, p["w1"], p["b1"], 0), p["bn1"]))
    h = jax.nn.relu(bn(conv(h, p["w2"], p["b2"], 1), p["bn2"]))
    h = bn(conv(h, p["w3"], p["b3"], 0), p["bn3"])
    return x + h


if __name__ == "__main__":
    N, C, H, W = 2, 4, 16, 16        # num_filters = 4
    key = jax.random.PRNGKey(0)
    kx, kp = jax.random.split(key)
    x_nchw = jax.random.normal(kx, (N, C, H, W), jnp.float32)

    params = init_params(kp, C)
    folded = fold_for_kernel(params)     # BN folded + lane-padded + w2 packed, offline

    # Keep activations NHWC around the kernel (layout conversion done once here,
    # outside the per-call path).
    x_nhwc = jnp.transpose(x_nchw, (0, 2, 3, 1))
    y_nhwc = residual_block_forward_nhwc(x_nhwc, folded)
    y_nhwc = jax.block_until_ready(y_nhwc)

    y_ref = ref_forward_nhwc(x_nhwc, params)
    assert y_nhwc.shape == x_nhwc.shape
    # bf16 MXU operands with f32 accumulation -> loosened tolerance vs f32 reference
    assert jnp.allclose(y_nhwc, y_ref, rtol=3e-2, atol=3e-2), "mismatch vs reference"
    print("KERNEL_OK")
</pallas_src>

<mosaic_0001>
module attributes {stable_mosaic.version = 11 : i64} {
  func.func @_residual_block_kernel(%arg0: i32, %arg1: i32, %arg2: memref<1x16x16x128xf32, #tpu.memory_space<vmem>>, %arg3: memref<1x1x16x128xf32, #tpu.memory_space<vmem>>, %arg4: memref<1x1x16x128xf32, #tpu.memory_space<vmem>>, %arg5: memref<128x128xbf16, #tpu.memory_space<vmem>>, %arg6: memref<1x128xf32, #tpu.memory_space<vmem>>, %arg7: memref<3x384x128xbf16, #tpu.memory_space<vmem>>, %arg8: memref<1x128xf32, #tpu.memory_space<vmem>>, %arg9: memref<128x128xbf16, #tpu.memory_space<vmem>>, %arg10: memref<1x128xf32, #tpu.memory_space<vmem>>, %arg11: memref<1x16x16x128xf32, #tpu.memory_space<vmem>>) attributes {dimension_semantics = [#tpu.dimension_semantics<parallel>, #tpu.dimension_semantics<parallel>], iteration_bounds = array<i64: 2, 1>, scalar_prefetch = 0 : i64, scratch_operands = 0 : i64, tpu.core_type = #tpu.core_type<tc>, window_params = [{transform_indices = @transform_0, window_bounds = array<i64: 1, 16, 16, 128>}, {transform_indices = @transform_1, window_bounds = array<i64: 1, 1, 16, 128>}, {transform_indices = @transform_2, window_bounds = array<i64: 1, 1, 16, 128>}, {pipeline_mode = #tpu.pipeline_mode<synchronous>, transform_indices = @transform_3, window_bounds = array<i64: 128, 128>}, {pipeline_mode = #tpu.pipeline_mode<synchronous>, transform_indices = @transform_4, window_bounds = array<i64: 1, 128>}, {pipeline_mode = #tpu.pipeline_mode<synchronous>, transform_indices = @transform_5, window_bounds = array<i64: 3, 384, 128>}, {pipeline_mode = #tpu.pipeline_mode<synchronous>, transform_indices = @transform_6, window_bounds = array<i64: 1, 128>}, {pipeline_mode = #tpu.pipeline_mode<synchronous>, transform_indices = @transform_7, window_bounds = array<i64: 128, 128>}, {pipeline_mode = #tpu.pipeline_mode<synchronous>, transform_indices = @transform_8, window_bounds = array<i64: 1, 128>}, {transform_indices = @transform_9, window_bounds = array<i64: 1, 16, 16, 128>}]} {
    %c0 = arith.constant 0 : index
    %c0_0 = arith.constant 0 : index
    %0 = vector.load %arg5[%c0, %c0_0] : memref<128x128xbf16, #tpu.memory_space<vmem>>, vector<128x128xbf16>
    %c0_1 = arith.constant 0 : index
    %c0_2 = arith.constant 0 : index
    %1 = vector.load %arg6[%c0_1, %c0_2] : memref<1x128xf32, #tpu.memory_space<vmem>>, vector<1x128xf32>
    %c0_3 = arith.constant 0 : index
    %c0_4 = arith.constant 0 : index
    %c0_5 = arith.constant 0 : index
    %c0_6 = arith.constant 0 : index
    %2 = vector.load %arg2[%c0_3, %c0_4, %c0_5, %c0_6] : memref<1x16x16x128xf32, #tpu.memory_space<vmem>>, vector<1x16x16x128xf32>
    %3 = vector.shape_cast %2 : vector<1x16x16x128xf32> to vector<16x16x128xf32>
    %4 = vector.shape_cast %3 : vector<16x16x128xf32> to vector<256x128xf32>
    %5 = arith.truncf %4 : vector<256x128xf32> to vector<256x128xbf16>
    %cst = arith.constant dense<0.000000e+00> : vector<256x128xf32>
    %6 = tpu.matmul %5, %0, %cst {dimension_numbers = #tpu.dot_dimension_numbers<[1], [0], [0], [1], [0, 0, 1, 1], [], []>} : vector<256x128xbf16>, vector<128x128xbf16>, vector<256x128xf32> -> vector<256x128xf32>
    %7 = vector.broadcast %1 : vector<1x128xf32> to vector<256x128xf32>
    %8 = arith.addf %6, %7 : vector<256x128xf32>
    %cst_7 = arith.constant 0.000000e+00 : f32
    %9 = vector.broadcast %cst_7 : f32 to vector<256x128xf32>
    %10 = arith.maximumf %8, %9 : vector<256x128xf32>
    %c0_8 = arith.constant 0 : index
    %c0_9 = arith.constant 0 : index
    %c0_10 = arith.constant 0 : index
    %c0_11 = arith.constant 0 : index
    %11 = vector.load %arg3[%c0_8, %c0_9, %c0_10, %c0_11] : memref<1x1x16x128xf32, #tpu.memory_space<vmem>>, vector<1x1x16x128xf32>
    %12 = vector.shape_cast %11 : vector<1x1x16x128xf32> to vector<16x128xf32>
    %13 = arith.truncf %12 : vector<16x128xf32> to vector<16x128xbf16>
    %c0_12 = arith.constant 0 : index
    %c0_13 = arith.constant 0 : index
    %c0_14 = arith.constant 0 : index
    %c0_15 = arith.constant 0 : index
    %14 = vector.load %arg4[%c0_12, %c0_13, %c0_14, %c0_15] : memref<1x1x16x128xf32, #tpu.memory_space<vmem>>, vector<1x1x16x128xf32>
    %15 = vector.shape_cast %14 : vector<1x1x16x128xf32> to vector<16x128xf32>
    %16 = arith.truncf %15 : vector<16x128xf32> to vector<16x128xbf16>
    %cst_16 = arith.constant dense<0.000000e+00> : vector<16x128xf32>
    %17 = tpu.matmul %13, %0, %cst_16 {dimension_numbers = #tpu.dot_dimension_numbers<[1], [0], [0], [1], [0, 0, 1, 1], [], []>} : vector<16x128xbf16>, vector<128x128xbf16>, vector<16x128xf32> -> vector<16x128xf32>
    %18 = vector.broadcast %1 : vector<1x128xf32> to vector<16x128xf32>
    %19 = arith.addf %17, %18 : vector<16x128xf32>
    %cst_17 = arith.constant 0.000000e+00 : f32
    %20 = vector.broadcast %cst_17 : f32 to vector<16x128xf32>
    %21 = arith.maximumf %19, %20 : vector<16x128xf32>
    %cst_18 = arith.constant dense<0.000000e+00> : vector<16x128xf32>
    %22 = tpu.matmul %16, %0, %cst_18 {dimension_numbers = #tpu.dot_dimension_numbers<[1], [0], [0], [1], [0, 0, 1, 1], [], []>} : vector<16x128xbf16>, vector<128x128xbf16>, vector<16x128xf32> -> vector<16x128xf32>
    %23 = vector.broadcast %1 : vector<1x128xf32> to vector<16x128xf32>
    %24 = arith.addf %22, %23 : vector<16x128xf32>
    %cst_19 = arith.constant 0.000000e+00 : f32
    %25 = vector.broadcast %cst_19 : f32 to vector<16x128xf32>
    %26 = arith.maximumf %24, %25 : vector<16x128xf32>
    %c0_i32 = arith.constant 0 : i32
    %27 = arith.cmpi sgt, %arg1, %c0_i32 : i32
    %28 = arith.extui %27 : i1 to i32
    %29 = arith.sitofp %28 : i32 to f32
    %30 = vector.broadcast %29 : f32 to vector<16x128xf32>
    %31 = arith.mulf %21, %30 : vector<16x128xf32>
    %c0_i32_20 = arith.constant 0 : i32
    %32 = arith.cmpi slt, %arg1, %c0_i32_20 : i32
    %33 = arith.extui %32 : i1 to i32
    %34 = arith.sitofp %33 : i32 to f32
    %35 = vector.broadcast %34 : f32 to vector<16x128xf32>
    %36 = arith.mulf %26, %35 : vector<16x128xf32>
    %37 = tpu.concatenate %31, %10, %36 in 0 : vector<16x128xf32>, vector<256x128xf32>, vector<16x128xf32> -> vector<288x128xf32>
    %38 = tpu.iota {dimensions = array<i32: 0>} : vector<288x1xi32>
    %c16_i32 = arith.constant 16 : i32
    %c0_i32_21 = arith.constant 0 : i32
    %39 = arith.cmpi eq, %c16_i32, %c0_i32_21 : i32
    %c1_i32 = arith.constant 1 : i32
    %40 = arith.select %39, %c1_i32, %c16_i32 : i32
    %41 = vector.broadcast %40 : i32 to vector<288x1xi32>
    %42 = arith.remsi %38, %41 : vector<288x1xi32>
    %c0_i32_22 = arith.constant 0 : i32
    %43 = vector.broadcast %c0_i32_22 : i32 to vector<288x1xi32>
    %44 = arith.cmpi ne, %42, %43 : vector<288x1xi32>
    %c0_i32_23 = arith.constant 0 : i32
    %45 = vector.broadcast %c0_i32_23 : i32 to vector<288x1xi32>
    %46 = arith.cmpi slt, %42, %45 : vector<288x1xi32>
    %c0_i32_24 = arith.constant 0 : i32
    %47 = arith.cmpi slt, %40, %c0_i32_24 : i32
    %48 = vector.broadcast %47 : i1 to vector<288x1xi1>
    %49 = vector.broadcast %48 : vector<288x1xi1> to vector<288x1xi1>
    %50 = arith.xori %46, %49 : vector<288x1xi1>
    %51 = arith.andi %50, %44 : vector<288x1xi1>
    %52 = vector.broadcast %40 : i32 to vector<288x1xi32>
    %53 = arith.addi %42, %52 : vector<288x1xi32>
    %54 = arith.select %51, %53, %42 : vector<288x1xi1>, vector<288x1xi32>
    %c0_i32_25 = arith.constant 0 : i32
    %55 = vector.broadcast %c0_i32_25 : i32 to vector<288x1xi32>
    %56 = arith.cmpi sgt, %54, %55 : vector<288x1xi32>
    %c1_i32_26 = arith.constant 1 : i32
    %57 = tpu.dynamic_rotate %37 by %c1_i32_26 dim 0 : vector<288x128xf32>, i32 -> vector<288x128xf32>
    %cst_27 = arith.constant 0.000000e+00 : f32
    %58 = vector.shape_cast %56 : vector<288x1xi1> to vector<288x1xi1>
    %59 = vector.broadcast %58 : vector<288x1xi1> to vector<288x128xi1>
    %60 = vector.broadcast %cst_27 : f32 to vector<288x128xf32>
    %61 = arith.select %59, %57, %60 : vector<288x128xi1>, vector<288x128xf32>
    %c15_i32 = arith.constant 15 : i32
    %62 = vector.broadcast %c15_i32 : i32 to vector<288x1xi32>
    %63 = arith.cmpi slt, %54, %62 : vector<288x1xi32>
    %c287_i32 = arith.constant 287 : i32
    %64 = tpu.dynamic_rotate %37 by %c287_i32 dim 0 : vector<288x128xf32>, i32 -> vector<288x128xf32>
    %cst_28 = arith.constant 0.000000e+00 : f32
    %65 = vector.shape_cast %63 : vector<288x1xi1> to vector<288x1xi1>
    %66 = vector.broadcast %65 : vector<288x1xi1> to vector<288x128xi1>
    %67 = vector.broadcast %cst_28 : f32 to vector<288x128xf32>
    %68 = arith.select %66, %64, %67 : vector<288x128xi1>, vector<288x128xf32>
    %69 = arith.truncf %61 : vector<288x128xf32> to vector<288x128xbf16>
    %70 = arith.truncf %37 : vector<288x128xf32> to vector<288x128xbf16>
    %71 = arith.truncf %68 : vector<288x128xf32> to vector<288x128xbf16>
    %72 = tpu.concatenate %69, %70, %71 in 1 : vector<288x128xbf16>, vector<288x128xbf16>, vector<288x128xbf16> -> vector<288x384xbf16>
    %73 = vector.extract_strided_slice %72 {offsets = [0, 0], sizes = [256, 384], strides = [1, 1]} : vector<288x384xbf16> to vector<256x384xbf16>
    %c0_29 = arith.constant 0 : index
    %c0_30 = arith.constant 0 : index
    %c0_31 = arith.constant 0 : index
    %74 = vector.load %arg7[%c0_29, %c0_30, %c0_31] : memref<3x384x128xbf16, #tpu.memory_space<vmem>>, vector<1x384x128xbf16>
    %75 = vector.shape_cast %74 : vector<1x384x128xbf16> to vector<384x128xbf16>
    %cst_32 = arith.constant dense<0.000000e+00> : vector<256x128xf32>
    %76 = tpu.matmul %73, %75, %cst_32 {dimension_numbers = #tpu.dot_dimension_numbers<[1], [0], [0], [1], [0, 0, 1, 1], [], []>} : vector<256x384xbf16>, vector<384x128xbf16>, vector<256x128xf32> -> vector<256x128xf32>
    %77 = vector.extract_strided_slice %72 {offsets = [16, 0], sizes = [256, 384], strides = [1, 1]} : vector<288x384xbf16> to vector<256x384xbf16>
    %c1 = arith.constant 1 : index
    %c0_33 = arith.constant 0 : index
    %c0_34 = arith.constant 0 : index
    %78 = vector.load %arg7[%c1, %c0_33, %c0_34] : memref<3x384x128xbf16, #tpu.memory_space<vmem>>, vector<1x384x128xbf16>
    %79 = vector.shape_cast %78 : vector<1x384x128xbf16> to vector<384x128xbf16>
    %cst_35 = arith.constant dense<0.000000e+00> : vector<256x128xf32>
    %80 = tpu.matmul %77, %79, %cst_35 {dimension_numbers = #tpu.dot_dimension_numbers<[1], [0], [0], [1], [0, 0, 1, 1], [], []>} : vector<256x384xbf16>, vector<384x128xbf16>, vector<256x128xf32> -> vector<256x128xf32>
    %81 = arith.addf %76, %80 : vector<256x128xf32>
    %82 = vector.extract_strided_slice %72 {offsets = [32, 0], sizes = [256, 384], strides = [1, 1]} : vector<288x384xbf16> to vector<256x384xbf16>
    %c2 = arith.constant 2 : index
    %c0_36 = arith.constant 0 : index
    %c0_37 = arith.constant 0 : index
    %83 = vector.load %arg7[%c2, %c0_36, %c0_37] : memref<3x384x128xbf16, #tpu.memory_space<vmem>>, vector<1x384x128xbf16>
    %84 = vector.shape_cast %83 : vector<1x384x128xbf16> to vector<384x128xbf16>
    %cst_38 = arith.constant dense<0.000000e+00> : vector<256x128xf32>
    %85 = tpu.matmul %82, %84, %cst_38 {dimension_numbers = #tpu.dot_dimension_numbers<[1], [0], [0], [1], [0, 0, 1, 1], [], []>} : vector<256x384xbf16>, vector<384x128xbf16>, vector<256x128xf32> -> vector<256x128xf32>
    %86 = arith.addf %81, %85 : vector<256x128xf32>
    %c0_39 = arith.constant 0 : index
    %c0_40 = arith.constant 0 : index
    %87 = vector.load %arg8[%c0_39, %c0_40] : memref<1x128xf32, #tpu.memory_space<vmem>>, vector<1x128xf32>
    %88 = vector.broadcast %87 : vector<1x128xf32> to vector<256x128xf32>
    %89 = arith.addf %86, %88 : vector<256x128xf32>
    %cst_41 = arith.constant 0.000000e+00 : f32
    %90 = vector.broadcast %cst_41 : f32 to vector<256x128xf32>
    %91 = arith.maximumf %89, %90 : vector<256x128xf32>
    %92 = arith.truncf %91 : vector<256x128xf32> to vector<256x128xbf16>
    %c0_42 = arith.constant 0 : index
    %c0_43 = arith.constant 0 : index
    %93 = vector.load %arg9[%c0_42, %c0_43] : memref<128x128xbf16, #tpu.memory_space<vmem>>, vector<128x128xbf16>
    %cst_44 = arith.constant dense<0.000000e+00> : vector<256x128xf32>
    %94 = tpu.matmul %92, %93, %cst_44 {dimension_numbers = #tpu.dot_dimension_numbers<[1], [0], [0], [1], [0, 0, 1, 1], [], []>} : vector<256x128xbf16>, vector<128x128xbf16>, vector<256x128xf32> -> vector<256x128xf32>
    %c0_45 = arith.constant 0 : index
    %c0_46 = arith.constant 0 : index
    %95 = vector.load %arg10[%c0_45, %c0_46] : memref<1x128xf32, #tpu.memory_space<vmem>>, vector<1x128xf32>
    %96 = vector.broadcast %95 : vector<1x128xf32> to vector<256x128xf32>
    %97 = arith.addf %94, %96 : vector<256x128xf32>
    %98 = arith.addf %4, %97 : vector<256x128xf32>
    %99 = vector.shape_cast %98 : vector<256x128xf32> to vector<16x16x128xf32>
    %c0_47 = arith.constant 0 : index
    %c0_48 = arith.constant 0 : index
    %c0_49 = arith.constant 0 : index
    %c0_50 = arith.constant 0 : index
    %100 = vector.load %arg11[%c0_47, %c0_48, %c0_49, %c0_50] : memref<1x16x16x128xf32, #tpu.memory_space<vmem>>, vector<1x16x16x128xf32>
    %101 = vector.shape_cast %100 : vector<1x16x16x128xf32> to vector<16x16x128xf32>
    %102 = vector.shape_cast %99 : vector<16x16x128xf32> to vector<1x16x16x128xf32>
    tpu.vector_store %arg11[%c0_47, %c0_48, %c0_49, %c0_50], %102 {strides = array<i32>} : memref<1x16x16x128xf32, #tpu.memory_space<vmem>>, vector<1x16x16x128xf32>,
    return
  }
  func.func @transform_0(%arg0: i32, %arg1: i32) -> (i32, i32, i32, i32) {
    %c0_i32 = arith.constant 0 : i32
    %c0_i32_0 = arith.constant 0 : i32
    %c0_i32_1 = arith.constant 0 : i32
    return %arg0, %arg1, %c0_i32, %c0_i32_0 : i32, i32, i32, i32
  }
  func.func @transform_1(%arg0: i32, %arg1: i32) -> (i32, i32, i32, i32) {
    %c16_i32 = arith.constant 16 : i32
    %0 = arith.muli %arg1, %c16_i32 : i32
    %c1_i32 = arith.constant 1 : i32
    %1 = arith.subi %0, %c1_i32 : i32
    %c0_i32 = arith.constant 0 : i32
    %2 = arith.maxsi %1, %c0_i32 : i32
    %c0_i32_0 = arith.constant 0 : i32
    %c0_i32_1 = arith.constant 0 : i32
    %c0_i32_2 = arith.constant 0 : i32
    return %arg0, %2, %c0_i32_0, %c0_i32_1 : i32, i32, i32, i32
  }
  func.func @transform_2(%arg0: i32, %arg1: i32) -> (i32, i32, i32, i32) {
    %c16_i32 = arith.constant 16 : i32
    %0 = arith.muli %arg1, %c16_i32 : i32
    %c16_i32_0 = arith.constant 16 : i32
    %1 = arith.addi %0, %c16_i32_0 : i32
    %c15_i32 = arith.constant 15 : i32
    %2 = arith.minsi %1, %c15_i32 : i32
    %c0_i32 = arith.constant 0 : i32
    %c0_i32_1 = arith.constant 0 : i32
    %c0_i32_2 = arith.constant 0 : i32
    return %arg0, %2, %c0_i32, %c0_i32_1 : i32, i32, i32, i32
  }
  func.func @transform_3(%arg0: i32, %arg1: i32) -> (i32, i32) {
    %c0_i32 = arith.constant 0 : i32
    %c0_i32_0 = arith.constant 0 : i32
    %c0_i32_1 = arith.constant 0 : i32
    return %c0_i32, %c0_i32_0 : i32, i32
  }
  func.func @transform_4(%arg0: i32, %arg1: i32) -> (i32, i32) {
    %c0_i32 = arith.constant 0 : i32
    %c0_i32_0 = arith.constant 0 : i32
    %c0_i32_1 = arith.constant 0 : i32
    return %c0_i32, %c0_i32_0 : i32, i32
  }
  func.func @transform_5(%arg0: i32, %arg1: i32) -> (i32, i32, i32) {
    %c0_i32 = arith.constant 0 : i32
    %c0_i32_0 = arith.constant 0 : i32
    %c0_i32_1 = arith.constant 0 : i32
    %c0_i32_2 = arith.constant 0 : i32
    return %c0_i32, %c0_i32_0, %c0_i32_1 : i32, i32, i32
  }
  func.func @transform_6(%arg0: i32, %arg1: i32) -> (i32, i32) {
    %c0_i32 = arith.constant 0 : i32
    %c0_i32_0 = arith.constant 0 : i32
    %c0_i32_1 = arith.constant 0 : i32
    return %c0_i32, %c0_i32_0 : i32, i32
  }
  func.func @transform_7(%arg0: i32, %arg1: i32) -> (i32, i32) {
    %c0_i32 = arith.constant 0 : i32
    %c0_i32_0 = arith.constant 0 : i32
    %c0_i32_1 = arith.constant 0 : i32
    return %c0_i32, %c0_i32_0 : i32, i32
  }
  func.func @transform_8(%arg0: i32, %arg1: i32) -> (i32, i32) {
    %c0_i32 = arith.constant 0 : i32
    %c0_i32_0 = arith.constant 0 : i32
    %c0_i32_1 = arith.constant 0 : i32
    return %c0_i32, %c0_i32_0 : i32, i32
  }
  func.func @transform_9(%arg0: i32, %arg1: i32) -> (i32, i32, i32, i32) {
    %c0_i32 = arith.constant 0 : i32
    %c0_i32_0 = arith.constant 0 : i32
    %c0_i32_1 = arith.constant 0 : i32
    return %arg0, %arg1, %c0_i32, %c0_i32_0 : i32, i32, i32, i32
  }
}

</mosaic_0001>

<llo_original>
// kernel: residual_block_forward_nhwc.1
$region0: #{residual_block_forward_nhwc.1}
  #allocation0 [shape = 'u32[]', space=smem, size = 0x4, offset = 0x4, fixed_abs, tag = 'smem constant byte address 0x4 - core index']
  #allocation1 [shape = 'u32[72,128]{1,0:T(1,128)}', space=vmem, size = 0x9000, scoped, tag = 'internal scratch']
  %s0 = inlined_call_operand.vmem [shape: f32[2,16,16,128], index: 0, kind: input, shape index: {}, may-alias: {0,1,2}]
  %s1 = inlined_call_operand.vmem [shape: f32[2,16,16,128], index: 1, kind: input, shape index: {}, may-alias: {0,1,2}]
  %s2 = inlined_call_operand.vmem [shape: f32[2,16,16,128], index: 2, kind: input, shape index: {}, may-alias: {0,1,2}]
  %s3 = inlined_call_operand.vmem [shape: bf16[128,128], index: 3, kind: input, shape index: {}]
  %s4 = inlined_call_operand.vmem [shape: f32[1,128], index: 4, kind: input, shape index: {}]
  %s5 = inlined_call_operand.vmem [shape: bf16[3,384,128], index: 5, kind: input, shape index: {}]
  %s6 = inlined_call_operand.vmem [shape: f32[1,128], index: 6, kind: input, shape index: {}]
  %s7 = inlined_call_operand.vmem [shape: bf16[128,128], index: 7, kind: input, shape index: {}]
  %s8 = inlined_call_operand.vmem [shape: f32[1,128], index: 8, kind: input, shape index: {}]
  %s9 = inlined_call_operand.vmem [shape: f32[2,16,16,128], index: 9, kind: output, shape index: {}]
  %s10 = sld [smem:[#allocation0]]
  $region69: #{residual_block_forward_nhwc.1} parent=0
    _
  %s12 = ssub.s32 1, %s10
  %s13 = scalar_select 0, %s12, %s10
  loop: start=0, step=1, limit=4
  $region2: #{residual_block_forward_nhwc.1} parent=0 // loop_pre_header
    _
  $region3: #{residual_block_forward_nhwc.1} parent=0 // loop_header
    %s15 = sphi 0, %s19
    %p16 = scmp.ge.s32.totalorder %s15, 4
    %s22 = sphi 0, %s34
    %s23 = sphi 0, %s30
    %s24 = sphi 0, %s22
    %s25 = sphi 0, %s23
    %s26 = sphi 0, %s24
    %s27 = sphi 0, %s25
    %s39 = sphi 0, %s41
    %s42 = sphi 0, %s39
    %s43 = sphi 0, %s42
    %s59 = sphi 0, %s43
    %s75 = sphi 0, %s77
    %s78 = sphi 0, %s75
    %s79 = sphi 0, %s78
    %s95 = sphi 0, %s79
    %s111 = sphi 0, %s113
    %s114 = sphi 0, %s111
    %s115 = sphi 0, %s114
    %s131 = sphi 0, %s115
    %s135 = sphi 0, %s135
    %s137 = sphi 0, %s135
    %s138 = sphi 0, %s137
    %s152 = sphi 0, %s138
    %s156 = sphi 0, %s156
    %s158 = sphi 0, %s156
    %s159 = sphi 0, %s158
    %s173 = sphi 0, %s159
    %s177 = sphi 0, %s177
    %s179 = sphi 0, %s177
    %s180 = sphi 0, %s179
    %s194 = sphi 0, %s180
    %s198 = sphi 0, %s198
    %s200 = sphi 0, %s198
    %s201 = sphi 0, %s200
    %s215 = sphi 0, %s201
    %s219 = sphi 0, %s219
    %s221 = sphi 0, %s219
    %s222 = sphi 0, %s221
    %s236 = sphi 0, %s222
    %s240 = sphi 0, %s240
    %s242 = sphi 0, %s240
    %s243 = sphi 0, %s242
    %s257 = sphi 0, %s243
    %s265 = sphi 0, %s267
    %s268 = sphi 0, %s265
    %s269 = sphi 0, %s268
    %s285 = sphi 0, %s269
  $region4: #{residual_block_forward_nhwc.1} parent=0 // loop_header_branch
    %18 = sbr.rel (%p16) target = $region8
  $region5: #{residual_block_forward_nhwc.1} parent=0 // loop_body
    %s20 = ssub.s32 %s15, 1
    %s21 = ssub.s32 %s15, 2
    %s28 = sadd.s32 1, %s23
    %p29 = scmp.ge.s32.totalorder %s28, 1
    %s30 = scalar_select %p29, 0, %s28
    %s31 = sadd.s32 1, %s22
    %s32 = scalar_select %p29, %s31, %s22
    %p33 = scmp.ge.s32.totalorder %s32, 2
    %s34 = scalar_select %p33, 0, %s32
    %s35 = ssub.s32 %s22, %s34
    %s36 = ssub.s32 %s23, %s30
    %s37 = sor.u32 %s35, %s36
    %p38 = scmp.eq.s32.totalorder %s37, 0
    %s40 = sadd.s32 %s39, 1
    %s41 = scalar_select %p38, %s39, %s40
    %p44 = pneg %p38
    %p45 = scmp.eq.s32.totalorder %s15, 1
    %p46 = por %p44, %p45
    %p47 = scmp.ne.s32.totalorder %s39, %s42
    %p48 = scmp.eq.s32.totalorder %s15, 0
    %p49 = por %p47, %p48
    %p50 = scmp.ne.s32.totalorder %s39, %s42
    %p51 = scmp.eq.s32.totalorder %s20, 1
    %p52 = por %p50, %p51
    %p53 = scmp.ne.s32.totalorder %s42, %s43
    %p54 = scmp.eq.s32.totalorder %s20, 0
    %p55 = por %p53, %p54
    %p56 = scmp.ne.s32.totalorder %s42, %s43
    %p57 = scmp.eq.s32.totalorder %s21, 1
    %p58 = por %p56, %p57
    %p60 = scmp.ne.s32.totalorder %s43, %s59
    %p61 = scmp.eq.s32.totalorder %s21, 0
    %p62 = por %p60, %p61
    %s63 = smul.u32 %s23, 16
    %s64 = ssub.s32 %s63, 1
    %p65 = scmp.gt.s32.totalorder %s64, 0
    %s66 = scalar_select %p65, %s64, 0
    %s67 = smul.u32 %s30, 16
    %s68 = ssub.s32 %s67, 1
    %p69 = scmp.gt.s32.totalorder %s68, 0
    %s70 = scalar_select %p69, %s68, 0
    %s71 = ssub.s32 %s22, %s34
    %s72 = ssub.s32 %s66, %s70
    %s73 = sor.u32 %s71, %s72
    %p74 = scmp.eq.s32.totalorder %s73, 0
    %s76 = sadd.s32 %s75, 1
    %s77 = scalar_select %p74, %s75, %s76
    %p80 = pneg %p74
    %p81 = scmp.eq.s32.totalorder %s15, 1
    %p82 = por %p80, %p81
    %p83 = scmp.ne.s32.totalorder %s75, %s78
    %p84 = scmp.eq.s32.totalorder %s15, 0
    %p85 = por %p83, %p84
    %p86 = scmp.ne.s32.totalorder %s75, %s78
    %p87 = scmp.eq.s32.totalorder %s20, 1
    %p88 = por %p86, %p87
    %p89 = scmp.ne.s32.totalorder %s78, %s79
    %p90 = scmp.eq.s32.totalorder %s20, 0
    %p91 = por %p89, %p90
    %p92 = scmp.ne.s32.totalorder %s78, %s79
    %p93 = scmp.eq.s32.totalorder %s21, 1
    %p94 = por %p92, %p93
    %p96 = scmp.ne.s32.totalorder %s79, %s95
    %p97 = scmp.eq.s32.totalorder %s21, 0
    %p98 = por %p96, %p97
    %s99 = smul.u32 %s23, 16
    %s100 = sadd.s32 %s99, 16
    %p101 = scmp.lt.s32.totalorder %s100, 15
    %s102 = scalar_select %p101, %s100, 15
    %s103 = smul.u32 %s30, 16
    %s104 = sadd.s32 %s103, 16
    %p105 = scmp.lt.s32.totalorder %s104, 15
    %s106 = scalar_select %p105, %s104, 15
    %s107 = ssub.s32 %s22, %s34
    %s108 = ssub.s32 %s102, %s106
    %s109 = sor.u32 %s107, %s108
    %p110 = scmp.eq.s32.totalorder %s109, 0
    %s112 = sadd.s32 %s111, 1
    %s113 = scalar_select %p110, %s111, %s112
    %p116 = pneg %p110
    %p117 = scmp.eq.s32.totalorder %s15, 1
    %p118 = por %p116, %p117
    %p119 = scmp.ne.s32.totalorder %s111, %s114
    %p120 = scmp.eq.s32.totalorder %s15, 0
    %p121 = por %p119, %p120
    %p122 = scmp.ne.s32.totalorder %s111, %s114
    %p123 = scmp.eq.s32.totalorder %s20, 1
    %p124 = por %p122, %p123
    %p125 = scmp.ne.s32.totalorder %s114, %s115
    %p126 = scmp.eq.s32.totalorder %s20, 0
    %p127 = por %p125, %p126
    %p128 = scmp.ne.s32.totalorder %s114, %s115
    %p129 = scmp.eq.s32.totalorder %s21, 1
    %p130 = por %p128, %p129
    %p132 = scmp.ne.s32.totalorder %s115, %s131
    %p133 = scmp.eq.s32.totalorder %s21, 0
    %p134 = por %p132, %p133
    %s136 = sadd.s32 %s135, 1
    %p139 = scmp.eq.s32.totalorder %s15, 1
    %p140 = scmp.ne.s32.totalorder %s135, %s137
    %p141 = scmp.eq.s32.totalorder %s15, 0
    %p142 = por %p140, %p141
    %p143 = scmp.ne.s32.totalorder %s135, %s137
    %p144 = scmp.eq.s32.totalorder %s20, 1
    %p145 = por %p143, %p144
    %p146 = scmp.ne.s32.totalorder %s137, %s138
    %p147 = scmp.eq.s32.totalorder %s20, 0
    %p148 = por %p146, %p147
    %p149 = scmp.ne.s32.totalorder %s137, %s138
    %p150 = scmp.eq.s32.totalorder %s21, 1
    %p151 = por %p149, %p150
    %p153 = scmp.ne.s32.totalorder %s138, %s152
    %p154 = scmp.eq.s32.totalorder %s21, 0
    %p155 = por %p153, %p154
    %s157 = sadd.s32 %s156, 1
    %p160 = scmp.eq.s32.totalorder %s15, 1
    %p161 = scmp.ne.s32.totalorder %s156, %s158
    %p162 = scmp.eq.s32.totalorder %s15, 0
    %p163 = por %p161, %p162
    %p164 = scmp.ne.s32.totalorder %s156, %s158
    %p165 = scmp.eq.s32.totalorder %s20, 1
    %p166 = por %p164, %p165
    %p167 = scmp.ne.s32.totalorder %s158, %s159
    %p168 = scmp.eq.s32.totalorder %s20, 0
    %p169 = por %p167, %p168
    %p170 = scmp.ne.s32.totalorder %s158, %s159
    %p171 = scmp.eq.s32.totalorder %s21, 1
    %p172 = por %p170, %p171
    %p174 = scmp.ne.s32.totalorder %s159, %s173
    %p175 = scmp.eq.s32.totalorder %s21, 0
    %p176 = por %p174, %p175
    %s178 = sadd.s32 %s177, 1
    %p181 = scmp.eq.s32.totalorder %s15, 1
    %p182 = scmp.ne.s32.totalorder %s177, %s179
    %p183 = scmp.eq.s32.totalorder %s15, 0
    %p184 = por %p182, %p183
    %p185 = scmp.ne.s32.totalorder %s177, %s179
    %p186 = scmp.eq.s32.totalorder %s20, 1
    %p187 = por %p185, %p186
    %p188 = scmp.ne.s32.totalorder %s179, %s180
    %p189 = scmp.eq.s32.totalorder %s20, 0
    %p190 = por %p188, %p189
    %p191 = scmp.ne.s32.totalorder %s179, %s180
    %p192 = scmp.eq.s32.totalorder %s21, 1
    %p193 = por %p191, %p192
    %p195 = scmp.ne.s32.totalorder %s180, %s194
    %p196 = scmp.eq.s32.totalorder %s21, 0
    %p197 = por %p195, %p196
    %s199 = sadd.s32 %s198, 1
    %p202 = scmp.eq.s32.totalorder %s15, 1
    %p203 = scmp.ne.s32.totalorder %s198, %s200
    %p204 = scmp.eq.s32.totalorder %s15, 0
    %p205 = por %p203, %p204
    %p206 = scmp.ne.s32.totalorder %s198, %s200
    %p207 = scmp.eq.s32.totalorder %s20, 1
    %p208 = por %p206, %p207
    %p209 = scmp.ne.s32.totalorder %s200, %s201
    %p210 = scmp.eq.s32.totalorder %s20, 0
    %p211 = por %p209, %p210
    %p212 = scmp.ne.s32.totalorder %s200, %s201
    %p213 = scmp.eq.s32.totalorder %s21, 1
    %p214 = por %p212, %p213
    %p216 = scmp.ne.s32.totalorder %s201, %s215
    %p217 = scmp.eq.s32.totalorder %s21, 0
    %p218 = por %p216, %p217
    %s220 = sadd.s32 %s219, 1
    %p223 = scmp.eq.s32.totalorder %s15, 1
    %p224 = scmp.ne.s32.totalorder %s219, %s221
    %p225 = scmp.eq.s32.totalorder %s15, 0
    %p226 = por %p224, %p225
    %p227 = scmp.ne.s32.totalorder %s219, %s221
    %p228 = scmp.eq.s32.totalorder %s20, 1
    %p229 = por %p227, %p228
    %p230 = scmp.ne.s32.totalorder %s221, %s222
    %p231 = scmp.eq.s32.totalorder %s20, 0
    %p232 = por %p230, %p231
    %p233 = scmp.ne.s32.totalorder %s221, %s222
    %p234 = scmp.eq.s32.totalorder %s21, 1
    %p235 = por %p233, %p234
    %p237 = scmp.ne.s32.totalorder %s222, %s236
    %p238 = scmp.eq.s32.totalorder %s21, 0
    %p239 = por %p237, %p238
    %s241 = sadd.s32 %s240, 1
    %p244 = scmp.eq.s32.totalorder %s15, 1
    %p245 = scmp.ne.s32.totalorder %s240, %s242
    %p246 = scmp.eq.s32.totalorder %s15, 0
    %p247 = por %p245, %p246
    %p248 = scmp.ne.s32.totalorder %s240, %s242
    %p249 = scmp.eq.s32.totalorder %s20, 1
    %p250 = por %p248, %p249
    %p251 = scmp.ne.s32.totalorder %s242, %s243
    %p252 = scmp.eq.s32.totalorder %s20, 0
    %p253 = por %p251, %p252
    %p254 = scmp.ne.s32.totalorder %s242, %s243
    %p255 = scmp.eq.s32.totalorder %s21, 1
    %p256 = por %p254, %p255
    %p258 = scmp.ne.s32.totalorder %s243, %s257
    %p259 = scmp.eq.s32.totalorder %s21, 0
    %p260 = por %p258, %p259
    %s261 = ssub.s32 %s22, %s34
    %s262 = ssub.s32 %s23, %s30
    %s263 = sor.u32 %s261, %s262
    %p264 = scmp.eq.s32.totalorder %s263, 0
    %s266 = sadd.s32 %s265, 1
    %s267 = scalar_select %p264, %s265, %s266
    %p270 = pneg %p264
    %p271 = scmp.eq.s32.totalorder %s15, 1
    %p272 = por %p270, %p271
    %p273 = scmp.ne.s32.totalorder %s265, %s268
    %p274 = scmp.eq.s32.totalorder %s15, 0
    %p275 = por %p273, %p274
    %p276 = scmp.ne.s32.totalorder %s265, %s268
    %p277 = scmp.eq.s32.totalorder %s20, 1
    %p278 = por %p276, %p277
    %p279 = scmp.ne.s32.totalorder %s268, %s269
    %p280 = scmp.eq.s32.totalorder %s20, 0
    %p281 = por %p279, %p280
    %p282 = scmp.ne.s32.totalorder %s268, %s269
    %p283 = scmp.eq.s32.totalorder %s21, 1
    %p284 = por %p282, %p283
    %p286 = scmp.ne.s32.totalorder %s269, %s285
    %p287 = scmp.eq.s32.totalorder %s21, 0
    %p288 = por %p286, %p287
    %p289 = scmp.le.s32.totalorder 1, %s15
    %p290 = scmp.lt.s32.totalorder %s15, 3
    %p291 = pnand %p289, %p290
    %p292 = pneg %p291
    // Predicated region
    $region9: #{residual_block_forward_nhwc.1} parent=5 // pred_check
      _
    $region10: #{residual_block_forward_nhwc.1} parent=5 // pred_check_branch
      %294 = sbr.rel (%p291) target = $region12
    $region11: #{residual_block_forward_nhwc.1} parent=5 // pred_region
      %s295 = ssub.s32 %s15, 1
      // Predicated region
      $region13: #{residual_block_forward_nhwc.1} parent=11 // pred_check
        %p296 = pneg %p148
      $region14: #{residual_block_forward_nhwc.1} parent=11 // pred_check_branch
        %298 = sbr.rel (%p296) target = $region16
      $region15: #{residual_block_forward_nhwc.1} parent=11 // pred_region
        _
      $region16: #{residual_block_forward_nhwc.1} parent=11 // pred_fallthru
        _
      // Predicated region
      $region17: #{residual_block_forward_nhwc.1} parent=11 // pred_check
        %p299 = pneg %p169
      $region18: #{residual_block_forward_nhwc.1} parent=11 // pred_check_branch
        %301 = sbr.rel (%p299) target = $region20
      $region19: #{residual_block_forward_nhwc.1} parent=11 // pred_region
        _
      $region20: #{residual_block_forward_nhwc.1} parent=11 // pred_fallthru
        _
      // Predicated region
      $region21: #{residual_block_forward_nhwc.1} parent=11 // pred_check
        %p302 = pneg %p190
      $region22: #{residual_block_forward_nhwc.1} parent=11 // pred_check_branch
        %304 = sbr.rel (%p302) target = $region24
      $region23: #{residual_block_forward_nhwc.1} parent=11 // pred_region
        _
      $region24: #{residual_block_forward_nhwc.1} parent=11 // pred_fallthru
        _
      // Predicated region
      $region25: #{residual_block_forward_nhwc.1} parent=11 // pred_check
        %p305 = pneg %p211
      $region26: #{residual_block_forward_nhwc.1} parent=11 // pred_check_branch
        %307 = sbr.rel (%p305) target = $region28
      $region27: #{residual_block_forward_nhwc.1} parent=11 // pred_region
        _
      $region28: #{residual_block_forward_nhwc.1} parent=11 // pred_fallthru
        _
      // Predicated region
      $region29: #{residual_block_forward_nhwc.1} parent=11 // pred_check
        %p308 = pneg %p232
      $region30: #{residual_block_forward_nhwc.1} parent=11 // pred_check_branch
        %310 = sbr.rel (%p308) target = $region32
      $region31: #{residual_block_forward_nhwc.1} parent=11 // pred_region
        _
      $region32: #{residual_block_forward_nhwc.1} parent=11 // pred_fallthru
        _
      // Predicated region
      $region33: #{residual_block_forward_nhwc.1} parent=11 // pred_check
        %p311 = pneg %p253
      $region34: #{residual_block_forward_nhwc.1} parent=11 // pred_check_branch
        %313 = sbr.rel (%p311) target = $region36
      $region35: #{residual_block_forward_nhwc.1} parent=11 // pred_region
        _
      $region36: #{residual_block_forward_nhwc.1} parent=11 // pred_fallthru
        _
    $region12: #{residual_block_forward_nhwc.1} parent=5 // pred_fallthru
      _
    %p314 = scmp.lt.s32.totalorder %s15, 2
    // Predicated region
    $region37: #{residual_block_forward_nhwc.1} parent=5 // pred_check
      %p315 = pneg %p314
    $region38: #{residual_block_forward_nhwc.1} parent=5 // pred_check_branch
      %317 = sbr.rel (%p315) target = $region40
    $region39: #{residual_block_forward_nhwc.1} parent=5 // pred_region
      // Predicated region
      $region41: #{residual_block_forward_nhwc.1} parent=39 // pred_check
        %p318 = pneg %p49
      $region42: #{residual_block_forward_nhwc.1} parent=39 // pred_check_branch
        %320 = sbr.rel (%p318) target = $region44
      $region43: #{residual_block_forward_nhwc.1} parent=39 // pred_region
        %s321 = smul.u32 16, %s23
        %p322 = scmp.lt.s32.totalorder %s22, 1
        %s323 = scalar_select %p322, %s22, 1
        %p324 = scmp.lt.s32.totalorder %s321, 15
        %s325 = scalar_select %p324, %s321, 15
        %s326 = smul.addr %s325, 2
        %s327 = smul.addr %s323, 32
        %s328 = sadd.s32 %s326, %s327
        %s329 = smul.addr %s328, 8
        %s330 = scalar_lea.vmem %s0, %s329
        %s331 = smul.u32 16, %s23
      $region44: #{residual_block_forward_nhwc.1} parent=39 // pred_fallthru
        _
      // Predicated region
      $region45: #{residual_block_forward_nhwc.1} parent=39 // pred_check
        %p332 = pneg %p85
      $region46: #{residual_block_forward_nhwc.1} parent=39 // pred_check_branch
        %334 = sbr.rel (%p332) target = $region48
      $region47: #{residual_block_forward_nhwc.1} parent=39 // pred_region
        %s335 = smul.u32 %s23, 16
        %s336 = ssub.s32 %s335, 1
        %p337 = scmp.gt.s32.totalorder %s336, 0
        %s338 = scalar_select %p337, %s336, 0
        %p339 = scmp.lt.s32.totalorder %s22, 1
        %s340 = scalar_select %p339, %s22, 1
        %p341 = scmp.lt.s32.totalorder %s338, 15
        %s342 = scalar_select %p341, %s338, 15
        %s343 = smul.addr %s342, 2
        %s344 = smul.addr %s340, 32
        %s345 = sadd.s32 %s343, %s344
        %s346 = smul.addr %s345, 8
        %s347 = scalar_lea.vmem %s1, %s346
        %s348 = smul.u32 %s23, 16
        %s349 = ssub.s32 %s348, 1
        %p350 = scmp.gt.s32.totalorder %s349, 0
        %s351 = scalar_select %p350, %s349, 0
      $region48: #{residual_block_forward_nhwc.1} parent=39 // pred_fallthru
        _
      // Predicated region
      $region49: #{residual_block_forward_nhwc.1} parent=39 // pred_check
        %p352 = pneg %p121
      $region50: #{residual_block_forward_nhwc.1} parent=39 // pred_check_branch
        %354 = sbr.rel (%p352) target = $region52
      $region51: #{residual_block_forward_nhwc.1} parent=39 // pred_region
        %s355 = smul.u32 %s23, 16
        %s356 = sadd.s32 %s355, 16
        %p357 = scmp.lt.s32.totalorder %s356, 15
        %s358 = scalar_select %p357, %s356, 15
        %p359 = scmp.lt.s32.totalorder %s22, 1
        %s360 = scalar_select %p359, %s22, 1
        %p361 = scmp.lt.s32.totalorder %s358, 15
        %s362 = scalar_select %p361, %s358, 15
        %s363 = smul.addr %s362, 2
        %s364 = smul.addr %s360, 32
        %s365 = sadd.s32 %s363, %s364
        %s366 = smul.addr %s365, 8
        %s367 = scalar_lea.vmem %s2, %s366
        %s368 = smul.u32 %s23, 16
        %s369 = sadd.s32 %s368, 16
        %p370 = scmp.lt.s32.totalorder %s369, 15
        %s371 = scalar_select %p370, %s369, 15
      $region52: #{residual_block_forward_nhwc.1} parent=39 // pred_fallthru
        _
    $region40: #{residual_block_forward_nhwc.1} parent=5 // pred_fallthru
      _
    %p372 = scmp.le.s32.totalorder 1, %s15
    %p373 = scmp.lt.s32.totalorder %s15, 3
    %p374 = pnand %p372, %p373
    %p375 = pneg %p374
    // Predicated region
    $region53: #{residual_block_forward_nhwc.1} parent=5 // pred_check
      _
    $region54: #{residual_block_forward_nhwc.1} parent=5 // pred_check_branch
      %377 = sbr.rel (%p374) target = $region56
    $region55: #{residual_block_forward_nhwc.1} parent=5 // pred_region
      %s378 = ssub.s32 %s15, 1
      %s379 = smul.u32 16, %s25
      %p380 = scmp.lt.s32.totalorder %s24, 1
      %s381 = scalar_select %p380, %s24, 1
      %p382 = scmp.lt.s32.totalorder %s379, 15
      %s383 = scalar_select %p382, %s379, 15
      %s384 = smul.addr %s383, 2
      %s385 = smul.addr %s381, 32
      %s386 = sadd.s32 %s384, %s385
      %s387 = smul.addr %s386, 8
      %s388 = scalar_lea.vmem %s0, %s387
      %p389 = pneg %p55
      %p390 = pneg %p52
      %s391 = smul.u32 %s25, 16
      %s392 = ssub.s32 %s391, 1
      %p393 = scmp.gt.s32.totalorder %s392, 0
      %s394 = scalar_select %p393, %s392, 0
      %p395 = scmp.lt.s32.totalorder %s24, 1
      %s396 = scalar_select %p395, %s24, 1
      %p397 = scmp.lt.s32.totalorder %s394, 15
      %s398 = scalar_select %p397, %s394, 15
      %s399 = smul.addr %s398, 2
      %s400 = smul.addr %s396, 32
      %s401 = sadd.s32 %s399, %s400
      %s402 = smul.addr %s401, 8
      %s403 = scalar_lea.vmem %s1, %s402
      %p404 = pneg %p91
      %p405 = pneg %p88
      %s406 = smul.u32 %s25, 16
      %s407 = sadd.s32 %s406, 16
      %p408 = scmp.lt.s32.totalorder %s407, 15
      %s409 = scalar_select %p408, %s407, 15
      %p410 = scmp.lt.s32.totalorder %s24, 1
      %s411 = scalar_select %p410, %s24, 1
      %p412 = scmp.lt.s32.totalorder %s409, 15
      %s413 = scalar_select %p412, %s409, 15
      %s414 = smul.addr %s413, 2
      %s415 = smul.addr %s411, 32
      %s416 = sadd.s32 %s414, %s415
      %s417 = smul.addr %s416, 8
      %s418 = scalar_lea.vmem %s2, %s417
      %p419 = pneg %p127
      %p420 = pneg %p124
      %p421 = pneg %p148
      %p422 = pneg %p145
      %p423 = pneg %p169
      %p424 = pneg %p166
      %p425 = pneg %p190
      %p426 = pneg %p187
      %p427 = pneg %p211
      %p428 = pneg %p208
      %p429 = pneg %p232
      %p430 = pneg %p229
      %p431 = pneg %p253
      %p432 = pneg %p250
      %p433 = pneg %p281
      %p434 = pneg %p278
      %s435 = smul.u32 16, %s25
      %p436 = scmp.lt.s32.totalorder %s24, 1
      %s437 = scalar_select %p436, %s24, 1
      %p438 = scmp.lt.s32.totalorder %s435, 15
      %s439 = scalar_select %p438, %s435, 15
      %s440 = smul.addr %s439, 2
      %s441 = smul.addr %s437, 32
      %s442 = sadd.s32 %s440, %s441
      %s443 = smul.addr %s442, 8
      %s444 = scalar_lea.vmem %s9, %s443
      %s445 = smul.u32 16, %s25
      %p446 = scmp.lt.s32.totalorder %s24, 1
      %s447 = scalar_select %p446, %s24, 1
      %p448 = scmp.lt.s32.totalorder %s445, 15
      %s449 = scalar_select %p448, %s445, 15
      %s450 = smul.addr %s449, 2
      %s451 = smul.addr %s447, 32
      %s452 = sadd.s32 %s450, %s451
      %s453 = smul.addr %s452, 8
      %s454 = scalar_lea.vmem %s0, %s453
      %s455 = smul.u32 16, %s25
      %s456 = smul.u32 %s25, 16
      %s457 = ssub.s32 %s456, 1
      %p458 = scmp.gt.s32.totalorder %s457, 0
      %s459 = scalar_select %p458, %s457, 0
      %p460 = scmp.lt.s32.totalorder %s24, 1
      %s461 = scalar_select %p460, %s24, 1
      %p462 = scmp.lt.s32.totalorder %s459, 15
      %s463 = scalar_select %p462, %s459, 15
      %s464 = smul.addr %s463, 2
      %s465 = smul.addr %s461, 32
      %s466 = sadd.s32 %s464, %s465
      %s467 = smul.addr %s466, 8
      %s468 = scalar_lea.vmem %s1, %s467
      %s469 = smul.u32 %s25, 16
      %s470 = ssub.s32 %s469, 1
      %p471 = scmp.gt.s32.totalorder %s470, 0
      %s472 = scalar_select %p471, %s470, 0
      %s473 = smul.u32 %s25, 16
      %s474 = sadd.s32 %s473, 16
      %p475 = scmp.lt.s32.totalorder %s474, 15
      %s476 = scalar_select %p475, %s474, 15
      %p477 = scmp.lt.s32.totalorder %s24, 1
      %s478 = scalar_select %p477, %s24, 1
      %p479 = scmp.lt.s32.totalorder %s476, 15
      %s480 = scalar_select %p479, %s476, 15
      %s481 = smul.addr %s480, 2
      %s482 = smul.addr %s478, 32
      %s483 = sadd.s32 %s481, %s482
      %s484 = smul.addr %s483, 8
      %s485 = scalar_lea.vmem %s2, %s484
      %s486 = smul.u32 %s25, 16
      %s487 = sadd.s32 %s486, 16
      %p488 = scmp.lt.s32.totalorder %s487, 15
      %s489 = scalar_select %p488, %s487, 15
      %s490 = smul.u32 16, %s25
      %p491 = scmp.lt.s32.totalorder %s24, 1
      %s492 = scalar_select %p491, %s24, 1
      %p493 = scmp.lt.s32.totalorder %s490, 15
      %s494 = scalar_select %p493, %s490, 15
      %s495 = smul.addr %s494, 2
      %s496 = smul.addr %s492, 32
      %s497 = sadd.s32 %s495, %s496
      %s498 = smul.addr %s497, 8
      %s499 = scalar_lea.vmem %s9, %s498
      %s500 = smul.u32 16, %s25
      %v501 = vld [vmem:[%s3] sm:$0xf]
      %v502 = vld [vmem:[%s3 + $0x4] sm:$0xf]
      %v503 = vld [vmem:[%s3 + $0x8] sm:$0xf]
      %v504 = vld [vmem:[%s3 + $0xc] sm:$0xf]
      %v505 = vld [vmem:[%s3 + $0x10] sm:$0xf]
      %v506 = vld [vmem:[%s3 + $0x14] sm:$0xf]
      %v507 = vld [vmem:[%s3 + $0x18] sm:$0xf]
      %v508 = vld [vmem:[%s3 + $0x1c] sm:$0xf]
      %v509 = vld [vmem:[%s3 + $0x20] sm:$0xf]
      %v510 = vld [vmem:[%s3 + $0x24] sm:$0xf]
      %v511 = vld [vmem:[%s3 + $0x28] sm:$0xf]
      %v512 = vld [vmem:[%s3 + $0x2c] sm:$0xf]
      %v513 = vld [vmem:[%s3 + $0x30] sm:$0xf]
      %v514 = vld [vmem:[%s3 + $0x34] sm:$0xf]
      %v515 = vld [vmem:[%s3 + $0x38] sm:$0xf]
      %v516 = vld [vmem:[%s3 + $0x3c] sm:$0xf]
      %v517 = vld [vmem:[%s4] sm:$0x1]
      %v518 = vld [vmem:[%s454] sm:$0xff]
      %v519 = vld [vmem:[%s454 + $0x8] sm:$0xff]
      %v520 = vld [vmem:[%s454 + $0x10] sm:$0xff]
      %v521 = vld [vmem:[%s454 + $0x18] sm:$0xff]
      %v522 = vld [vmem:[%s454 + $0x20] sm:$0xff]
      %v523 = vld [vmem:[%s454 + $0x28] sm:$0xff]
      %v524 = vld [vmem:[%s454 + $0x30] sm:$0xff]
      %v525 = vld [vmem:[%s454 + $0x38] sm:$0xff]
      %v526 = vld [vmem:[%s454 + $0x40] sm:$0xff]
      %v527 = vld [vmem:[%s454 + $0x48] sm:$0xff]
      %v528 = vld [vmem:[%s454 + $0x50] sm:$0xff]
      %v529 = vld [vmem:[%s454 + $0x58] sm:$0xff]
      %v530 = vld [vmem:[%s454 + $0x60] sm:$0xff]
      %v531 = vld [vmem:[%s454 + $0x68] sm:$0xff]
      %v532 = vld [vmem:[%s454 + $0x70] sm:$0xff]
      %v533 = vld [vmem:[%s454 + $0x78] sm:$0xff]
      %v534 = vld [vmem:[%s454 + $0x80] sm:$0xff]
      %v535 = vld [vmem:[%s454 + $0x88] sm:$0xff]
      %v536 = vld [vmem:[%s454 + $0x90] sm:$0xff]
      %v537 = vld [vmem:[%s454 + $0x98] sm:$0xff]
      %v538 = vld [vmem:[%s454 + $0xa0] sm:$0xff]
      %v539 = vld [vmem:[%s454 + $0xa8] sm:$0xff]
      %v540 = vld [vmem:[%s454 + $0xb0] sm:$0xff]
      %v541 = vld [vmem:[%s454 + $0xb8] sm:$0xff]
      %v542 = vld [vmem:[%s454 + $0xc0] sm:$0xff]
      %v543 = vld [vmem:[%s454 + $0xc8] sm:$0xff]
      %v544 = vld [vmem:[%s454 + $0xd0] sm:$0xff]
      %v545 = vld [vmem:[%s454 + $0xd8] sm:$0xff]
      %v546 = vld [vmem:[%s454 + $0xe0] sm:$0xff]
      %v547 = vld [vmem:[%s454 + $0xe8] sm:$0xff]
      %v548 = vld [vmem:[%s454 + $0xf0] sm:$0xff]
      %v549 = vld [vmem:[%s454 + $0xf8] sm:$0xff]
      %v550 = vpack.c.bf16 %v519, %v518
      %v551 = vpack.c.bf16 %v521, %v520
      %v552 = vpack.c.bf16 %v523, %v522
      %v553 = vpack.c.bf16 %v525, %v524
      %v554 = vpack.c.bf16 %v527, %v526
      %v555 = vpack.c.bf16 %v529, %v528
      %v556 = vpack.c.bf16 %v531, %v530
      %v557 = vpack.c.bf16 %v533, %v532
      %v558 = vpack.c.bf16 %v535, %v534
      %v559 = vpack.c.bf16 %v537, %v536
      %v560 = vpack.c.bf16 %v539, %v538
      %v561 = vpack.c.bf16 %v541, %v540
      %v562 = vpack.c.bf16 %v543, %v542
      %v563 = vpack.c.bf16 %v545, %v544
      %v564 = vpack.c.bf16 %v547, %v546
      %v565 = vpack.c.bf16 %v549, %v548
      %v567 = vperm.slane %v517, 0
      %v585 = vunpack.c.l.b16 %v501
      %v586 = vunpack.c.l.b16 %v502
      %v587 = vunpack.c.l.b16 %v503
      %v588 = vunpack.c.l.b16 %v504
      %v589 = vunpack.c.l.b16 %v505
      %v590 = vunpack.c.l.b16 %v506
      %v591 = vunpack.c.l.b16 %v507
      %v592 = vunpack.c.l.b16 %v508
      %v593 = vunpack.c.l.b16 %v509
      %v594 = vunpack.c.l.b16 %v510
      %v595 = vunpack.c.l.b16 %v511
      %v596 = vunpack.c.l.b16 %v512
      %v597 = vunpack.c.l.b16 %v513
      %v598 = vunpack.c.l.b16 %v514
      %v599 = vunpack.c.l.b16 %v515
      %v600 = vunpack.c.l.b16 %v516
      %v601 = vpack.c.b16 %v586, %v585
      %v602 = vpack.c.b16 %v588, %v587
      %v603 = vpack.c.b16 %v590, %v589
      %v604 = vpack.c.b16 %v592, %v591
      %v605 = vpack.c.b16 %v594, %v593
      %v606 = vpack.c.b16 %v596, %v595
      %v607 = vpack.c.b16 %v598, %v597
      %v608 = vpack.c.b16 %v600, %v599
      %617 = vmatpush.bf16.msra.mxu0 %v608
      %618 = vmatpush.bf16.msra.mxu0 %v607
      %619 = vmatpush.bf16.msra.mxu0 %v606
      %620 = vmatpush.bf16.msra.mxu0 %v605
      %621 = vmatpush.bf16.msra.mxu0 %v604
      %622 = vmatpush.bf16.msra.mxu0 %v603
      %623 = vmatpush.bf16.msra.mxu0 %v602
      %624 = vmatpush.bf16.msra.mxu0 %v601
      %625 = vmatmul.bf16.gmra.mxu0 %v550
      %v626 = vpop.f32.mrf.mxu0
      %v627 = vadd.f32 %v567, %v626
      %v628 = vpop.f32.mrf.mxu0
      %v629 = vadd.f32 %v567, %v628
      %630 = vmatmul.bf16.gmra.mxu0 %v551
      %v631 = vpop.f32.mrf.mxu0
      %v632 = vadd.f32 %v567, %v631
      %v633 = vpop.f32.mrf.mxu0
      %v634 = vadd.f32 %v567, %v633
      %635 = vmatmul.bf16.gmra.mxu0 %v552
      %v636 = vpop.f32.mrf.mxu0
      %v637 = vadd.f32 %v567, %v636
      %v638 = vpop.f32.mrf.mxu0
      %v639 = vadd.f32 %v567, %v638
      %640 = vmatmul.bf16.gmra.mxu0 %v553
      %v641 = vpop.f32.mrf.mxu0
      %v642 = vadd.f32 %v567, %v641
      %v643 = vpop.f32.mrf.mxu0
      %v644 = vadd.f32 %v567, %v643
      %645 = vmatmul.bf16.gmra.mxu0 %v554
      %v646 = vpop.f32.mrf.mxu0
      %v647 = vadd.f32 %v567, %v646
      %v648 = vpop.f32.mrf.mxu0
      %v649 = vadd.f32 %v567, %v648
      %650 = vmatmul.bf16.gmra.mxu0 %v555
      %v651 = vpop.f32.mrf.mxu0
      %v652 = vadd.f32 %v567, %v651
      %v653 = vpop.f32.mrf.mxu0
      %v654 = vadd.f32 %v567, %v653
      %655 = vmatmul.bf16.gmra.mxu0 %v556
      %v656 = vpop.f32.mrf.mxu0
      %v657 = vadd.f32 %v567, %v656
      %v658 = vpop.f32.mrf.mxu0
      %v659 = vadd.f32 %v567, %v658
      %660 = vmatmul.bf16.gmra.mxu0 %v557
      %v661 = vpop.f32.mrf.mxu0
      %v662 = vadd.f32 %v567, %v661
      %v663 = vpop.f32.mrf.mxu0
      %v664 = vadd.f32 %v567, %v663
      %665 = vmatmul.bf16.gmra.mxu0 %v558
      %v666 = vpop.f32.mrf.mxu0
      %v667 = vadd.f32 %v567, %v666
      %v668 = vpop.f32.mrf.mxu0
      %v669 = vadd.f32 %v567, %v668
      %670 = vmatmul.bf16.gmra.mxu0 %v559
      %v671 = vpop.f32.mrf.mxu0
      %v672 = vadd.f32 %v567, %v671
      %v673 = vpop.f32.mrf.mxu0
      %v674 = vadd.f32 %v567, %v673
      %675 = vmatmul.bf16.gmra.mxu0 %v560
      %v676 = vpop.f32.mrf.mxu0
      %v677 = vadd.f32 %v567, %v676
      %v678 = vpop.f32.mrf.mxu0
      %v679 = vadd.f32 %v567, %v678
      %680 = vmatmul.bf16.gmra.mxu0 %v561
      %v681 = vpop.f32.mrf.mxu0
      %v682 = vadd.f32 %v567, %v681
      %v683 = vpop.f32.mrf.mxu0
      %v684 = vadd.f32 %v567, %v683
      %685 = vmatmul.bf16.gmra.mxu0 %v562
      %v686 = vpop.f32.mrf.mxu0
      %v687 = vadd.f32 %v567, %v686
      %v688 = vpop.f32.mrf.mxu0
      %v689 = vadd.f32 %v567, %v688
      %690 = vmatmul.bf16.gmra.mxu0 %v563
      %v691 = vpop.f32.mrf.mxu0
      %v692 = vadd.f32 %v567, %v691
      %v693 = vpop.f32.mrf.mxu0
      %v694 = vadd.f32 %v567, %v693
      %695 = vmatmul.bf16.gmra.mxu0 %v564
      %v696 = vpop.f32.mrf.mxu0
      %v697 = vadd.f32 %v567, %v696
      %v698 = vpop.f32.mrf.mxu0
      %v699 = vadd.f32 %v567, %v698
      %700 = vmatmul.bf16.gmra.mxu0 %v565
      %v701 = vpop.f32.mrf.mxu0
      %v702 = vadd.f32 %v567, %v701
      %v703 = vpop.f32.mrf.mxu0
      %v704 = vadd.f32 %v567, %v703
      %705 = vdwg.mxu0
      %v706 = vmax.f32 %v627, 0.0
      %v707 = vmax.f32 %v629, 0.0
      %v708 = vmax.f32 %v632, 0.0
      %v709 = vmax.f32 %v634, 0.0
      %v710 = vmax.f32 %v637, 0.0
      %v711 = vmax.f32 %v639, 0.0
      %v712 = vmax.f32 %v642, 0.0
      %v713 = vmax.f32 %v644, 0.0
      %v714 = vmax.f32 %v647, 0.0
      %v715 = vmax.f32 %v649, 0.0
      %v716 = vmax.f32 %v652, 0.0
      %v717 = vmax.f32 %v654, 0.0
      %v718 = vmax.f32 %v657, 0.0
      %v719 = vmax.f32 %v659, 0.0
      %v720 = vmax.f32 %v662, 0.0
      %v721 = vmax.f32 %v664, 0.0
      %v722 = vmax.f32 %v667, 0.0
      %v723 = vmax.f32 %v669, 0.0
      %v724 = vmax.f32 %v672, 0.0
      %v725 = vmax.f32 %v674, 0.0
      %v726 = vmax.f32 %v677, 0.0
      %v727 = vmax.f32 %v679, 0.0
      %v728 = vmax.f32 %v682, 0.0
      %v729 = vmax.f32 %v684, 0.0
      %v730 = vmax.f32 %v687, 0.0
      %v731 = vmax.f32 %v689, 0.0
      %v732 = vmax.f32 %v692, 0.0
      %v733 = vmax.f32 %v694, 0.0
      %v734 = vmax.f32 %v697, 0.0
      %v735 = vmax.f32 %v699, 0.0
      %v736 = vmax.f32 %v702, 0.0
      %v737 = vmax.f32 %v704, 0.0
      %v738 = vld [vmem:[%s468] sm:$0xff]
      %v739 = vld [vmem:[%s468 + $0x8] sm:$0xff]
      %v740 = vpack.c.bf16 %v739, %v738
      %v741 = vld [vmem:[%s485] sm:$0xff]
      %v742 = vld [vmem:[%s485 + $0x8] sm:$0xff]
      %v743 = vpack.c.bf16 %v742, %v741
      %744 = vmatpush.bf16.msra.mxu0 %v608
      %745 = vmatpush.bf16.msra.mxu0 %v607
      %746 = vmatpush.bf16.msra.mxu0 %v606
      %747 = vmatpush.bf16.msra.mxu0 %v605
      %748 = vmatpush.bf16.msra.mxu0 %v604
      %749 = vmatpush.bf16.msra.mxu0 %v603
      %750 = vmatpush.bf16.msra.mxu0 %v602
      %751 = vmatpush.bf16.msra.mxu0 %v601
      %752 = vmatmul.bf16.gmra.mxu0 %v740
      %v753 = vpop.f32.mrf.mxu0
      %v754 = vadd.f32 %v567, %v753
      %v755 = vpop.f32.mrf.mxu0
      %v756 = vadd.f32 %v567, %v755
      %757 = vdwg.mxu0
      %v758 = vmax.f32 %v754, 0.0
      %v759 = vmax.f32 %v756, 0.0
      %760 = vmatpush.bf16.msra.mxu0 %v608
      %761 = vmatpush.bf16.msra.mxu0 %v607
      %762 = vmatpush.bf16.msra.mxu0 %v606
      %763 = vmatpush.bf16.msra.mxu0 %v605
      %764 = vmatpush.bf16.msra.mxu0 %v604
      %765 = vmatpush.bf16.msra.mxu0 %v603
      %766 = vmatpush.bf16.msra.mxu0 %v602
      %767 = vmatpush.bf16.msra.mxu0 %v601
      %768 = vmatmul.bf16.gmra.mxu0 %v743
      %v769 = vpop.f32.mrf.mxu0
      %v770 = vadd.f32 %v567, %v769
      %v771 = vpop.f32.mrf.mxu0
      %v772 = vadd.f32 %v567, %v771
      %773 = vdwg.mxu0
      %v774 = vmax.f32 %v770, 0.0
      %v775 = vmax.f32 %v772, 0.0
      %p776 = scmp.gt.s32.totalorder %s25, 0
      %s777 = scalar_select %p776, 1, 0
      %s778 = scvt.s32.f32 %s777
      %v779 = vstv %s778
      %v780 = vmul.f32 %v758, %v779
      %v781 = vmul.f32 %v759, %v779
      %p782 = scmp.lt.s32.totalorder %s25, 0
      %s783 = scalar_select %p782, 1, 0
      %s784 = scvt.s32.f32 %s783
      %v785 = vstv %s784
      %v786 = vmul.f32 %v774, %v785
      %v787 = vmul.f32 %v775, %v785
      %v788 = vlaneseq
      %v789 = vshrl.u32 %v788, 7
      %v790 = vadd.s32 %v789, 8
      %v791 = vadd.s32 %v789, 16
      %v792 = vadd.s32 %v789, 24
      %v793 = vadd.s32 %v789, 32
      %v794 = vadd.s32 %v789, 40
      %v795 = vadd.s32 %v789, 48
      %v796 = vadd.s32 %v789, 56
      %v797 = vadd.s32 %v789, 64
      %v798 = vadd.s32 %v789, 72
      %v799 = vadd.s32 %v789, 80
      %v800 = vadd.s32 %v789, 88
      %v801 = vadd.s32 %v789, 96
      %v802 = vadd.s32 %v789, 104
      %v803 = vadd.s32 %v789, 112
      %v804 = vadd.s32 %v789, 120
      %v805 = vadd.s32 %v789, 128
      %v806 = vadd.s32 %v789, 136
      %v807 = vadd.s32 %v789, 144
      %v808 = vadd.s32 %v789, 152
      %v809 = vadd.s32 %v789, 160
      %v810 = vadd.s32 %v789, 168
      %v811 = vadd.s32 %v789, 176
      %v812 = vadd.s32 %v789, 184
      %v813 = vadd.s32 %v789, 192
      %v814 = vadd.s32 %v789, 200
      %v815 = vadd.s32 %v789, 208
      %v816 = vadd.s32 %v789, 216
      %v817 = vadd.s32 %v789, 224
      %v818 = vadd.s32 %v789, 232
      %v819 = vadd.s32 %v789, 240
      %v820 = vadd.s32 %v789, 248
      %v821 = vadd.s32 %v789, 256
      %v822 = vadd.s32 %v789, 264
      %v823 = vadd.s32 %v789, 272
      %v824 = vadd.s32 %v789, 280
      %vm825 = vcmp.lt.s32.totalorder %v789, 0
      %v826 = vsub.s32 0, %v789
      %v827 = vsel %vm825, %v826, %v789
      %v828 = vshrl.u32 %v827, 4
      %v829 = vand.u32 %v827, 15
      %v830 = vsub.s32 0, %v829
      %v831 = vsel %vm825, %v830, %v829
      %vm832 = vcmp.lt.s32.totalorder %v790, 0
      %v833 = vsub.s32 0, %v790
      %v834 = vsel %vm832, %v833, %v790
      %v835 = vshrl.u32 %v834, 4
      %v836 = vand.u32 %v834, 15
      %v837 = vsub.s32 0, %v836
      %v838 = vsel %vm832, %v837, %v836
      %vm839 = vcmp.lt.s32.totalorder %v791, 0
      %v840 = vsub.s32 0, %v791
      %v841 = vsel %vm839, %v840, %v791
      %v842 = vshrl.u32 %v841, 4
      %v843 = vand.u32 %v841, 15
      %v844 = vsub.s32 0, %v843
      %v845 = vsel %vm839, %v844, %v843
      %vm846 = vcmp.lt.s32.totalorder %v792, 0
      %v847 = vsub.s32 0, %v792
      %v848 = vsel %vm846, %v847, %v792
      %v849 = vshrl.u32 %v848, 4
      %v850 = vand.u32 %v848, 15
      %v851 = vsub.s32 0, %v850
      %v852 = vsel %vm846, %v851, %v850
      %vm853 = vcmp.lt.s32.totalorder %v793, 0
      %v854 = vsub.s32 0, %v793
      %v855 = vsel %vm853, %v854, %v793
      %v856 = vshrl.u32 %v855, 4
      %v857 = vand.u32 %v855, 15
      %v858 = vsub.s32 0, %v857
      %v859 = vsel %vm853, %v858, %v857
      %vm860 = vcmp.lt.s32.totalorder %v794, 0
      %v861 = vsub.s32 0, %v794
      %v862 = vsel %vm860, %v861, %v794
      %v863 = vshrl.u32 %v862, 4
      %v864 = vand.u32 %v862, 15
      %v865 = vsub.s32 0, %v864
      %v866 = vsel %vm860, %v865, %v864
      %vm867 = vcmp.lt.s32.totalorder %v795, 0
      %v868 = vsub.s32 0, %v795
      %v869 = vsel %vm867, %v868, %v795
      %v870 = vshrl.u32 %v869, 4
      %v871 = vand.u32 %v869, 15
      %v872 = vsub.s32 0, %v871
      %v873 = vsel %vm867, %v872, %v871
      %vm874 = vcmp.lt.s32.totalorder %v796, 0
      %v875 = vsub.s32 0, %v796
      %v876 = vsel %vm874, %v875, %v796
      %v877 = vshrl.u32 %v876, 4
      %v878 = vand.u32 %v876, 15
      %v879 = vsub.s32 0, %v878
      %v880 = vsel %vm874, %v879, %v878
      %vm881 = vcmp.lt.s32.totalorder %v797, 0
      %v882 = vsub.s32 0, %v797
      %v883 = vsel %vm881, %v882, %v797
      %v884 = vshrl.u32 %v883, 4
      %v885 = vand.u32 %v883, 15
      %v886 = vsub.s32 0, %v885
      %v887 = vsel %vm881, %v886, %v885
      %vm888 = vcmp.lt.s32.totalorder %v798, 0
      %v889 = vsub.s32 0, %v798
      %v890 = vsel %vm888, %v889, %v798
      %v891 = vshrl.u32 %v890, 4
      %v892 = vand.u32 %v890, 15
      %v893 = vsub.s32 0, %v892
      %v894 = vsel %vm888, %v893, %v892
      %vm895 = vcmp.lt.s32.totalorder %v799, 0
      %v896 = vsub.s32 0, %v799
      %v897 = vsel %vm895, %v896, %v799
      %v898 = vshrl.u32 %v897, 4
      %v899 = vand.u32 %v897, 15
      %v900 = vsub.s32 0, %v899
      %v901 = vsel %vm895, %v900, %v899
      %vm902 = vcmp.lt.s32.totalorder %v800, 0
      %v903 = vsub.s32 0, %v800
      %v904 = vsel %vm902, %v903, %v800
      %v905 = vshrl.u32 %v904, 4
      %v906 = vand.u32 %v904, 15
      %v907 = vsub.s32 0, %v906
      %v908 = vsel %vm902, %v907, %v906
      %vm909 = vcmp.lt.s32.totalorder %v801, 0
      %v910 = vsub.s32 0, %v801
      %v911 = vsel %vm909, %v910, %v801
      %v912 = vshrl.u32 %v911, 4
      %v913 = vand.u32 %v911, 15
      %v914 = vsub.s32 0, %v913
      %v915 = vsel %vm909, %v914, %v913
      %vm916 = vcmp.lt.s32.totalorder %v802, 0
      %v917 = vsub.s32 0, %v802
      %v918 = vsel %vm916, %v917, %v802
      %v919 = vshrl.u32 %v918, 4
      %v920 = vand.u32 %v918, 15
      %v921 = vsub.s32 0, %v920
      %v922 = vsel %vm916, %v921, %v920
      %vm923 = vcmp.lt.s32.totalorder %v803, 0
      %v924 = vsub.s32 0, %v803
      %v925 = vsel %vm923, %v924, %v803
      %v926 = vshrl.u32 %v925, 4
      %v927 = vand.u32 %v925, 15
      %v928 = vsub.s32 0, %v927
      %v929 = vsel %vm923, %v928, %v927
      %vm930 = vcmp.lt.s32.totalorder %v804, 0
      %v931 = vsub.s32 0, %v804
      %v932 = vsel %vm930, %v931, %v804
      %v933 = vshrl.u32 %v932, 4
      %v934 = vand.u32 %v932, 15
      %v935 = vsub.s32 0, %v934
      %v936 = vsel %vm930, %v935, %v934
      %vm937 = vcmp.lt.s32.totalorder %v805, 0
      %v938 = vsub.s32 0, %v805
      %v939 = vsel %vm937, %v938, %v805
      %v940 = vshrl.u32 %v939, 4
      %v941 = vand.u32 %v939, 15
      %v942 = vsub.s32 0, %v941
      %v943 = vsel %vm937, %v942, %v941
      %vm944 = vcmp.lt.s32.totalorder %v806, 0
      %v945 = vsub.s32 0, %v806
      %v946 = vsel %vm944, %v945, %v806
      %v947 = vshrl.u32 %v946, 4
      %v948 = vand.u32 %v946, 15
      %v949 = vsub.s32 0, %v948
      %v950 = vsel %vm944, %v949, %v948
      %vm951 = vcmp.lt.s32.totalorder %v807, 0
      %v952 = vsub.s32 0, %v807
      %v953 = vsel %vm951, %v952, %v807
      %v954 = vshrl.u32 %v953, 4
      %v955 = vand.u32 %v953, 15
      %v956 = vsub.s32 0, %v955
      %v957 = vsel %vm951, %v956, %v955
      %vm958 = vcmp.lt.s32.totalorder %v808, 0
      %v959 = vsub.s32 0, %v808
      %v960 = vsel %vm958, %v959, %v808
      %v961 = vshrl.u32 %v960, 4
      %v962 = vand.u32 %v960, 15
      %v963 = vsub.s32 0, %v962
      %v964 = vsel %vm958, %v963, %v962
      %vm965 = vcmp.lt.s32.totalorder %v809, 0
      %v966 = vsub.s32 0, %v809
      %v967 = vsel %vm965, %v966, %v809
      %v968 = vshrl.u32 %v967, 4
      %v969 = vand.u32 %v967, 15
      %v970 = vsub.s32 0, %v969
      %v971 = vsel %vm965, %v970, %v969
      %vm972 = vcmp.lt.s32.totalorder %v810, 0
      %v973 = vsub.s32 0, %v810
      %v974 = vsel %vm972, %v973, %v810
      %v975 = vshrl.u32 %v974, 4
      %v976 = vand.u32 %v974, 15
      %v977 = vsub.s32 0, %v976
      %v978 = vsel %vm972, %v977, %v976
      %vm979 = vcmp.lt.s32.totalorder %v811, 0
      %v980 = vsub.s32 0, %v811
      %v981 = vsel %vm979, %v980, %v811
      %v982 = vshrl.u32 %v981, 4
      %v983 = vand.u32 %v981, 15
      %v984 = vsub.s32 0, %v983
      %v985 = vsel %vm979, %v984, %v983
      %vm986 = vcmp.lt.s32.totalorder %v812, 0
      %v987 = vsub.s32 0, %v812
      %v988 = vsel %vm986, %v987, %v812
      %v989 = vshrl.u32 %v988, 4
      %v990 = vand.u32 %v988, 15
      %v991 = vsub.s32 0, %v990
      %v992 = vsel %vm986, %v991, %v990
      %vm993 = vcmp.lt.s32.totalorder %v813, 0
      %v994 = vsub.s32 0, %v813
      %v995 = vsel %vm993, %v994, %v813
      %v996 = vshrl.u32 %v995, 4
      %v997 = vand.u32 %v995, 15
      %v998 = vsub.s32 0, %v997
      %v999 = vsel %vm993, %v998, %v997
      %vm1000 = vcmp.lt.s32.totalorder %v814, 0
      %v1001 = vsub.s32 0, %v814
      %v1002 = vsel %vm1000, %v1001, %v814
      %v1003 = vshrl.u32 %v1002, 4
      %v1004 = vand.u32 %v1002, 15
      %v1005 = vsub.s32 0, %v1004
      %v1006 = vsel %vm1000, %v1005, %v1004
      %vm1007 = vcmp.lt.s32.totalorder %v815, 0
      %v1008 = vsub.s32 0, %v815
      %v1009 = vsel %vm1007, %v1008, %v815
      %v1010 = vshrl.u32 %v1009, 4
      %v1011 = vand.u32 %v1009, 15
      %v1012 = vsub.s32 0, %v1011
      %v1013 = vsel %vm1007, %v1012, %v1011
      %vm1014 = vcmp.lt.s32.totalorder %v816, 0
      %v1015 = vsub.s32 0, %v816
      %v1016 = vsel %vm1014, %v1015, %v816
      %v1017 = vshrl.u32 %v1016, 4
      %v1018 = vand.u32 %v1016, 15
      %v1019 = vsub.s32 0, %v1018
      %v1020 = vsel %vm1014, %v1019, %v1018
      %vm1021 = vcmp.lt.s32.totalorder %v817, 0
      %v1022 = vsub.s32 0, %v817
      %v1023 = vsel %vm1021, %v1022, %v817
      %v1024 = vshrl.u32 %v1023, 4
      %v1025 = vand.u32 %v1023, 15
      %v1026 = vsub.s32 0, %v1025
      %v1027 = vsel %vm1021, %v1026, %v1025
      %vm1028 = vcmp.lt.s32.totalorder %v818, 0
      %v1029 = vsub.s32 0, %v818
      %v1030 = vsel %vm1028, %v1029, %v818
      %v1031 = vshrl.u32 %v1030, 4
      %v1032 = vand.u32 %v1030, 15
      %v1033 = vsub.s32 0, %v1032
      %v1034 = vsel %vm1028, %v1033, %v1032
      %vm1035 = vcmp.lt.s32.totalorder %v819, 0
      %v1036 = vsub.s32 0, %v819
      %v1037 = vsel %vm1035, %v1036, %v819
      %v1038 = vshrl.u32 %v1037, 4
      %v1039 = vand.u32 %v1037, 15
      %v1040 = vsub.s32 0, %v1039
      %v1041 = vsel %vm1035, %v1040, %v1039
      %vm1042 = vcmp.lt.s32.totalorder %v820, 0
      %v1043 = vsub.s32 0, %v820
      %v1044 = vsel %vm1042, %v1043, %v820
      %v1045 = vshrl.u32 %v1044, 4
      %v1046 = vand.u32 %v1044, 15
      %v1047 = vsub.s32 0, %v1046
      %v1048 = vsel %vm1042, %v1047, %v1046
      %vm1049 = vcmp.lt.s32.totalorder %v821, 0
      %v1050 = vsub.s32 0, %v821
      %v1051 = vsel %vm1049, %v1050, %v821
      %v1052 = vshrl.u32 %v1051, 4
      %v1053 = vand.u32 %v1051, 15
      %v1054 = vsub.s32 0, %v1053
      %v1055 = vsel %vm1049, %v1054, %v1053
      %vm1056 = vcmp.lt.s32.totalorder %v822, 0
      %v1057 = vsub.s32 0, %v822
      %v1058 = vsel %vm1056, %v1057, %v822
      %v1059 = vshrl.u32 %v1058, 4
      %v1060 = vand.u32 %v1058, 15
      %v1061 = vsub.s32 0, %v1060
      %v1062 = vsel %vm1056, %v1061, %v1060
      %vm1063 = vcmp.lt.s32.totalorder %v823, 0
      %v1064 = vsub.s32 0, %v823
      %v1065 = vsel %vm1063, %v1064, %v823
      %v1066 = vshrl.u32 %v1065, 4
      %v1067 = vand.u32 %v1065, 15
      %v1068 = vsub.s32 0, %v1067
      %v1069 = vsel %vm1063, %v1068, %v1067
      %vm1070 = vcmp.lt.s32.totalorder %v824, 0
      %v1071 = vsub.s32 0, %v824
      %v1072 = vsel %vm1070, %v1071, %v824
      %v1073 = vshrl.u32 %v1072, 4
      %v1074 = vand.u32 %v1072, 15
      %v1075 = vsub.s32 0, %v1074
      %v1076 = vsel %vm1070, %v1075, %v1074
      %vm1077 = vcmp.ne.s32.totalorder %v831, 0
      %vm1078 = vcmp.ne.s32.totalorder %v838, 0
      %vm1079 = vcmp.ne.s32.totalorder %v845, 0
      %vm1080 = vcmp.ne.s32.totalorder %v852, 0
      %vm1081 = vcmp.ne.s32.totalorder %v859, 0
      %vm1082 = vcmp.ne.s32.totalorder %v866, 0
      %vm1083 = vcmp.ne.s32.totalorder %v873, 0
      %vm1084 = vcmp.ne.s32.totalorder %v880, 0
      %vm1085 = vcmp.ne.s32.totalorder %v887, 0
      %vm1086 = vcmp.ne.s32.totalorder %v894, 0
      %vm1087 = vcmp.ne.s32.totalorder %v901, 0
      %vm1088 = vcmp.ne.s32.totalorder %v908, 0
      %vm1089 = vcmp.ne.s32.totalorder %v915, 0
      %vm1090 = vcmp.ne.s32.totalorder %v922, 0
      %vm1091 = vcmp.ne.s32.totalorder %v929, 0
      %vm1092 = vcmp.ne.s32.totalorder %v936, 0
      %vm1093 = vcmp.ne.s32.totalorder %v943, 0
      %vm1094 = vcmp.ne.s32.totalorder %v950, 0
      %vm1095 = vcmp.ne.s32.totalorder %v957, 0
      %vm1096 = vcmp.ne.s32.totalorder %v964, 0
      %vm1097 = vcmp.ne.s32.totalorder %v971, 0
      %vm1098 = vcmp.ne.s32.totalorder %v978, 0
      %vm1099 = vcmp.ne.s32.totalorder %v985, 0
      %vm1100 = vcmp.ne.s32.totalorder %v992, 0
      %vm1101 = vcmp.ne.s32.totalorder %v999, 0
      %vm1102 = vcmp.ne.s32.totalorder %v1006, 0
      %vm1103 = vcmp.ne.s32.totalorder %v1013, 0
      %vm1104 = vcmp.ne.s32.totalorder %v1020, 0
      %vm1105 = vcmp.ne.s32.totalorder %v1027, 0
      %vm1106 = vcmp.ne.s32.totalorder %v1034, 0
      %vm1107 = vcmp.ne.s32.totalorder %v1041, 0
      %vm1108 = vcmp.ne.s32.totalorder %v1048, 0
      %vm1109 = vcmp.ne.s32.totalorder %v1055, 0
      %vm1110 = vcmp.ne.s32.totalorder %v1062, 0
      %vm1111 = vcmp.ne.s32.totalorder %v1069, 0
      %vm1112 = vcmp.ne.s32.totalorder %v1076, 0
      %vm1113 = vcmp.lt.s32.totalorder %v831, 0
      %vm1114 = vcmp.lt.s32.totalorder %v838, 0
      %vm1115 = vcmp.lt.s32.totalorder %v845, 0
      %vm1116 = vcmp.lt.s32.totalorder %v852, 0
      %vm1117 = vcmp.lt.s32.totalorder %v859, 0
      %vm1118 = vcmp.lt.s32.totalorder %v866, 0
      %vm1119 = vcmp.lt.s32.totalorder %v873, 0
      %vm1120 = vcmp.lt.s32.totalorder %v880, 0
      %vm1121 = vcmp.lt.s32.totalorder %v887, 0
      %vm1122 = vcmp.lt.s32.totalorder %v894, 0
      %vm1123 = vcmp.lt.s32.totalorder %v901, 0
      %vm1124 = vcmp.lt.s32.totalorder %v908, 0
      %vm1125 = vcmp.lt.s32.totalorder %v915, 0
      %vm1126 = vcmp.lt.s32.totalorder %v922, 0
      %vm1127 = vcmp.lt.s32.totalorder %v929, 0
      %vm1128 = vcmp.lt.s32.totalorder %v936, 0
      %vm1129 = vcmp.lt.s32.totalorder %v943, 0
      %vm1130 = vcmp.lt.s32.totalorder %v950, 0
      %vm1131 = vcmp.lt.s32.totalorder %v957, 0
      %vm1132 = vcmp.lt.s32.totalorder %v964, 0
      %vm1133 = vcmp.lt.s32.totalorder %v971, 0
      %vm1134 = vcmp.lt.s32.totalorder %v978, 0
      %vm1135 = vcmp.lt.s32.totalorder %v985, 0
      %vm1136 = vcmp.lt.s32.totalorder %v992, 0
      %vm1137 = vcmp.lt.s32.totalorder %v999, 0
      %vm1138 = vcmp.lt.s32.totalorder %v1006, 0
      %vm1139 = vcmp.lt.s32.totalorder %v1013, 0
      %vm1140 = vcmp.lt.s32.totalorder %v1020, 0
      %vm1141 = vcmp.lt.s32.totalorder %v1027, 0
      %vm1142 = vcmp.lt.s32.totalorder %v1034, 0
      %vm1143 = vcmp.lt.s32.totalorder %v1041, 0
      %vm1144 = vcmp.lt.s32.totalorder %v1048, 0
      %vm1145 = vcmp.lt.s32.totalorder %v1055, 0
      %vm1146 = vcmp.lt.s32.totalorder %v1062, 0
      %vm1147 = vcmp.lt.s32.totalorder %v1069, 0
      %vm1148 = vcmp.lt.s32.totalorder %v1076, 0
      %vm1149 = vmand %vm1113, %vm1077
      %vm1150 = vmand %vm1114, %vm1078
      %vm1151 = vmand %vm1115, %vm1079
      %vm1152 = vmand %vm1116, %vm1080
      %vm1153 = vmand %vm1117, %vm1081
      %vm1154 = vmand %vm1118, %vm1082
      %vm1155 = vmand %vm1119, %vm1083
      %vm1156 = vmand %vm1120, %vm1084
      %vm1157 = vmand %vm1121, %vm1085
      %vm1158 = vmand %vm1122, %vm1086
      %vm1159 = vmand %vm1123, %vm1087
      %vm1160 = vmand %vm1124, %vm1088
      %vm1161 = vmand %vm1125, %vm1089
      %vm1162 = vmand %vm1126, %vm1090
      %vm1163 = vmand %vm1127, %vm1091
      %vm1164 = vmand %vm1128, %vm1092
      %vm1165 = vmand %vm1129, %vm1093
      %vm1166 = vmand %vm1130, %vm1094
      %vm1167 = vmand %vm1131, %vm1095
      %vm1168 = vmand %vm1132, %vm1096
      %vm1169 = vmand %vm1133, %vm1097
      %vm1170 = vmand %vm1134, %vm1098
      %vm1171 = vmand %vm1135, %vm1099
      %vm1172 = vmand %vm1136, %vm1100
      %vm1173 = vmand %vm1137, %vm1101
      %vm1174 = vmand %vm1138, %vm1102
      %vm1175 = vmand %vm1139, %vm1103
      %vm1176 = vmand %vm1140, %vm1104
      %vm1177 = vmand %vm1141, %vm1105
      %vm1178 = vmand %vm1142, %vm1106
      %vm1179 = vmand %vm1143, %vm1107
      %vm1180 = vmand %vm1144, %vm1108
      %vm1181 = vmand %vm1145, %vm1109
      %vm1182 = vmand %vm1146, %vm1110
      %vm1183 = vmand %vm1147, %vm1111
      %vm1184 = vmand %vm1148, %vm1112
      %v1185 = vadd.s32 %v831, 16
      %v1186 = vadd.s32 %v838, 16
      %v1187 = vadd.s32 %v845, 16
      %v1188 = vadd.s32 %v852, 16
      %v1189 = vadd.s32 %v859, 16
      %v1190 = vadd.s32 %v866, 16
      %v1191 = vadd.s32 %v873, 16
      %v1192 = vadd.s32 %v880, 16
      %v1193 = vadd.s32 %v887, 16
      %v1194 = vadd.s32 %v894, 16
      %v1195 = vadd.s32 %v901, 16
      %v1196 = vadd.s32 %v908, 16
      %v1197 = vadd.s32 %v915, 16
      %v1198 = vadd.s32 %v922, 16
      %v1199 = vadd.s32 %v929, 16
      %v1200 = vadd.s32 %v936, 16
      %v1201 = vadd.s32 %v943, 16
      %v1202 = vadd.s32 %v950, 16
      %v1203 = vadd.s32 %v957, 16
      %v1204 = vadd.s32 %v964, 16
      %v1205 = vadd.s32 %v971, 16
      %v1206 = vadd.s32 %v978, 16
      %v1207 = vadd.s32 %v985, 16
      %v1208 = vadd.s32 %v992, 16
      %v1209 = vadd.s32 %v999, 16
      %v1210 = vadd.s32 %v1006, 16
      %v1211 = vadd.s32 %v1013, 16
      %v1212 = vadd.s32 %v1020, 16
      %v1213 = vadd.s32 %v1027, 16
      %v1214 = vadd.s32 %v1034, 16
      %v1215 = vadd.s32 %v1041, 16
      %v1216 = vadd.s32 %v1048, 16
      %v1217 = vadd.s32 %v1055, 16
      %v1218 = vadd.s32 %v1062, 16
      %v1219 = vadd.s32 %v1069, 16
      %v1220 = vadd.s32 %v1076, 16
      %v1221 = vsel %vm1149, %v1185, %v831
      %v1222 = vsel %vm1150, %v1186, %v838
      %v1223 = vsel %vm1151, %v1187, %v845
      %v1224 = vsel %vm1152, %v1188, %v852
      %v1225 = vsel %vm1153, %v1189, %v859
      %v1226 = vsel %vm1154, %v1190, %v866
      %v1227 = vsel %vm1155, %v1191, %v873
      %v1228 = vsel %vm1156, %v1192, %v880
      %v1229 = vsel %vm1157, %v1193, %v887
      %v1230 = vsel %vm1158, %v1194, %v894
      %v1231 = vsel %vm1159, %v1195, %v901
      %v1232 = vsel %vm1160, %v1196, %v908
      %v1233 = vsel %vm1161, %v1197, %v915
      %v1234 = vsel %vm1162, %v1198, %v922
      %v1235 = vsel %vm1163, %v1199, %v929
      %v1236 = vsel %vm1164, %v1200, %v936
      %v1237 = vsel %vm1165, %v1201, %v943
      %v1238 = vsel %vm1166, %v1202, %v950
      %v1239 = vsel %vm1167, %v1203, %v957
      %v1240 = vsel %vm1168, %v1204, %v964
      %v1241 = vsel %vm1169, %v1205, %v971
      %v1242 = vsel %vm1170, %v1206, %v978
      %v1243 = vsel %vm1171, %v1207, %v985
      %v1244 = vsel %vm1172, %v1208, %v992
      %v1245 = vsel %vm1173, %v1209, %v999
      %v1246 = vsel %vm1174, %v1210, %v1006
      %v1247 = vsel %vm1175, %v1211, %v1013
      %v1248 = vsel %vm1176, %v1212, %v1020
      %v1249 = vsel %vm1177, %v1213, %v1027
      %v1250 = vsel %vm1178, %v1214, %v1034
      %v1251 = vsel %vm1179, %v1215, %v1041
      %v1252 = vsel %vm1180, %v1216, %v1048
      %v1253 = vsel %vm1181, %v1217, %v1055
      %v1254 = vsel %vm1182, %v1218, %v1062
      %v1255 = vsel %vm1183, %v1219, %v1069
      %v1256 = vsel %vm1184, %v1220, %v1076
      %vm1257 = vcmp.gt.s32.totalorder %v1221, 0
      %vm1258 = vcmp.gt.s32.totalorder %v1222, 0
      %vm1259 = vcmp.gt.s32.totalorder %v1223, 0
      %vm1260 = vcmp.gt.s32.totalorder %v1224, 0
      %vm1261 = vcmp.gt.s32.totalorder %v1225, 0
      %vm1262 = vcmp.gt.s32.totalorder %v1226, 0
      %vm1263 = vcmp.gt.s32.totalorder %v1227, 0
      %vm1264 = vcmp.gt.s32.totalorder %v1228, 0
      %vm1265 = vcmp.gt.s32.totalorder %v1229, 0
      %vm1266 = vcmp.gt.s32.totalorder %v1230, 0
      %vm1267 = vcmp.gt.s32.totalorder %v1231, 0
      %vm1268 = vcmp.gt.s32.totalorder %v1232, 0
      %vm1269 = vcmp.gt.s32.totalorder %v1233, 0
      %vm1270 = vcmp.gt.s32.totalorder %v1234, 0
      %vm1271 = vcmp.gt.s32.totalorder %v1235, 0
      %vm1272 = vcmp.gt.s32.totalorder %v1236, 0
      %vm1273 = vcmp.gt.s32.totalorder %v1237, 0
      %vm1274 = vcmp.gt.s32.totalorder %v1238, 0
      %vm1275 = vcmp.gt.s32.totalorder %v1239, 0
      %vm1276 = vcmp.gt.s32.totalorder %v1240, 0
      %vm1277 = vcmp.gt.s32.totalorder %v1241, 0
      %vm1278 = vcmp.gt.s32.totalorder %v1242, 0
      %vm1279 = vcmp.gt.s32.totalorder %v1243, 0
      %vm1280 = vcmp.gt.s32.totalorder %v1244, 0
      %vm1281 = vcmp.gt.s32.totalorder %v1245, 0
      %vm1282 = vcmp.gt.s32.totalorder %v1246, 0
      %vm1283 = vcmp.gt.s32.totalorder %v1247, 0
      %vm1284 = vcmp.gt.s32.totalorder %v1248, 0
      %vm1285 = vcmp.gt.s32.totalorder %v1249, 0
      %vm1286 = vcmp.gt.s32.totalorder %v1250, 0
      %vm1287 = vcmp.gt.s32.totalorder %v1251, 0
      %vm1288 = vcmp.gt.s32.totalorder %v1252, 0
      %vm1289 = vcmp.gt.s32.totalorder %v1253, 0
      %vm1290 = vcmp.gt.s32.totalorder %v1254, 0
      %vm1291 = vcmp.gt.s32.totalorder %v1255, 0
      %vm1292 = vcmp.gt.s32.totalorder %v1256, 0
      %v1293 = vrot.slane %v780, 7
      %v1294 = vrot.slane %v781, 7
      %v1295 = vrot.slane %v706, 7
      %v1296 = vrot.slane %v707, 7
      %v1297 = vrot.slane %v708, 7
      %v1298 = vrot.slane %v709, 7
      %v1299 = vrot.slane %v710, 7
      %v1300 = vrot.slane %v711, 7
      %v1301 = vrot.slane %v712, 7
      %v1302 = vrot.slane %v713, 7
      %v1303 = vrot.slane %v714, 7
      %v1304 = vrot.slane %v715, 7
      %v1305 = vrot.slane %v716, 7
      %v1306 = vrot.slane %v717, 7
      %v1307 = vrot.slane %v718, 7
      %v1308 = vrot.slane %v719, 7
      %v1309 = vrot.slane %v720, 7
      %v1310 = vrot.slane %v721, 7
      %v1311 = vrot.slane %v722, 7
      %v1312 = vrot.slane %v723, 7
      %v1313 = vrot.slane %v724, 7
      %v1314 = vrot.slane %v725, 7
      %v1315 = vrot.slane %v726, 7
      %v1316 = vrot.slane %v727, 7
      %v1317 = vrot.slane %v728, 7
      %v1318 = vrot.slane %v729, 7
      %v1319 = vrot.slane %v730, 7
      %v1320 = vrot.slane %v731, 7
      %v1321 = vrot.slane %v732, 7
      %v1322 = vrot.slane %v733, 7
      %v1323 = vrot.slane %v734, 7
      %v1324 = vrot.slane %v735, 7
      %v1325 = vrot.slane %v736, 7
      %v1326 = vrot.slane %v737, 7
      %v1327 = vrot.slane %v786, 7
      %v1328 = vrot.slane %v787, 7
      %vm1329 = vcmp.lt.s32.totalorder %v789, 1
      %v1330 = vsel %vm1329, %v1327, %v1328
      %v1331 = vsel %vm1329, %v1326, %v1327
      %v1332 = vsel %vm1329, %v1325, %v1326
      %v1333 = vsel %vm1329, %v1324, %v1325
      %v1334 = vsel %vm1329, %v1323, %v1324
      %v1335 = vsel %vm1329, %v1322, %v1323
      %v1336 = vsel %vm1329, %v1321, %v1322
      %v1337 = vsel %vm1329, %v1320, %v1321
      %v1338 = vsel %vm1329, %v1319, %v1320
      %v1339 = vsel %vm1329, %v1318, %v1319
      %v1340 = vsel %vm1329, %v1317, %v1318
      %v1341 = vsel %vm1329, %v1316, %v1317
      %v1342 = vsel %vm1329, %v1315, %v1316
      %v1343 = vsel %vm1329, %v1314, %v1315
      %v1344 = vsel %vm1329, %v1313, %v1314
      %v1345 = vsel %vm1329, %v1312, %v1313
      %v1346 = vsel %vm1329, %v1311, %v1312
      %v1347 = vsel %vm1329, %v1310, %v1311
      %v1348 = vsel %vm1329, %v1309, %v1310
      %v1349 = vsel %vm1329, %v1308, %v1309
      %v1350 = vsel %vm1329, %v1307, %v1308
      %v1351 = vsel %vm1329, %v1306, %v1307
      %v1352 = vsel %vm1329, %v1305, %v1306
      %v1353 = vsel %vm1329, %v1304, %v1305
      %v1354 = vsel %vm1329, %v1303, %v1304
      %v1355 = vsel %vm1329, %v1302, %v1303
      %v1356 = vsel %vm1329, %v1301, %v1302
      %v1357 = vsel %vm1329, %v1300, %v1301
      %v1358 = vsel %vm1329, %v1299, %v1300
      %v1359 = vsel %vm1329, %v1298, %v1299
      %v1360 = vsel %vm1329, %v1297, %v1298
      %v1361 = vsel %vm1329, %v1296, %v1297
      %v1362 = vsel %vm1329, %v1295, %v1296
      %v1363 = vsel %vm1329, %v1294, %v1295
      %v1364 = vsel %vm1329, %v1293, %v1294
      %v1365 = vsel %vm1329, %v1328, %v1293
      %v1366 = vsel %vm1257, 1, 0
      %v1367 = vsel %vm1258, 1, 0
      %v1368 = vsel %vm1259, 1, 0
      %v1369 = vsel %vm1260, 1, 0
      %v1370 = vsel %vm1261, 1, 0
      %v1371 = vsel %vm1262, 1, 0
      %v1372 = vsel %vm1263, 1, 0
      %v1373 = vsel %vm1264, 1, 0
      %v1374 = vsel %vm1265, 1, 0
      %v1375 = vsel %vm1266, 1, 0
      %v1376 = vsel %vm1267, 1, 0
      %v1377 = vsel %vm1268, 1, 0
      %v1378 = vsel %vm1269, 1, 0
      %v1379 = vsel %vm1270, 1, 0
      %v1380 = vsel %vm1271, 1, 0
      %v1381 = vsel %vm1272, 1, 0
      %v1382 = vsel %vm1273, 1, 0
      %v1383 = vsel %vm1274, 1, 0
      %v1384 = vsel %vm1275, 1, 0
      %v1385 = vsel %vm1276, 1, 0
      %v1386 = vsel %vm1277, 1, 0
      %v1387 = vsel %vm1278, 1, 0
      %v1388 = vsel %vm1279, 1, 0
      %v1389 = vsel %vm1280, 1, 0
      %v1390 = vsel %vm1281, 1, 0
      %v1391 = vsel %vm1282, 1, 0
      %v1392 = vsel %vm1283, 1, 0
      %v1393 = vsel %vm1284, 1, 0
      %v1394 = vsel %vm1285, 1, 0
      %v1395 = vsel %vm1286, 1, 0
      %v1396 = vsel %vm1287, 1, 0
      %v1397 = vsel %vm1288, 1, 0
      %v1398 = vsel %vm1289, 1, 0
      %v1399 = vsel %vm1290, 1, 0
      %v1400 = vsel %vm1291, 1, 0
      %v1401 = vsel %vm1292, 1, 0
      %vm1402 = vcmp.eq.s32.totalorder %v1366, 1
      %vm1403 = vcmp.eq.s32.totalorder %v1367, 1
      %vm1404 = vcmp.eq.s32.totalorder %v1368, 1
      %vm1405 = vcmp.eq.s32.totalorder %v1369, 1
      %vm1406 = vcmp.eq.s32.totalorder %v1370, 1
      %vm1407 = vcmp.eq.s32.totalorder %v1371, 1
      %vm1408 = vcmp.eq.s32.totalorder %v1372, 1
      %vm1409 = vcmp.eq.s32.totalorder %v1373, 1
      %vm1410 = vcmp.eq.s32.totalorder %v1374, 1
      %vm1411 = vcmp.eq.s32.totalorder %v1375, 1
      %vm1412 = vcmp.eq.s32.totalorder %v1376, 1
      %vm1413 = vcmp.eq.s32.totalorder %v1377, 1
      %vm1414 = vcmp.eq.s32.totalorder %v1378, 1
      %vm1415 = vcmp.eq.s32.totalorder %v1379, 1
      %vm1416 = vcmp.eq.s32.totalorder %v1380, 1
      %vm1417 = vcmp.eq.s32.totalorder %v1381, 1
      %vm1418 = vcmp.eq.s32.totalorder %v1382, 1
      %vm1419 = vcmp.eq.s32.totalorder %v1383, 1
      %vm1420 = vcmp.eq.s32.totalorder %v1384, 1
      %vm1421 = vcmp.eq.s32.totalorder %v1385, 1
      %vm1422 = vcmp.eq.s32.totalorder %v1386, 1
      %vm1423 = vcmp.eq.s32.totalorder %v1387, 1
      %vm1424 = vcmp.eq.s32.totalorder %v1388, 1
      %vm1425 = vcmp.eq.s32.totalorder %v1389, 1
      %vm1426 = vcmp.eq.s32.totalorder %v1390, 1
      %vm1427 = vcmp.eq.s32.totalorder %v1391, 1
      %vm1428 = vcmp.eq.s32.totalorder %v1392, 1
      %vm1429 = vcmp.eq.s32.totalorder %v1393, 1
      %vm1430 = vcmp.eq.s32.totalorder %v1394, 1
      %vm1431 = vcmp.eq.s32.totalorder %v1395, 1
      %vm1432 = vcmp.eq.s32.totalorder %v1396, 1
      %vm1433 = vcmp.eq.s32.totalorder %v1397, 1
      %vm1434 = vcmp.eq.s32.totalorder %v1398, 1
      %vm1435 = vcmp.eq.s32.totalorder %v1399, 1
      %vm1436 = vcmp.eq.s32.totalorder %v1400, 1
      %vm1437 = vcmp.eq.s32.totalorder %v1401, 1
      %v1438 = vsel %vm1402, %v1365, 0.0
      %v1439 = vsel %vm1403, %v1364, 0.0
      %v1440 = vsel %vm1404, %v1363, 0.0
      %v1441 = vsel %vm1405, %v1362, 0.0
      %v1442 = vsel %vm1406, %v1361, 0.0
      %v1443 = vsel %vm1407, %v1360, 0.0
      %v1444 = vsel %vm1408, %v1359, 0.0
      %v1445 = vsel %vm1409, %v1358, 0.0
      %v1446 = vsel %vm1410, %v1357, 0.0
      %v1447 = vsel %vm1411, %v1356, 0.0
      %v1448 = vsel %vm1412, %v1355, 0.0
      %v1449 = vsel %vm1413, %v1354, 0.0
      %v1450 = vsel %vm1414, %v1353, 0.0
      %v1451 = vsel %vm1415, %v1352, 0.0
      %v1452 = vsel %vm1416, %v1351, 0.0
      %v1453 = vsel %vm1417, %v1350, 0.0
      %v1454 = vsel %vm1418, %v1349, 0.0
      %v1455 = vsel %vm1419, %v1348, 0.0
      %v1456 = vsel %vm1420, %v1347, 0.0
      %v1457 = vsel %vm1421, %v1346, 0.0
      %v1458 = vsel %vm1422, %v1345, 0.0
      %v1459 = vsel %vm1423, %v1344, 0.0
      %v1460 = vsel %vm1424, %v1343, 0.0
      %v1461 = vsel %vm1425, %v1342, 0.0
      %v1462 = vsel %vm1426, %v1341, 0.0
      %v1463 = vsel %vm1427, %v1340, 0.0
      %v1464 = vsel %vm1428, %v1339, 0.0
      %v1465 = vsel %vm1429, %v1338, 0.0
      %v1466 = vsel %vm1430, %v1337, 0.0
      %v1467 = vsel %vm1431, %v1336, 0.0
      %v1468 = vsel %vm1432, %v1335, 0.0
      %v1469 = vsel %vm1433, %v1334, 0.0
      %v1470 = vsel %vm1434, %v1333, 0.0
      %v1471 = vsel %vm1435, %v1332, 0.0
      %v1472 = vsel %vm1436, %v1331, 0.0
      %v1473 = vsel %vm1437, %v1330, 0.0
      %vm1474 = vcmp.lt.s32.totalorder %v1221, 15
      %vm1475 = vcmp.lt.s32.totalorder %v1222, 15
      %vm1476 = vcmp.lt.s32.totalorder %v1223, 15
      %vm1477 = vcmp.lt.s32.totalorder %v1224, 15
      %vm1478 = vcmp.lt.s32.totalorder %v1225, 15
      %vm1479 = vcmp.lt.s32.totalorder %v1226, 15
      %vm1480 = vcmp.lt.s32.totalorder %v1227, 15
      %vm1481 = vcmp.lt.s32.totalorder %v1228, 15
      %vm1482 = vcmp.lt.s32.totalorder %v1229, 15
      %vm1483 = vcmp.lt.s32.totalorder %v1230, 15
      %vm1484 = vcmp.lt.s32.totalorder %v1231, 15
      %vm1485 = vcmp.lt.s32.totalorder %v1232, 15
      %vm1486 = vcmp.lt.s32.totalorder %v1233, 15
      %vm1487 = vcmp.lt.s32.totalorder %v1234, 15
      %vm1488 = vcmp.lt.s32.totalorder %v1235, 15
      %vm1489 = vcmp.lt.s32.totalorder %v1236, 15
      %vm1490 = vcmp.lt.s32.totalorder %v1237, 15
      %vm1491 = vcmp.lt.s32.totalorder %v1238, 15
      %vm1492 = vcmp.lt.s32.totalorder %v1239, 15
      %vm1493 = vcmp.lt.s32.totalorder %v1240, 15
      %vm1494 = vcmp.lt.s32.totalorder %v1241, 15
      %vm1495 = vcmp.lt.s32.totalorder %v1242, 15
      %vm1496 = vcmp.lt.s32.totalorder %v1243, 15
      %vm1497 = vcmp.lt.s32.totalorder %v1244, 15
      %vm1498 = vcmp.lt.s32.totalorder %v1245, 15
      %vm1499 = vcmp.lt.s32.totalorder %v1246, 15
      %vm1500 = vcmp.lt.s32.totalorder %v1247, 15
      %vm1501 = vcmp.lt.s32.totalorder %v1248, 15
      %vm1502 = vcmp.lt.s32.totalorder %v1249, 15
      %vm1503 = vcmp.lt.s32.totalorder %v1250, 15
      %vm1504 = vcmp.lt.s32.totalorder %v1251, 15
      %vm1505 = vcmp.lt.s32.totalorder %v1252, 15
      %vm1506 = vcmp.lt.s32.totalorder %v1253, 15
      %vm1507 = vcmp.lt.s32.totalorder %v1254, 15
      %vm1508 = vcmp.lt.s32.totalorder %v1255, 15
      %vm1509 = vcmp.lt.s32.totalorder %v1256, 15
      %v1510 = vrot.slane %v780, 1
      %v1511 = vrot.slane %v781, 1
      %v1512 = vrot.slane %v706, 1
      %v1513 = vrot.slane %v707, 1
      %v1514 = vrot.slane %v708, 1
      %v1515 = vrot.slane %v709, 1
      %v1516 = vrot.slane %v710, 1
      %v1517 = vrot.slane %v711, 1
      %v1518 = vrot.slane %v712, 1
      %v1519 = vrot.slane %v713, 1
      %v1520 = vrot.slane %v714, 1
      %v1521 = vrot.slane %v715, 1
      %v1522 = vrot.slane %v716, 1
      %v1523 = vrot.slane %v717, 1
      %v1524 = vrot.slane %v718, 1
      %v1525 = vrot.slane %v719, 1
      %v1526 = vrot.slane %v720, 1
      %v1527 = vrot.slane %v721, 1
      %v1528 = vrot.slane %v722, 1
      %v1529 = vrot.slane %v723, 1
      %v1530 = vrot.slane %v724, 1
      %v1531 = vrot.slane %v725, 1
      %v1532 = vrot.slane %v726, 1
      %v1533 = vrot.slane %v727, 1
      %v1534 = vrot.slane %v728, 1
      %v1535 = vrot.slane %v729, 1
      %v1536 = vrot.slane %v730, 1
      %v1537 = vrot.slane %v731, 1
      %v1538 = vrot.slane %v732, 1
      %v1539 = vrot.slane %v733, 1
      %v1540 = vrot.slane %v734, 1
      %v1541 = vrot.slane %v735, 1
      %v1542 = vrot.slane %v736, 1
      %v1543 = vrot.slane %v737, 1
      %v1544 = vrot.slane %v786, 1
      %v1545 = vrot.slane %v787, 1
      %vm1546 = vcmp.lt.s32.totalorder %v789, 7
      %v1547 = vsel %vm1546, %v1544, %v1545
      %v1548 = vsel %vm1546, %v1543, %v1544
      %v1549 = vsel %vm1546, %v1542, %v1543
      %v1550 = vsel %vm1546, %v1541, %v1542
      %v1551 = vsel %vm1546, %v1540, %v1541
      %v1552 = vsel %vm1546, %v1539, %v1540
      %v1553 = vsel %vm1546, %v1538, %v1539
      %v1554 = vsel %vm1546, %v1537, %v1538
      %v1555 = vsel %vm1546, %v1536, %v1537
      %v1556 = vsel %vm1546, %v1535, %v1536
      %v1557 = vsel %vm1546, %v1534, %v1535
      %v1558 = vsel %vm1546, %v1533, %v1534
      %v1559 = vsel %vm1546, %v1532, %v1533
      %v1560 = vsel %vm1546, %v1531, %v1532
      %v1561 = vsel %vm1546, %v1530, %v1531
      %v1562 = vsel %vm1546, %v1529, %v1530
      %v1563 = vsel %vm1546, %v1528, %v1529
      %v1564 = vsel %vm1546, %v1527, %v1528
      %v1565 = vsel %vm1546, %v1526, %v1527
      %v1566 = vsel %vm1546, %v1525, %v1526
      %v1567 = vsel %vm1546, %v1524, %v1525
      %v1568 = vsel %vm1546, %v1523, %v1524
      %v1569 = vsel %vm1546, %v1522, %v1523
      %v1570 = vsel %vm1546, %v1521, %v1522
      %v1571 = vsel %vm1546, %v1520, %v1521
      %v1572 = vsel %vm1546, %v1519, %v1520
      %v1573 = vsel %vm1546, %v1518, %v1519
      %v1574 = vsel %vm1546, %v1517, %v1518
      %v1575 = vsel %vm1546, %v1516, %v1517
      %v1576 = vsel %vm1546, %v1515, %v1516
      %v1577 = vsel %vm1546, %v1514, %v1515
      %v1578 = vsel %vm1546, %v1513, %v1514
      %v1579 = vsel %vm1546, %v1512, %v1513
      %v1580 = vsel %vm1546, %v1511, %v1512
      %v1581 = vsel %vm1546, %v1510, %v1511
      %v1582 = vsel %vm1546, %v1545, %v1510
      %v1583 = vsel %vm1474, 1, 0
      %v1584 = vsel %vm1475, 1, 0
      %v1585 = vsel %vm1476, 1, 0
      %v1586 = vsel %vm1477, 1, 0
      %v1587 = vsel %vm1478, 1, 0
      %v1588 = vsel %vm1479, 1, 0
      %v1589 = vsel %vm1480, 1, 0
      %v1590 = vsel %vm1481, 1, 0
      %v1591 = vsel %vm1482, 1, 0
      %v1592 = vsel %vm1483, 1, 0
      %v1593 = vsel %vm1484, 1, 0
      %v1594 = vsel %vm1485, 1, 0
      %v1595 = vsel %vm1486, 1, 0
      %v1596 = vsel %vm1487, 1, 0
      %v1597 = vsel %vm1488, 1, 0
      %v1598 = vsel %vm1489, 1, 0
      %v1599 = vsel %vm1490, 1, 0
      %v1600 = vsel %vm1491, 1, 0
      %v1601 = vsel %vm1492, 1, 0
      %v1602 = vsel %vm1493, 1, 0
      %v1603 = vsel %vm1494, 1, 0
      %v1604 = vsel %vm1495, 1, 0
      %v1605 = vsel %vm1496, 1, 0
      %v1606 = vsel %vm1497, 1, 0
      %v1607 = vsel %vm1498, 1, 0
      %v1608 = vsel %vm1499, 1, 0
      %v1609 = vsel %vm1500, 1, 0
      %v1610 = vsel %vm1501, 1, 0
      %v1611 = vsel %vm1502, 1, 0
      %v1612 = vsel %vm1503, 1, 0
      %v1613 = vsel %vm1504, 1, 0
      %v1614 = vsel %vm1505, 1, 0
      %v1615 = vsel %vm1506, 1, 0
      %v1616 = vsel %vm1507, 1, 0
      %v1617 = vsel %vm1508, 1, 0
      %v1618 = vsel %vm1509, 1, 0
      %vm1619 = vcmp.eq.s32.totalorder %v1583, 1
      %vm1620 = vcmp.eq.s32.totalorder %v1584, 1
      %vm1621 = vcmp.eq.s32.totalorder %v1585, 1
      %vm1622 = vcmp.eq.s32.totalorder %v1586, 1
      %vm1623 = vcmp.eq.s32.totalorder %v1587, 1
      %vm1624 = vcmp.eq.s32.totalorder %v1588, 1
      %vm1625 = vcmp.eq.s32.totalorder %v1589, 1
      %vm1626 = vcmp.eq.s32.totalorder %v1590, 1
      %vm1627 = vcmp.eq.s32.totalorder %v1591, 1
      %vm1628 = vcmp.eq.s32.totalorder %v1592, 1
      %vm1629 = vcmp.eq.s32.totalorder %v1593, 1
      %vm1630 = vcmp.eq.s32.totalorder %v1594, 1
      %vm1631 = vcmp.eq.s32.totalorder %v1595, 1
      %vm1632 = vcmp.eq.s32.totalorder %v1596, 1
      %vm1633 = vcmp.eq.s32.totalorder %v1597, 1
      %vm1634 = vcmp.eq.s32.totalorder %v1598, 1
      %vm1635 = vcmp.eq.s32.totalorder %v1599, 1
      %vm1636 = vcmp.eq.s32.totalorder %v1600, 1
      %vm1637 = vcmp.eq.s32.totalorder %v1601, 1
      %vm1638 = vcmp.eq.s32.totalorder %v1602, 1
      %vm1639 = vcmp.eq.s32.totalorder %v1603, 1
      %vm1640 = vcmp.eq.s32.totalorder %v1604, 1
      %vm1641 = vcmp.eq.s32.totalorder %v1605, 1
      %vm1642 = vcmp.eq.s32.totalorder %v1606, 1
      %vm1643 = vcmp.eq.s32.totalorder %v1607, 1
      %vm1644 = vcmp.eq.s32.totalorder %v1608, 1
      %vm1645 = vcmp.eq.s32.totalorder %v1609, 1
      %vm1646 = vcmp.eq.s32.totalorder %v1610, 1
      %vm1647 = vcmp.eq.s32.totalorder %v1611, 1
      %vm1648 = vcmp.eq.s32.totalorder %v1612, 1
      %vm1649 = vcmp.eq.s32.totalorder %v1613, 1
      %vm1650 = vcmp.eq.s32.totalorder %v1614, 1
      %vm1651 = vcmp.eq.s32.totalorder %v1615, 1
      %vm1652 = vcmp.eq.s32.totalorder %v1616, 1
      %vm1653 = vcmp.eq.s32.totalorder %v1617, 1
      %vm1654 = vcmp.eq.s32.totalorder %v1618, 1
      %v1655 = vsel %vm1619, %v1581, 0.0
      %v1656 = vsel %vm1620, %v1580, 0.0
      %v1657 = vsel %vm1621, %v1579, 0.0
      %v1658 = vsel %vm1622, %v1578, 0.0
      %v1659 = vsel %vm1623, %v1577, 0.0
      %v1660 = vsel %vm1624, %v1576, 0.0
      %v1661 = vsel %vm1625, %v1575, 0.0
      %v1662 = vsel %vm1626, %v1574, 0.0
      %v1663 = vsel %vm1627, %v1573, 0.0
      %v1664 = vsel %vm1628, %v1572, 0.0
      %v1665 = vsel %vm1629, %v1571, 0.0
      %v1666 = vsel %vm1630, %v1570, 0.0
      %v1667 = vsel %vm1631, %v1569, 0.0
      %v1668 = vsel %vm1632, %v1568, 0.0
      %v1669 = vsel %vm1633, %v1567, 0.0
      %v1670 = vsel %vm1634, %v1566, 0.0
      %v1671 = vsel %vm1635, %v1565, 0.0
      %v1672 = vsel %vm1636, %v1564, 0.0
      %v1673 = vsel %vm1637, %v1563, 0.0
      %v1674 = vsel %vm1638, %v1562, 0.0
      %v1675 = vsel %vm1639, %v1561, 0.0
      %v1676 = vsel %vm1640, %v1560, 0.0
      %v1677 = vsel %vm1641, %v1559, 0.0
      %v1678 = vsel %vm1642, %v1558, 0.0
      %v1679 = vsel %vm1643, %v1557, 0.0
      %v1680 = vsel %vm1644, %v1556, 0.0
      %v1681 = vsel %vm1645, %v1555, 0.0
      %v1682 = vsel %vm1646, %v1554, 0.0
      %v1683 = vsel %vm1647, %v1553, 0.0
      %v1684 = vsel %vm1648, %v1552, 0.0
      %v1685 = vsel %vm1649, %v1551, 0.0
      %v1686 = vsel %vm1650, %v1550, 0.0
      %v1687 = vsel %vm1651, %v1549, 0.0
      %v1688 = vsel %vm1652, %v1548, 0.0
      %v1689 = vsel %vm1653, %v1547, 0.0
      %v1690 = vsel %vm1654, %v1582, 0.0
      %v1691 = vpack.c.bf16 %v1438, %v1438
      %v1692 = vpack.c.bf16 %v1439, %v1439
      %v1693 = vpack.c.bf16 %v1440, %v1440
      %v1694 = vpack.c.bf16 %v1441, %v1441
      %v1695 = vpack.c.bf16 %v1442, %v1442
      %v1696 = vpack.c.bf16 %v1443, %v1443
      %v1697 = vpack.c.bf16 %v1444, %v1444
      %v1698 = vpack.c.bf16 %v1445, %v1445
      %v1699 = vpack.c.bf16 %v1446, %v1446
      %v1700 = vpack.c.bf16 %v1447, %v1447
      %v1701 = vpack.c.bf16 %v1448, %v1448
      %v1702 = vpack.c.bf16 %v1449, %v1449
      %v1703 = vpack.c.bf16 %v1450, %v1450
      %v1704 = vpack.c.bf16 %v1451, %v1451
      %v1705 = vpack.c.bf16 %v1452, %v1452
      %v1706 = vpack.c.bf16 %v1453, %v1453
      %v1707 = vpack.c.bf16 %v1454, %v1454
      %v1708 = vpack.c.bf16 %v1455, %v1455
      %v1709 = vpack.c.bf16 %v1456, %v1456
      %v1710 = vpack.c.bf16 %v1457, %v1457
      %v1711 = vpack.c.bf16 %v1458, %v1458
      %v1712 = vpack.c.bf16 %v1459, %v1459
      %v1713 = vpack.c.bf16 %v1460, %v1460
      %v1714 = vpack.c.bf16 %v1461, %v1461
      %v1715 = vpack.c.bf16 %v1462, %v1462
      %v1716 = vpack.c.bf16 %v1463, %v1463
      %v1717 = vpack.c.bf16 %v1464, %v1464
      %v1718 = vpack.c.bf16 %v1465, %v1465
      %v1719 = vpack.c.bf16 %v1466, %v1466
      %v1720 = vpack.c.bf16 %v1467, %v1467
      %v1721 = vpack.c.bf16 %v1468, %v1468
      %v1722 = vpack.c.bf16 %v1469, %v1469
      %v1723 = vpack.c.bf16 %v1470, %v1470
      %v1724 = vpack.c.bf16 %v1471, %v1471
      %v1725 = vpack.c.bf16 %v1472, %v1472
      %v1726 = vpack.c.bf16 %v1473, %v1473
      %v1727 = vpack.c.bf16 %v780, %v780
      %v1728 = vpack.c.bf16 %v781, %v781
      %v1729 = vpack.c.bf16 %v706, %v706
      %v1730 = vpack.c.bf16 %v707, %v707
      %v1731 = vpack.c.bf16 %v708, %v708
      %v1732 = vpack.c.bf16 %v709, %v709
      %v1733 = vpack.c.bf16 %v710, %v710
      %v1734 = vpack.c.bf16 %v711, %v711
      %v1735 = vpack.c.bf16 %v712, %v712
      %v1736 = vpack.c.bf16 %v713, %v713
      %v1737 = vpack.c.bf16 %v714, %v714
      %v1738 = vpack.c.bf16 %v715, %v715
      %v1739 = vpack.c.bf16 %v716, %v716
      %v1740 = vpack.c.bf16 %v717, %v717
      %v1741 = vpack.c.bf16 %v718, %v718
      %v1742 = vpack.c.bf16 %v719, %v719
      %v1743 = vpack.c.bf16 %v720, %v720
      %v1744 = vpack.c.bf16 %v721, %v721
      %v1745 = vpack.c.bf16 %v722, %v722
      %v1746 = vpack.c.bf16 %v723, %v723
      %v1747 = vpack.c.bf16 %v724, %v724
      %v1748 = vpack.c.bf16 %v725, %v725
      %v1749 = vpack.c.bf16 %v726, %v726
      %v1750 = vpack.c.bf16 %v727, %v727
      %v1751 = vpack.c.bf16 %v728, %v728
      %v1752 = vpack.c.bf16 %v729, %v729
      %v1753 = vpack.c.bf16 %v730, %v730
      %v1754 = vpack.c.bf16 %v731, %v731
      %v1755 = vpack.c.bf16 %v732, %v732
      %v1756 = vpack.c.bf16 %v733, %v733
      %v1757 = vpack.c.bf16 %v734, %v734
      %v1758 = vpack.c.bf16 %v735, %v735
      %v1759 = vpack.c.bf16 %v736, %v736
      %v1760 = vpack.c.bf16 %v737, %v737
      %v1761 = vpack.c.bf16 %v786, %v786
      %v1762 = vpack.c.bf16 %v787, %v787
      %v1763 = vpack.c.bf16 %v1655, %v1655
      %v1764 = vpack.c.bf16 %v1656, %v1656
      %v1765 = vpack.c.bf16 %v1657, %v1657
      %v1766 = vpack.c.bf16 %v1658, %v1658
      %v1767 = vpack.c.bf16 %v1659, %v1659
      %v1768 = vpack.c.bf16 %v1660, %v1660
      %v1769 = vpack.c.bf16 %v1661, %v1661
      %v1770 = vpack.c.bf16 %v1662, %v1662
      %v1771 = vpack.c.bf16 %v1663, %v1663
      %v1772 = vpack.c.bf16 %v1664, %v1664
      %v1773 = vpack.c.bf16 %v1665, %v1665
      %v1774 = vpack.c.bf16 %v1666, %v1666
      %v1775 = vpack.c.bf16 %v1667, %v1667
      %v1776 = vpack.c.bf16 %v1668, %v1668
      %v1777 = vpack.c.bf16 %v1669, %v1669
      %v1778 = vpack.c.bf16 %v1670, %v1670
      %v1779 = vpack.c.bf16 %v1671, %v1671
      %v1780 = vpack.c.bf16 %v1672, %v1672
      %v1781 = vpack.c.bf16 %v1673, %v1673
      %v1782 = vpack.c.bf16 %v1674, %v1674
      %v1783 = vpack.c.bf16 %v1675, %v1675
      %v1784 = vpack.c.bf16 %v1676, %v1676
      %v1785 = vpack.c.bf16 %v1677, %v1677
      %v1786 = vpack.c.bf16 %v1678, %v1678
      %v1787 = vpack.c.bf16 %v1679, %v1679
      %v1788 = vpack.c.bf16 %v1680, %v1680
      %v1789 = vpack.c.bf16 %v1681, %v1681
      %v1790 = vpack.c.bf16 %v1682, %v1682
      %v1791 = vpack.c.bf16 %v1683, %v1683
      %v1792 = vpack.c.bf16 %v1684, %v1684
      %v1793 = vpack.c.bf16 %v1685, %v1685
      %v1794 = vpack.c.bf16 %v1686, %v1686
      %v1795 = vpack.c.bf16 %v1687, %v1687
      %v1796 = vpack.c.bf16 %v1688, %v1688
      %v1797 = vpack.c.bf16 %v1689, %v1689
      %v1798 = vpack.c.bf16 %v1690, %v1690
      %v1835 = vunpack.c.l.b16 %v1691
      %v1836 = vunpack.c.l.b16 %v1692
      %v1837 = vunpack.c.l.b16 %v1693
      %v1838 = vunpack.c.l.b16 %v1694
      %v1839 = vunpack.c.l.b16 %v1695
      %v1840 = vunpack.c.l.b16 %v1696
      %v1841 = vunpack.c.l.b16 %v1697
      %v1842 = vunpack.c.l.b16 %v1698
      %v1843 = vunpack.c.l.b16 %v1699
      %v1844 = vunpack.c.l.b16 %v1700
      %v1845 = vunpack.c.l.b16 %v1701
      %v1846 = vunpack.c.l.b16 %v1702
      %v1847 = vunpack.c.l.b16 %v1703
      %v1848 = vunpack.c.l.b16 %v1704
      %v1849 = vunpack.c.l.b16 %v1705
      %v1850 = vunpack.c.l.b16 %v1706
      %v1851 = vunpack.c.l.b16 %v1707
      %v1852 = vunpack.c.l.b16 %v1708
      %v1853 = vunpack.c.l.b16 %v1709
      %v1854 = vunpack.c.l.b16 %v1710
      %v1855 = vunpack.c.l.b16 %v1711
      %v1856 = vunpack.c.l.b16 %v1712
      %v1857 = vunpack.c.l.b16 %v1713
      %v1858 = vunpack.c.l.b16 %v1714
      %v1859 = vunpack.c.l.b16 %v1715
      %v1860 = vunpack.c.l.b16 %v1716
      %v1861 = vunpack.c.l.b16 %v1717
      %v1862 = vunpack.c.l.b16 %v1718
      %v1863 = vunpack.c.l.b16 %v1719
      %v1864 = vunpack.c.l.b16 %v1720
      %v1865 = vunpack.c.l.b16 %v1721
      %v1866 = vunpack.c.l.b16 %v1722
      %v1867 = vunpack.c.l.b16 %v1723
      %v1868 = vunpack.c.l.b16 %v1724
      %v1869 = vunpack.c.l.b16 %v1725
      %v1870 = vunpack.c.l.b16 %v1726
      %v1871 = vpack.c.b16 %v1836, %v1835
      %v1872 = vpack.c.b16 %v1838, %v1837
      %v1873 = vpack.c.b16 %v1840, %v1839
      %v1874 = vpack.c.b16 %v1842, %v1841
      %v1875 = vpack.c.b16 %v1844, %v1843
      %v1876 = vpack.c.b16 %v1846, %v1845
      %v1877 = vpack.c.b16 %v1848, %v1847
      %v1878 = vpack.c.b16 %v1850, %v1849
      %v1879 = vpack.c.b16 %v1852, %v1851
      %v1880 = vpack.c.b16 %v1854, %v1853
      %v1881 = vpack.c.b16 %v1856, %v1855
      %v1882 = vpack.c.b16 %v1858, %v1857
      %v1883 = vpack.c.b16 %v1860, %v1859
      %v1884 = vpack.c.b16 %v1862, %v1861
      %v1885 = vpack.c.b16 %v1864, %v1863
      %v1886 = vpack.c.b16 %v1866, %v1865
      %v1887 = vpack.c.b16 %v1868, %v1867
      %v1888 = vpack.c.b16 %v1870, %v1869
      %v1943 = vunpack.c.l.b16 %v1727
      %v1944 = vunpack.c.l.b16 %v1728
      %v1945 = vunpack.c.l.b16 %v1729
      %v1946 = vunpack.c.l.b16 %v1730
      %v1947 = vunpack.c.l.b16 %v1731
      %v1948 = vunpack.c.l.b16 %v1732
      %v1949 = vunpack.c.l.b16 %v1733
      %v1950 = vunpack.c.l.b16 %v1734
      %v1951 = vunpack.c.l.b16 %v1735
      %v1952 = vunpack.c.l.b16 %v1736
      %v1953 = vunpack.c.l.b16 %v1737
      %v1954 = vunpack.c.l.b16 %v1738
      %v1955 = vunpack.c.l.b16 %v1739
      %v1956 = vunpack.c.l.b16 %v1740
      %v1957 = vunpack.c.l.b16 %v1741
      %v1958 = vunpack.c.l.b16 %v1742
      %v1959 = vunpack.c.l.b16 %v1743
      %v1960 = vunpack.c.l.b16 %v1744
      %v1961 = vunpack.c.l.b16 %v1745
      %v1962 = vunpack.c.l.b16 %v1746
      %v1963 = vunpack.c.l.b16 %v1747
      %v1964 = vunpack.c.l.b16 %v1748
      %v1965 = vunpack.c.l.b16 %v1749
      %v1966 = vunpack.c.l.b16 %v1750
      %v1967 = vunpack.c.l.b16 %v1751
      %v1968 = vunpack.c.l.b16 %v1752
      %v1969 = vunpack.c.l.b16 %v1753
      %v1970 = vunpack.c.l.b16 %v1754
      %v1971 = vunpack.c.l.b16 %v1755
      %v1972 = vunpack.c.l.b16 %v1756
      %v1973 = vunpack.c.l.b16 %v1757
      %v1974 = vunpack.c.l.b16 %v1758
      %v1975 = vunpack.c.l.b16 %v1759
      %v1976 = vunpack.c.l.b16 %v1760
      %v1977 = vunpack.c.l.b16 %v1761
      %v1978 = vunpack.c.l.b16 %v1762
      %v1979 = vpack.c.b16 %v1944, %v1943
      %v1980 = vpack.c.b16 %v1946, %v1945
      %v1981 = vpack.c.b16 %v1948, %v1947
      %v1982 = vpack.c.b16 %v1950, %v1949
      %v1983 = vpack.c.b16 %v1952, %v1951
      %v1984 = vpack.c.b16 %v1954, %v1953
      %v1985 = vpack.c.b16 %v1956, %v1955
      %v1986 = vpack.c.b16 %v1958, %v1957
      %v1987 = vpack.c.b16 %v1960, %v1959
      %v1988 = vpack.c.b16 %v1962, %v1961
      %v1989 = vpack.c.b16 %v1964, %v1963
      %v1990 = vpack.c.b16 %v1966, %v1965
      %v1991 = vpack.c.b16 %v1968, %v1967
      %v1992 = vpack.c.b16 %v1970, %v1969
      %v1993 = vpack.c.b16 %v1972, %v1971
      %v1994 = vpack.c.b16 %v1974, %v1973
      %v1995 = vpack.c.b16 %v1976, %v1975
      %v1996 = vpack.c.b16 %v1978, %v1977
      %v2051 = vunpack.c.l.b16 %v1763
      %v2052 = vunpack.c.l.b16 %v1764
      %v2053 = vunpack.c.l.b16 %v1765
      %v2054 = vunpack.c.l.b16 %v1766
      %v2055 = vunpack.c.l.b16 %v1767
      %v2056 = vunpack.c.l.b16 %v1768
      %v2057 = vunpack.c.l.b16 %v1769
      %v2058 = vunpack.c.l.b16 %v1770
      %v2059 = vunpack.c.l.b16 %v1771
      %v2060 = vunpack.c.l.b16 %v1772
      %v2061 = vunpack.c.l.b16 %v1773
      %v2062 = vunpack.c.l.b16 %v1774
      %v2063 = vunpack.c.l.b16 %v1775
      %v2064 = vunpack.c.l.b16 %v1776
      %v2065 = vunpack.c.l.b16 %v1777
      %v2066 = vunpack.c.l.b16 %v1778
      %v2067 = vunpack.c.l.b16 %v1779
      %v2068 = vunpack.c.l.b16 %v1780
      %v2069 = vunpack.c.l.b16 %v1781
      %v2070 = vunpack.c.l.b16 %v1782
      %v2071 = vunpack.c.l.b16 %v1783
      %v2072 = vunpack.c.l.b16 %v1784
      %v2073 = vunpack.c.l.b16 %v1785
      %v2074 = vunpack.c.l.b16 %v1786
      %v2075 = vunpack.c.l.b16 %v1787
      %v2076 = vunpack.c.l.b16 %v1788
      %v2077 = vunpack.c.l.b16 %v1789
      %v2078 = vunpack.c.l.b16 %v1790
      %v2079 = vunpack.c.l.b16 %v1791
      %v2080 = vunpack.c.l.b16 %v1792
      %v2081 = vunpack.c.l.b16 %v1793
      %v2082 = vunpack.c.l.b16 %v1794
      %v2083 = vunpack.c.l.b16 %v1795
      %v2084 = vunpack.c.l.b16 %v1796
      %v2085 = vunpack.c.l.b16 %v1797
      %v2086 = vunpack.c.l.b16 %v1798
      %v2087 = vpack.c.b16 %v2052, %v2051
      %v2088 = vpack.c.b16 %v2054, %v2053
      %v2089 = vpack.c.b16 %v2056, %v2055
      %v2090 = vpack.c.b16 %v2058, %v2057
      %v2091 = vpack.c.b16 %v2060, %v2059
      %v2092 = vpack.c.b16 %v2062, %v2061
      %v2093 = vpack.c.b16 %v2064, %v2063
      %v2094 = vpack.c.b16 %v2066, %v2065
      %v2095 = vpack.c.b16 %v2068, %v2067
      %v2096 = vpack.c.b16 %v2070, %v2069
      %v2097 = vpack.c.b16 %v2072, %v2071
      %v2098 = vpack.c.b16 %v2074, %v2073
      %v2099 = vpack.c.b16 %v2076, %v2075
      %v2100 = vpack.c.b16 %v2078, %v2077
      %v2101 = vpack.c.b16 %v2080, %v2079
      %v2102 = vpack.c.b16 %v2082, %v2081
      %v2103 = vpack.c.b16 %v2084, %v2083
      %v2104 = vpack.c.b16 %v2086, %v2085
      %v2123 = vld [vmem:[%s5] sm:$0xf]
      %v2124 = vld [vmem:[%s5 + $0x4] sm:$0xf]
      %v2125 = vld [vmem:[%s5 + $0x8] sm:$0xf]
      %v2126 = vld [vmem:[%s5 + $0xc] sm:$0xf]
      %v2127 = vld [vmem:[%s5 + $0x10] sm:$0xf]
      %v2128 = vld [vmem:[%s5 + $0x14] sm:$0xf]
      %v2129 = vld [vmem:[%s5 + $0x18] sm:$0xf]
      %v2130 = vld [vmem:[%s5 + $0x1c] sm:$0xf]
      %v2131 = vld [vmem:[%s5 + $0x20] sm:$0xf]
      %v2132 = vld [vmem:[%s5 + $0x24] sm:$0xf]
      %v2133 = vld [vmem:[%s5 + $0x28] sm:$0xf]
      %v2134 = vld [vmem:[%s5 + $0x2c] sm:$0xf]
      %v2135 = vld [vmem:[%s5 + $0x30] sm:$0xf]
      %v2136 = vld [vmem:[%s5 + $0x34] sm:$0xf]
      %v2137 = vld [vmem:[%s5 + $0x38] sm:$0xf]
      %v2138 = vld [vmem:[%s5 + $0x3c] sm:$0xf]
      %v2139 = vld [vmem:[%s5 + $0x40] sm:$0xf]
      %v2140 = vld [vmem:[%s5 + $0x44] sm:$0xf]
      %v2141 = vld [vmem:[%s5 + $0x48] sm:$0xf]
      %v2142 = vld [vmem:[%s5 + $0x4c] sm:$0xf]
      %v2143 = vld [vmem:[%s5 + $0x50] sm:$0xf]
      %v2144 = vld [vmem:[%s5 + $0x54] sm:$0xf]
      %v2145 = vld [vmem:[%s5 + $0x58] sm:$0xf]
      %v2146 = vld [vmem:[%s5 + $0x5c] sm:$0xf]
      %v2147 = vld [vmem:[%s5 + $0x60] sm:$0xf]
      %v2148 = vld [vmem:[%s5 + $0x64] sm:$0xf]
      %v2149 = vld [vmem:[%s5 + $0x68] sm:$0xf]
      %v2150 = vld [vmem:[%s5 + $0x6c] sm:$0xf]
      %v2151 = vld [vmem:[%s5 + $0x70] sm:$0xf]
      %v2152 = vld [vmem:[%s5 + $0x74] sm:$0xf]
      %v2153 = vld [vmem:[%s5 + $0x78] sm:$0xf]
      %v2154 = vld [vmem:[%s5 + $0x7c] sm:$0xf]
      %v2155 = vld [vmem:[%s5 + $0x80] sm:$0xf]
      %v2156 = vld [vmem:[%s5 + $0x84] sm:$0xf]
      %v2157 = vld [vmem:[%s5 + $0x88] sm:$0xf]
      %v2158 = vld [vmem:[%s5 + $0x8c] sm:$0xf]
      %v2159 = vld [vmem:[%s5 + $0x90] sm:$0xf]
      %v2160 = vld [vmem:[%s5 + $0x94] sm:$0xf]
      %v2161 = vld [vmem:[%s5 + $0x98] sm:$0xf]
      %v2162 = vld [vmem:[%s5 + $0x9c] sm:$0xf]
      %v2163 = vld [vmem:[%s5 + $0xa0] sm:$0xf]
      %v2164 = vld [vmem:[%s5 + $0xa4] sm:$0xf]
      %v2165 = vld [vmem:[%s5 + $0xa8] sm:$0xf]
      %v2166 = vld [vmem:[%s5 + $0xac] sm:$0xf]
      %v2167 = vld [vmem:[%s5 + $0xb0] sm:$0xf]
      %v2168 = vld [vmem:[%s5 + $0xb4] sm:$0xf]
      %v2169 = vld [vmem:[%s5 + $0xb8] sm:$0xf]
      %v2170 = vld [vmem:[%s5 + $0xbc] sm:$0xf]
      %s2171 = scalar_lea.vmem %s5, 192
      %v2172 = vld [vmem:[%s2171] sm:$0xf]
      %v2173 = vld [vmem:[%s2171 + $0x4] sm:$0xf]
      %v2174 = vld [vmem:[%s2171 + $0x8] sm:$0xf]
      %v2175 = vld [vmem:[%s2171 + $0xc] sm:$0xf]
      %v2176 = vld [vmem:[%s2171 + $0x10] sm:$0xf]
      %v2177 = vld [vmem:[%s2171 + $0x14] sm:$0xf]
      %v2178 = vld [vmem:[%s2171 + $0x18] sm:$0xf]
      %v2179 = vld [vmem:[%s2171 + $0x1c] sm:$0xf]
      %v2180 = vld [vmem:[%s2171 + $0x20] sm:$0xf]
      %v2181 = vld [vmem:[%s2171 + $0x24] sm:$0xf]
      %v2182 = vld [vmem:[%s2171 + $0x28] sm:$0xf]
      %v2183 = vld [vmem:[%s2171 + $0x2c] sm:$0xf]
      %v2184 = vld [vmem:[%s2171 + $0x30] sm:$0xf]
      %v2185 = vld [vmem:[%s2171 + $0x34] sm:$0xf]
      %v2186 = vld [vmem:[%s2171 + $0x38] sm:$0xf]
      %v2187 = vld [vmem:[%s2171 + $0x3c] sm:$0xf]
      %v2188 = vld [vmem:[%s2171 + $0x40] sm:$0xf]
      %v2189 = vld [vmem:[%s2171 + $0x44] sm:$0xf]
      %v2190 = vld [vmem:[%s2171 + $0x48] sm:$0xf]
      %v2191 = vld [vmem:[%s2171 + $0x4c] sm:$0xf]
      %v2192 = vld [vmem:[%s2171 + $0x50] sm:$0xf]
      %v2193 = vld [vmem:[%s2171 + $0x54] sm:$0xf]
      %v2194 = vld [vmem:[%s2171 + $0x58] sm:$0xf]
      %v2195 = vld [vmem:[%s2171 + $0x5c] sm:$0xf]
      %v2196 = vld [vmem:[%s2171 + $0x60] sm:$0xf]
      %v2197 = vld [vmem:[%s2171 + $0x64] sm:$0xf]
      %v2198 = vld [vmem:[%s2171 + $0x68] sm:$0xf]
      %v2199 = vld [vmem:[%s2171 + $0x6c] sm:$0xf]
      %v2200 = vld [vmem:[%s2171 + $0x70] sm:$0xf]
      %v2201 = vld [vmem:[%s2171 + $0x74] sm:$0xf]
      %v2202 = vld [vmem:[%s2171 + $0x78] sm:$0xf]
      %v2203 = vld [vmem:[%s2171 + $0x7c] sm:$0xf]
      %v2204 = vld [vmem:[%s2171 + $0x80] sm:$0xf]
      %v2205 = vld [vmem:[%s2171 + $0x84] sm:$0xf]
      %v2206 = vld [vmem:[%s2171 + $0x88] sm:$0xf]
      %v2207 = vld [vmem:[%s2171 + $0x8c] sm:$0xf]
      %v2208 = vld [vmem:[%s2171 + $0x90] sm:$0xf]
      %v2209 = vld [vmem:[%s2171 + $0x94] sm:$0xf]
      %v2210 = vld [vmem:[%s2171 + $0x98] sm:$0xf]
      %v2211 = vld [vmem:[%s2171 + $0x9c] sm:$0xf]
      %v2212 = vld [vmem:[%s2171 + $0xa0] sm:$0xf]
      %v2213 = vld [vmem:[%s2171 + $0xa4] sm:$0xf]
      %v2214 = vld [vmem:[%s2171 + $0xa8] sm:$0xf]
      %v2215 = vld [vmem:[%s2171 + $0xac] sm:$0xf]
      %v2216 = vld [vmem:[%s2171 + $0xb0] sm:$0xf]
      %v2217 = vld [vmem:[%s2171 + $0xb4] sm:$0xf]
      %v2218 = vld [vmem:[%s2171 + $0xb8] sm:$0xf]
      %v2219 = vld [vmem:[%s2171 + $0xbc] sm:$0xf]
      %v2268 = vunpack.c.l.b16 %v2172
      %v2269 = vunpack.c.l.b16 %v2173
      %v2270 = vunpack.c.l.b16 %v2174
      %v2271 = vunpack.c.l.b16 %v2175
      %v2272 = vunpack.c.l.b16 %v2176
      %v2273 = vunpack.c.l.b16 %v2177
      %v2274 = vunpack.c.l.b16 %v2178
      %v2275 = vunpack.c.l.b16 %v2179
      %v2276 = vunpack.c.l.b16 %v2180
      %v2277 = vunpack.c.l.b16 %v2181
      %v2278 = vunpack.c.l.b16 %v2182
      %v2279 = vunpack.c.l.b16 %v2183
      %v2280 = vunpack.c.l.b16 %v2184
      %v2281 = vunpack.c.l.b16 %v2185
      %v2282 = vunpack.c.l.b16 %v2186
      %v2283 = vunpack.c.l.b16 %v2187
      %v2284 = vunpack.c.l.b16 %v2188
      %v2285 = vunpack.c.l.b16 %v2189
      %v2286 = vunpack.c.l.b16 %v2190
      %v2287 = vunpack.c.l.b16 %v2191
      %v2288 = vunpack.c.l.b16 %v2192
      %v2289 = vunpack.c.l.b16 %v2193
      %v2290 = vunpack.c.l.b16 %v2194
      %v2291 = vunpack.c.l.b16 %v2195
      %v2292 = vunpack.c.l.b16 %v2196
      %v2293 = vunpack.c.l.b16 %v2197
      %v2294 = vunpack.c.l.b16 %v2198
      %v2295 = vunpack.c.l.b16 %v2199
      %v2296 = vunpack.c.l.b16 %v2200
      %v2297 = vunpack.c.l.b16 %v2201
      %v2298 = vunpack.c.l.b16 %v2202
      %v2299 = vunpack.c.l.b16 %v2203
      %v2300 = vunpack.c.l.b16 %v2204
      %v2301 = vunpack.c.l.b16 %v2205
      %v2302 = vunpack.c.l.b16 %v2206
      %v2303 = vunpack.c.l.b16 %v2207
      %v2304 = vunpack.c.l.b16 %v2208
      %v2305 = vunpack.c.l.b16 %v2209
      %v2306 = vunpack.c.l.b16 %v2210
      %v2307 = vunpack.c.l.b16 %v2211
      %v2308 = vunpack.c.l.b16 %v2212
      %v2309 = vunpack.c.l.b16 %v2213
      %v2310 = vunpack.c.l.b16 %v2214
      %v2311 = vunpack.c.l.b16 %v2215
      %v2312 = vunpack.c.l.b16 %v2216
      %v2313 = vunpack.c.l.b16 %v2217
      %v2314 = vunpack.c.l.b16 %v2218
      %v2315 = vunpack.c.l.b16 %v2219
      %v2316 = vpack.c.b16 %v2269, %v2268
      %v2317 = vpack.c.b16 %v2271, %v2270
      %v2318 = vpack.c.b16 %v2273, %v2272
      %v2319 = vpack.c.b16 %v2275, %v2274
      %v2320 = vpack.c.b16 %v2277, %v2276
      %v2321 = vpack.c.b16 %v2279, %v2278
      %v2322 = vpack.c.b16 %v2281, %v2280
      %v2323 = vpack.c.b16 %v2283, %v2282
      %v2324 = vpack.c.b16 %v2285, %v2284
      %v2325 = vpack.c.b16 %v2287, %v2286
      %v2326 = vpack.c.b16 %v2289, %v2288
      %v2327 = vpack.c.b16 %v2291, %v2290
      %v2328 = vpack.c.b16 %v2293, %v2292
      %v2329 = vpack.c.b16 %v2295, %v2294
      %v2330 = vpack.c.b16 %v2297, %v2296
      %v2331 = vpack.c.b16 %v2299, %v2298
      %v2332 = vpack.c.b16 %v2301, %v2300
      %v2333 = vpack.c.b16 %v2303, %v2302
      %v2334 = vpack.c.b16 %v2305, %v2304
      %v2335 = vpack.c.b16 %v2307, %v2306
      %v2336 = vpack.c.b16 %v2309, %v2308
      %v2337 = vpack.c.b16 %v2311, %v2310
      %v2338 = vpack.c.b16 %v2313, %v2312
      %v2339 = vpack.c.b16 %v2315, %v2314
      %2364 = vmatpush.bf16.msra.mxu0 %v2323
      %2365 = vmatpush.bf16.msra.mxu0 %v2322
      %2366 = vmatpush.bf16.msra.mxu0 %v2321
      %2367 = vmatpush.bf16.msra.mxu0 %v2320
      %2368 = vmatpush.bf16.msra.mxu0 %v2319
      %2369 = vmatpush.bf16.msra.mxu0 %v2318
      %2370 = vmatpush.bf16.msra.mxu0 %v2317
      %2371 = vmatpush.bf16.msra.mxu0 %v2316
      %2372 = vmatmul.bf16.gmra.mxu0 %v1872
      %v2373 = vpop.f32.mrf.mxu0
      %v2374 = vadd.f32 0.0, %v2373
      %v2375 = vpop.f32.mrf.mxu0
      %v2376 = vadd.f32 0.0, %v2375
      %2377 = vmatmul.bf16.gmra.mxu0 %v1873
      %v2378 = vpop.f32.mrf.mxu0
      %v2379 = vadd.f32 0.0, %v2378
      %v2380 = vpop.f32.mrf.mxu0
      %v2381 = vadd.f32 0.0, %v2380
      %2382 = vmatmul.bf16.gmra.mxu0 %v1874
      %v2383 = vpop.f32.mrf.mxu0
      %v2384 = vadd.f32 0.0, %v2383
      %v2385 = vpop.f32.mrf.mxu0
      %v2386 = vadd.f32 0.0, %v2385
      %2387 = vmatmul.bf16.gmra.mxu0 %v1875
      %v2388 = vpop.f32.mrf.mxu0
      %v2389 = vadd.f32 0.0, %v2388
      %v2390 = vpop.f32.mrf.mxu0
      %v2391 = vadd.f32 0.0, %v2390
      %2392 = vmatmul.bf16.gmra.mxu0 %v1876
      %v2393 = vpop.f32.mrf.mxu0
      %v2394 = vadd.f32 0.0, %v2393
      %v2395 = vpop.f32.mrf.mxu0
      %v2396 = vadd.f32 0.0, %v2395
      %2397 = vmatmul.bf16.gmra.mxu0 %v1877
      %v2398 = vpop.f32.mrf.mxu0
      %v2399 = vadd.f32 0.0, %v2398
      %v2400 = vpop.f32.mrf.mxu0
      %v2401 = vadd.f32 0.0, %v2400
      %2402 = vmatmul.bf16.gmra.mxu0 %v1878
      %v2403 = vpop.f32.mrf.mxu0
      %v2404 = vadd.f32 0.0, %v2403
      %v2405 = vpop.f32.mrf.mxu0
      %v2406 = vadd.f32 0.0, %v2405
      %2407 = vmatmul.bf16.gmra.mxu0 %v1879
      %v2408 = vpop.f32.mrf.mxu0
      %v2409 = vadd.f32 0.0, %v2408
      %v2410 = vpop.f32.mrf.mxu0
      %v2411 = vadd.f32 0.0, %v2410
      %2412 = vmatmul.bf16.gmra.mxu0 %v1880
      %v2413 = vpop.f32.mrf.mxu0
      %v2414 = vadd.f32 0.0, %v2413
      %v2415 = vpop.f32.mrf.mxu0
      %v2416 = vadd.f32 0.0, %v2415
      %2417 = vmatmul.bf16.gmra.mxu0 %v1881
      %v2418 = vpop.f32.mrf.mxu0
      %v2419 = vadd.f32 0.0, %v2418
      %v2420 = vpop.f32.mrf.mxu0
      %v2421 = vadd.f32 0.0, %v2420
      %2422 = vmatmul.bf16.gmra.mxu0 %v1882
      %v2423 = vpop.f32.mrf.mxu0
      %v2424 = vadd.f32 0.0, %v2423
      %v2425 = vpop.f32.mrf.mxu0
      %v2426 = vadd.f32 0.0, %v2425
      %2427 = vmatmul.bf16.gmra.mxu0 %v1883
      %v2428 = vpop.f32.mrf.mxu0
      %v2429 = vadd.f32 0.0, %v2428
      %v2430 = vpop.f32.mrf.mxu0
      %v2431 = vadd.f32 0.0, %v2430
      %2432 = vmatmul.bf16.gmra.mxu0 %v1884
      %v2433 = vpop.f32.mrf.mxu0
      %v2434 = vadd.f32 0.0, %v2433
      %v2435 = vpop.f32.mrf.mxu0
      %v2436 = vadd.f32 0.0, %v2435
      %2437 = vmatmul.bf16.gmra.mxu0 %v1885
      %v2438 = vpop.f32.mrf.mxu0
      %v2439 = vadd.f32 0.0, %v2438
      %v2440 = vpop.f32.mrf.mxu0
      %v2441 = vadd.f32 0.0, %v2440
      %2442 = vmatmul.bf16.gmra.mxu0 %v1886
      %v2443 = vpop.f32.mrf.mxu0
      %v2444 = vadd.f32 0.0, %v2443
      %v2445 = vpop.f32.mrf.mxu0
      %v2446 = vadd.f32 0.0, %v2445
      %2447 = vmatmul.bf16.gmra.mxu0 %v1887
      %v2448 = vpop.f32.mrf.mxu0
      %v2449 = vadd.f32 0.0, %v2448
      %v2450 = vpop.f32.mrf.mxu0
      %v2451 = vadd.f32 0.0, %v2450
      %2452 = vdwg.mxu0
      %2453 = vmatpush.bf16.msra.mxu0 %v2331
      %2454 = vmatpush.bf16.msra.mxu0 %v2330
      %2455 = vmatpush.bf16.msra.mxu0 %v2329
      %2456 = vmatpush.bf16.msra.mxu0 %v2328
      %2457 = vmatpush.bf16.msra.mxu0 %v2327
      %2458 = vmatpush.bf16.msra.mxu0 %v2326
      %2459 = vmatpush.bf16.msra.mxu0 %v2325
      %2460 = vmatpush.bf16.msra.mxu0 %v2324
      %2461 = vmatmul.bf16.gmra.mxu0 %v1980
      %v2462 = vpop.f32.mrf.mxu0
      %v2463 = vadd.f32 %v2374, %v2462
      %v2464 = vpop.f32.mrf.mxu0
      %v2465 = vadd.f32 %v2376, %v2464
      %2466 = vmatmul.bf16.gmra.mxu0 %v1981
      %v2467 = vpop.f32.mrf.mxu0
      %v2468 = vadd.f32 %v2379, %v2467
      %v2469 = vpop.f32.mrf.mxu0
      %v2470 = vadd.f32 %v2381, %v2469
      %2471 = vmatmul.bf16.gmra.mxu0 %v1982
      %v2472 = vpop.f32.mrf.mxu0
      %v2473 = vadd.f32 %v2384, %v2472
      %v2474 = vpop.f32.mrf.mxu0
      %v2475 = vadd.f32 %v2386, %v2474
      %2476 = vmatmul.bf16.gmra.mxu0 %v1983
      %v2477 = vpop.f32.mrf.mxu0
      %v2478 = vadd.f32 %v2389, %v2477
      %v2479 = vpop.f32.mrf.mxu0
      %v2480 = vadd.f32 %v2391, %v2479
      %2481 = vmatmul.bf16.gmra.mxu0 %v1984
      %v2482 = vpop.f32.mrf.mxu0
      %v2483 = vadd.f32 %v2394, %v2482
      %v2484 = vpop.f32.mrf.mxu0
      %v2485 = vadd.f32 %v2396, %v2484
      %2486 = vmatmul.bf16.gmra.mxu0 %v1985
      %v2487 = vpop.f32.mrf.mxu0
      %v2488 = vadd.f32 %v2399, %v2487
      %v2489 = vpop.f32.mrf.mxu0
      %v2490 = vadd.f32 %v2401, %v2489
      %2491 = vmatmul.bf16.gmra.mxu0 %v1986
      %v2492 = vpop.f32.mrf.mxu0
      %v2493 = vadd.f32 %v2404, %v2492
      %v2494 = vpop.f32.mrf.mxu0
      %v2495 = vadd.f32 %v2406, %v2494
      %2496 = vmatmul.bf16.gmra.mxu0 %v1987
      %v2497 = vpop.f32.mrf.mxu0
      %v2498 = vadd.f32 %v2409, %v2497
      %v2499 = vpop.f32.mrf.mxu0
      %v2500 = vadd.f32 %v2411, %v2499
      %2501 = vmatmul.bf16.gmra.mxu0 %v1988
      %v2502 = vpop.f32.mrf.mxu0
      %v2503 = vadd.f32 %v2414, %v2502
      %v2504 = vpop.f32.mrf.mxu0
      %v2505 = vadd.f32 %v2416, %v2504
      %2506 = vmatmul.bf16.gmra.mxu0 %v1989
      %v2507 = vpop.f32.mrf.mxu0
      %v2508 = vadd.f32 %v2419, %v2507
      %v2509 = vpop.f32.mrf.mxu0
      %v2510 = vadd.f32 %v2421, %v2509
      %2511 = vmatmul.bf16.gmra.mxu0 %v1990
      %v2512 = vpop.f32.mrf.mxu0
      %v2513 = vadd.f32 %v2424, %v2512
      %v2514 = vpop.f32.mrf.mxu0
      %v2515 = vadd.f32 %v2426, %v2514
      %2516 = vmatmul.bf16.gmra.mxu0 %v1991
      %v2517 = vpop.f32.mrf.mxu0
      %v2518 = vadd.f32 %v2429, %v2517
      %v2519 = vpop.f32.mrf.mxu0
      %v2520 = vadd.f32 %v2431, %v2519
      %2521 = vmatmul.bf16.gmra.mxu0 %v1992
      %v2522 = vpop.f32.mrf.mxu0
      %v2523 = vadd.f32 %v2434, %v2522
      %v2524 = vpop.f32.mrf.mxu0
      %v2525 = vadd.f32 %v2436, %v2524
      %2526 = vmatmul.bf16.gmra.mxu0 %v1993
      %v2527 = vpop.f32.mrf.mxu0
      %v2528 = vadd.f32 %v2439, %v2527
      %v2529 = vpop.f32.mrf.mxu0
      %v2530 = vadd.f32 %v2441, %v2529
      %2531 = vmatmul.bf16.gmra.mxu0 %v1994
      %v2532 = vpop.f32.mrf.mxu0
      %v2533 = vadd.f32 %v2444, %v2532
      %v2534 = vpop.f32.mrf.mxu0
      %v2535 = vadd.f32 %v2446, %v2534
      %2536 = vmatmul.bf16.gmra.mxu0 %v1995
      %v2537 = vpop.f32.mrf.mxu0
      %v2538 = vadd.f32 %v2449, %v2537
      %v2539 = vpop.f32.mrf.mxu0
      %v2540 = vadd.f32 %v2451, %v2539
      %2541 = vdwg.mxu0
      %2542 = vmatpush.bf16.msra.mxu0 %v2339
      %2543 = vmatpush.bf16.msra.mxu0 %v2338
      %2544 = vmatpush.bf16.msra.mxu0 %v2337
      %2545 = vmatpush.bf16.msra.mxu0 %v2336
      %2546 = vmatpush.bf16.msra.mxu0 %v2335
      %2547 = vmatpush.bf16.msra.mxu0 %v2334
      %2548 = vmatpush.bf16.msra.mxu0 %v2333
      %2549 = vmatpush.bf16.msra.mxu0 %v2332
      %2550 = vmatmul.bf16.gmra.mxu0 %v2088
      %v2551 = vpop.f32.mrf.mxu0
      %v2552 = vadd.f32 %v2463, %v2551
      %v2553 = vpop.f32.mrf.mxu0
      %v2554 = vadd.f32 %v2465, %v2553
      %2555 = vmatmul.bf16.gmra.mxu0 %v2089
      %v2556 = vpop.f32.mrf.mxu0
      %v2557 = vadd.f32 %v2468, %v2556
      %v2558 = vpop.f32.mrf.mxu0
      %v2559 = vadd.f32 %v2470, %v2558
      %2560 = vmatmul.bf16.gmra.mxu0 %v2090
      %v2561 = vpop.f32.mrf.mxu0
      %v2562 = vadd.f32 %v2473, %v2561
      %v2563 = vpop.f32.mrf.mxu0
      %v2564 = vadd.f32 %v2475, %v2563
      %2565 = vmatmul.bf16.gmra.mxu0 %v2091
      %v2566 = vpop.f32.mrf.mxu0
      %v2567 = vadd.f32 %v2478, %v2566
      %v2568 = vpop.f32.mrf.mxu0
      %v2569 = vadd.f32 %v2480, %v2568
      %2570 = vmatmul.bf16.gmra.mxu0 %v2092
      %v2571 = vpop.f32.mrf.mxu0
      %v2572 = vadd.f32 %v2483, %v2571
      %v2573 = vpop.f32.mrf.mxu0
      %v2574 = vadd.f32 %v2485, %v2573
      %2575 = vmatmul.bf16.gmra.mxu0 %v2093
      %v2576 = vpop.f32.mrf.mxu0
      %v2577 = vadd.f32 %v2488, %v2576
      %v2578 = vpop.f32.mrf.mxu0
      %v2579 = vadd.f32 %v2490, %v2578
      %2580 = vmatmul.bf16.gmra.mxu0 %v2094
      %v2581 = vpop.f32.mrf.mxu0
      %v2582 = vadd.f32 %v2493, %v2581
      %v2583 = vpop.f32.mrf.mxu0
      %v2584 = vadd.f32 %v2495, %v2583
      %2585 = vmatmul.bf16.gmra.mxu0 %v2095
      %v2586 = vpop.f32.mrf.mxu0
      %v2587 = vadd.f32 %v2498, %v2586
      %v2588 = vpop.f32.mrf.mxu0
      %v2589 = vadd.f32 %v2500, %v2588
      %2590 = vmatmul.bf16.gmra.mxu0 %v2096
      %v2591 = vpop.f32.mrf.mxu0
      %v2592 = vadd.f32 %v2503, %v2591
      %v2593 = vpop.f32.mrf.mxu0
      %v2594 = vadd.f32 %v2505, %v2593
      %2595 = vmatmul.bf16.gmra.mxu0 %v2097
      %v2596 = vpop.f32.mrf.mxu0
      %v2597 = vadd.f32 %v2508, %v2596
      %v2598 = vpop.f32.mrf.mxu0
      %v2599 = vadd.f32 %v2510, %v2598
      %2600 = vmatmul.bf16.gmra.mxu0 %v2098
      %v2601 = vpop.f32.mrf.mxu0
      %v2602 = vadd.f32 %v2513, %v2601
      %v2603 = vpop.f32.mrf.mxu0
      %v2604 = vadd.f32 %v2515, %v2603
      %2605 = vmatmul.bf16.gmra.mxu0 %v2099
      %v2606 = vpop.f32.mrf.mxu0
      %v2607 = vadd.f32 %v2518, %v2606
      %v2608 = vpop.f32.mrf.mxu0
      %v2609 = vadd.f32 %v2520, %v2608
      %2610 = vmatmul.bf16.gmra.mxu0 %v2100
      %v2611 = vpop.f32.mrf.mxu0
      %v2612 = vadd.f32 %v2523, %v2611
      %v2613 = vpop.f32.mrf.mxu0
      %v2614 = vadd.f32 %v2525, %v2613
      %2615 = vmatmul.bf16.gmra.mxu0 %v2101
      %v2616 = vpop.f32.mrf.mxu0
      %v2617 = vadd.f32 %v2528, %v2616
      %v2618 = vpop.f32.mrf.mxu0
      %v2619 = vadd.f32 %v2530, %v2618
      %2620 = vmatmul.bf16.gmra.mxu0 %v2102
      %v2621 = vpop.f32.mrf.mxu0
      %v2622 = vadd.f32 %v2533, %v2621
      %v2623 = vpop.f32.mrf.mxu0
      %v2624 = vadd.f32 %v2535, %v2623
      %2625 = vmatmul.bf16.gmra.mxu0 %v2103
      %v2626 = vpop.f32.mrf.mxu0
      %v2627 = vadd.f32 %v2538, %v2626
      %v2628 = vpop.f32.mrf.mxu0
      %v2629 = vadd.f32 %v2540, %v2628
      %2630 = vdwg.mxu0
      %v2679 = vunpack.c.l.b16 %v2123
      %v2680 = vunpack.c.l.b16 %v2124
      %v2681 = vunpack.c.l.b16 %v2125
      %v2682 = vunpack.c.l.b16 %v2126
      %v2683 = vunpack.c.l.b16 %v2127
      %v2684 = vunpack.c.l.b16 %v2128
      %v2685 = vunpack.c.l.b16 %v2129
      %v2686 = vunpack.c.l.b16 %v2130
      %v2687 = vunpack.c.l.b16 %v2131
      %v2688 = vunpack.c.l.b16 %v2132
      %v2689 = vunpack.c.l.b16 %v2133
      %v2690 = vunpack.c.l.b16 %v2134
      %v2691 = vunpack.c.l.b16 %v2135
      %v2692 = vunpack.c.l.b16 %v2136
      %v2693 = vunpack.c.l.b16 %v2137
      %v2694 = vunpack.c.l.b16 %v2138
      %v2695 = vunpack.c.l.b16 %v2139
      %v2696 = vunpack.c.l.b16 %v2140
      %v2697 = vunpack.c.l.b16 %v2141
      %v2698 = vunpack.c.l.b16 %v2142
      %v2699 = vunpack.c.l.b16 %v2143
      %v2700 = vunpack.c.l.b16 %v2144
      %v2701 = vunpack.c.l.b16 %v2145
      %v2702 = vunpack.c.l.b16 %v2146
      %v2703 = vunpack.c.l.b16 %v2147
      %v2704 = vunpack.c.l.b16 %v2148
      %v2705 = vunpack.c.l.b16 %v2149
      %v2706 = vunpack.c.l.b16 %v2150
      %v2707 = vunpack.c.l.b16 %v2151
      %v2708 = vunpack.c.l.b16 %v2152
      %v2709 = vunpack.c.l.b16 %v2153
      %v2710 = vunpack.c.l.b16 %v2154
      %v2711 = vunpack.c.l.b16 %v2155
      %v2712 = vunpack.c.l.b16 %v2156
      %v2713 = vunpack.c.l.b16 %v2157
      %v2714 = vunpack.c.l.b16 %v2158
      %v2715 = vunpack.c.l.b16 %v2159
      %v2716 = vunpack.c.l.b16 %v2160
      %v2717 = vunpack.c.l.b16 %v2161
      %v2718 = vunpack.c.l.b16 %v2162
      %v2719 = vunpack.c.l.b16 %v2163
      %v2720 = vunpack.c.l.b16 %v2164
      %v2721 = vunpack.c.l.b16 %v2165
      %v2722 = vunpack.c.l.b16 %v2166
      %v2723 = vunpack.c.l.b16 %v2167
      %v2724 = vunpack.c.l.b16 %v2168
      %v2725 = vunpack.c.l.b16 %v2169
      %v2726 = vunpack.c.l.b16 %v2170
      %v2727 = vpack.c.b16 %v2680, %v2679
      %v2728 = vpack.c.b16 %v2682, %v2681
      %v2729 = vpack.c.b16 %v2684, %v2683
      %v2730 = vpack.c.b16 %v2686, %v2685
      %v2731 = vpack.c.b16 %v2688, %v2687
      %v2732 = vpack.c.b16 %v2690, %v2689
      %v2733 = vpack.c.b16 %v2692, %v2691
      %v2734 = vpack.c.b16 %v2694, %v2693
      %v2735 = vpack.c.b16 %v2696, %v2695
      %v2736 = vpack.c.b16 %v2698, %v2697
      %v2737 = vpack.c.b16 %v2700, %v2699
      %v2738 = vpack.c.b16 %v2702, %v2701
      %v2739 = vpack.c.b16 %v2704, %v2703
      %v2740 = vpack.c.b16 %v2706, %v2705
      %v2741 = vpack.c.b16 %v2708, %v2707
      %v2742 = vpack.c.b16 %v2710, %v2709
      %v2743 = vpack.c.b16 %v2712, %v2711
      %v2744 = vpack.c.b16 %v2714, %v2713
      %v2745 = vpack.c.b16 %v2716, %v2715
      %v2746 = vpack.c.b16 %v2718, %v2717
      %v2747 = vpack.c.b16 %v2720, %v2719
      %v2748 = vpack.c.b16 %v2722, %v2721
      %v2749 = vpack.c.b16 %v2724, %v2723
      %v2750 = vpack.c.b16 %v2726, %v2725
      %2775 = vmatpush.bf16.msra.mxu0 %v2734
      %2776 = vmatpush.bf16.msra.mxu0 %v2733
      %2777 = vmatpush.bf16.msra.mxu0 %v2732
      %2778 = vmatpush.bf16.msra.mxu0 %v2731
      %2779 = vmatpush.bf16.msra.mxu0 %v2730
      %2780 = vmatpush.bf16.msra.mxu0 %v2729
      %2781 = vmatpush.bf16.msra.mxu0 %v2728
      %2782 = vmatpush.bf16.msra.mxu0 %v2727
      %2783 = vmatmul.bf16.gmra.mxu0 %v1871
      %v2784 = vpop.f32.mrf.mxu0
      %v2785 = vadd.f32 %v2552, %v2784
      %v2786 = vpop.f32.mrf.mxu0
      %v2787 = vadd.f32 %v2554, %v2786
      %2788 = vmatmul.bf16.gmra.mxu0 %v1872
      %v2789 = vpop.f32.mrf.mxu0
      %v2790 = vadd.f32 %v2557, %v2789
      %v2791 = vpop.f32.mrf.mxu0
      %v2792 = vadd.f32 %v2559, %v2791
      %2793 = vmatmul.bf16.gmra.mxu0 %v1873
      %v2794 = vpop.f32.mrf.mxu0
      %v2795 = vadd.f32 %v2562, %v2794
      %v2796 = vpop.f32.mrf.mxu0
      %v2797 = vadd.f32 %v2564, %v2796
      %2798 = vmatmul.bf16.gmra.mxu0 %v1874
      %v2799 = vpop.f32.mrf.mxu0
      %v2800 = vadd.f32 %v2567, %v2799
      %v2801 = vpop.f32.mrf.mxu0
      %v2802 = vadd.f32 %v2569, %v2801
      %2803 = vmatmul.bf16.gmra.mxu0 %v1875
      %v2804 = vpop.f32.mrf.mxu0
      %v2805 = vadd.f32 %v2572, %v2804
      %v2806 = vpop.f32.mrf.mxu0
      %v2807 = vadd.f32 %v2574, %v2806
      %2808 = vmatmul.bf16.gmra.mxu0 %v1876
      %v2809 = vpop.f32.mrf.mxu0
      %v2810 = vadd.f32 %v2577, %v2809
      %v2811 = vpop.f32.mrf.mxu0
      %v2812 = vadd.f32 %v2579, %v2811
      %2813 = vmatmul.bf16.gmra.mxu0 %v1877
      %v2814 = vpop.f32.mrf.mxu0
      %v2815 = vadd.f32 %v2582, %v2814
      %v2816 = vpop.f32.mrf.mxu0
      %v2817 = vadd.f32 %v2584, %v2816
      %2818 = vmatmul.bf16.gmra.mxu0 %v1878
      %v2819 = vpop.f32.mrf.mxu0
      %v2820 = vadd.f32 %v2587, %v2819
      %v2821 = vpop.f32.mrf.mxu0
      %v2822 = vadd.f32 %v2589, %v2821
      %2823 = vmatmul.bf16.gmra.mxu0 %v1879
      %v2824 = vpop.f32.mrf.mxu0
      %v2825 = vadd.f32 %v2592, %v2824
      %v2826 = vpop.f32.mrf.mxu0
      %v2827 = vadd.f32 %v2594, %v2826
      %2828 = vmatmul.bf16.gmra.mxu0 %v1880
      %v2829 = vpop.f32.mrf.mxu0
      %v2830 = vadd.f32 %v2597, %v2829
      %v2831 = vpop.f32.mrf.mxu0
      %v2832 = vadd.f32 %v2599, %v2831
      %2833 = vmatmul.bf16.gmra.mxu0 %v1881
      %v2834 = vpop.f32.mrf.mxu0
      %v2835 = vadd.f32 %v2602, %v2834
      %v2836 = vpop.f32.mrf.mxu0
      %v2837 = vadd.f32 %v2604, %v2836
      %2838 = vmatmul.bf16.gmra.mxu0 %v1882
      %v2839 = vpop.f32.mrf.mxu0
      %v2840 = vadd.f32 %v2607, %v2839
      %v2841 = vpop.f32.mrf.mxu0
      %v2842 = vadd.f32 %v2609, %v2841
      %2843 = vmatmul.bf16.gmra.mxu0 %v1883
      %v2844 = vpop.f32.mrf.mxu0
      %v2845 = vadd.f32 %v2612, %v2844
      %v2846 = vpop.f32.mrf.mxu0
      %v2847 = vadd.f32 %v2614, %v2846
      %2848 = vmatmul.bf16.gmra.mxu0 %v1884
      %v2849 = vpop.f32.mrf.mxu0
      %v2850 = vadd.f32 %v2617, %v2849
      %v2851 = vpop.f32.mrf.mxu0
      %v2852 = vadd.f32 %v2619, %v2851
      %2853 = vmatmul.bf16.gmra.mxu0 %v1885
      %v2854 = vpop.f32.mrf.mxu0
      %v2855 = vadd.f32 %v2622, %v2854
      %v2856 = vpop.f32.mrf.mxu0
      %v2857 = vadd.f32 %v2624, %v2856
      %2858 = vmatmul.bf16.gmra.mxu0 %v1886
      %v2859 = vpop.f32.mrf.mxu0
      %v2860 = vadd.f32 %v2627, %v2859
      %v2861 = vpop.f32.mrf.mxu0
      %v2862 = vadd.f32 %v2629, %v2861
      %2863 = vdwg.mxu0
      %2864 = vmatpush.bf16.msra.mxu0 %v2742
      %2865 = vmatpush.bf16.msra.mxu0 %v2741
      %2866 = vmatpush.bf16.msra.mxu0 %v2740
      %2867 = vmatpush.bf16.msra.mxu0 %v2739
      %2868 = vmatpush.bf16.msra.mxu0 %v2738
      %2869 = vmatpush.bf16.msra.mxu0 %v2737
      %2870 = vmatpush.bf16.msra.mxu0 %v2736
      %2871 = vmatpush.bf16.msra.mxu0 %v2735
      %2872 = vmatmul.bf16.gmra.mxu0 %v1979
      %v2873 = vpop.f32.mrf.mxu0
      %v2874 = vadd.f32 %v2785, %v2873
      %v2875 = vpop.f32.mrf.mxu0
      %v2876 = vadd.f32 %v2787, %v2875
      %2877 = vmatmul.bf16.gmra.mxu0 %v1980
      %v2878 = vpop.f32.mrf.mxu0
      %v2879 = vadd.f32 %v2790, %v2878
      %v2880 = vpop.f32.mrf.mxu0
      %v2881 = vadd.f32 %v2792, %v2880
      %2882 = vmatmul.bf16.gmra.mxu0 %v1981
      %v2883 = vpop.f32.mrf.mxu0
      %v2884 = vadd.f32 %v2795, %v2883
      %v2885 = vpop.f32.mrf.mxu0
      %v2886 = vadd.f32 %v2797, %v2885
      %2887 = vmatmul.bf16.gmra.mxu0 %v1982
      %v2888 = vpop.f32.mrf.mxu0
      %v2889 = vadd.f32 %v2800, %v2888
      %v2890 = vpop.f32.mrf.mxu0
      %v2891 = vadd.f32 %v2802, %v2890
      %2892 = vmatmul.bf16.gmra.mxu0 %v1983
      %v2893 = vpop.f32.mrf.mxu0
      %v2894 = vadd.f32 %v2805, %v2893
      %v2895 = vpop.f32.mrf.mxu0
      %v2896 = vadd.f32 %v2807, %v2895
      %2897 = vmatmul.bf16.gmra.mxu0 %v1984
      %v2898 = vpop.f32.mrf.mxu0
      %v2899 = vadd.f32 %v2810, %v2898
      %v2900 = vpop.f32.mrf.mxu0
      %v2901 = vadd.f32 %v2812, %v2900
      %2902 = vmatmul.bf16.gmra.mxu0 %v1985
      %v2903 = vpop.f32.mrf.mxu0
      %v2904 = vadd.f32 %v2815, %v2903
      %v2905 = vpop.f32.mrf.mxu0
      %v2906 = vadd.f32 %v2817, %v2905
      %2907 = vmatmul.bf16.gmra.mxu0 %v1986
      %v2908 = vpop.f32.mrf.mxu0
      %v2909 = vadd.f32 %v2820, %v2908
      %v2910 = vpop.f32.mrf.mxu0
      %v2911 = vadd.f32 %v2822, %v2910
      %2912 = vmatmul.bf16.gmra.mxu0 %v1987
      %v2913 = vpop.f32.mrf.mxu0
      %v2914 = vadd.f32 %v2825, %v2913
      %v2915 = vpop.f32.mrf.mxu0
      %v2916 = vadd.f32 %v2827, %v2915
      %2917 = vmatmul.bf16.gmra.mxu0 %v1988
      %v2918 = vpop.f32.mrf.mxu0
      %v2919 = vadd.f32 %v2830, %v2918
      %v2920 = vpop.f32.mrf.mxu0
      %v2921 = vadd.f32 %v2832, %v2920
      %2922 = vmatmul.bf16.gmra.mxu0 %v1989
      %v2923 = vpop.f32.mrf.mxu0
      %v2924 = vadd.f32 %v2835, %v2923
      %v2925 = vpop.f32.mrf.mxu0
      %v2926 = vadd.f32 %v2837, %v2925
      %2927 = vmatmul.bf16.gmra.mxu0 %v1990
      %v2928 = vpop.f32.mrf.mxu0
      %v2929 = vadd.f32 %v2840, %v2928
      %v2930 = vpop.f32.mrf.mxu0
      %v2931 = vadd.f32 %v2842, %v2930
      %2932 = vmatmul.bf16.gmra.mxu0 %v1991
      %v2933 = vpop.f32.mrf.mxu0
      %v2934 = vadd.f32 %v2845, %v2933
      %v2935 = vpop.f32.mrf.mxu0
      %v2936 = vadd.f32 %v2847, %v2935
      %2937 = vmatmul.bf16.gmra.mxu0 %v1992
      %v2938 = vpop.f32.mrf.mxu0
      %v2939 = vadd.f32 %v2850, %v2938
      %v2940 = vpop.f32.mrf.mxu0
      %v2941 = vadd.f32 %v2852, %v2940
      %2942 = vmatmul.bf16.gmra.mxu0 %v1993
      %v2943 = vpop.f32.mrf.mxu0
      %v2944 = vadd.f32 %v2855, %v2943
      %v2945 = vpop.f32.mrf.mxu0
      %v2946 = vadd.f32 %v2857, %v2945
      %2947 = vmatmul.bf16.gmra.mxu0 %v1994
      %v2948 = vpop.f32.mrf.mxu0
      %v2949 = vadd.f32 %v2860, %v2948
      %v2950 = vpop.f32.mrf.mxu0
      %v2951 = vadd.f32 %v2862, %v2950
      %2952 = vdwg.mxu0
      %2953 = vmatpush.bf16.msra.mxu0 %v2750
      %2954 = vmatpush.bf16.msra.mxu0 %v2749
      %2955 = vmatpush.bf16.msra.mxu0 %v2748
      %2956 = vmatpush.bf16.msra.mxu0 %v2747
      %2957 = vmatpush.bf16.msra.mxu0 %v2746
      %2958 = vmatpush.bf16.msra.mxu0 %v2745
      %2959 = vmatpush.bf16.msra.mxu0 %v2744
      %2960 = vmatpush.bf16.msra.mxu0 %v2743
      %2961 = vmatmul.bf16.gmra.mxu0 %v2087
      %v2962 = vpop.f32.mrf.mxu0
      %v2963 = vadd.f32 %v2874, %v2962
      %v2964 = vpop.f32.mrf.mxu0
      %v2965 = vadd.f32 %v2876, %v2964
      %2966 = vmatmul.bf16.gmra.mxu0 %v2088
      %v2967 = vpop.f32.mrf.mxu0
      %v2968 = vadd.f32 %v2879, %v2967
      %v2969 = vpop.f32.mrf.mxu0
      %v2970 = vadd.f32 %v2881, %v2969
      %2971 = vmatmul.bf16.gmra.mxu0 %v2089
      %v2972 = vpop.f32.mrf.mxu0
      %v2973 = vadd.f32 %v2884, %v2972
      %v2974 = vpop.f32.mrf.mxu0
      %v2975 = vadd.f32 %v2886, %v2974
      %2976 = vmatmul.bf16.gmra.mxu0 %v2090
      %v2977 = vpop.f32.mrf.mxu0
      %v2978 = vadd.f32 %v2889, %v2977
      %v2979 = vpop.f32.mrf.mxu0
      %v2980 = vadd.f32 %v2891, %v2979
      %2981 = vmatmul.bf16.gmra.mxu0 %v2091
      %v2982 = vpop.f32.mrf.mxu0
      %v2983 = vadd.f32 %v2894, %v2982
      %v2984 = vpop.f32.mrf.mxu0
      %v2985 = vadd.f32 %v2896, %v2984
      %2986 = vmatmul.bf16.gmra.mxu0 %v2092
      %v2987 = vpop.f32.mrf.mxu0
      %v2988 = vadd.f32 %v2899, %v2987
      %v2989 = vpop.f32.mrf.mxu0
      %v2990 = vadd.f32 %v2901, %v2989
      %2991 = vmatmul.bf16.gmra.mxu0 %v2093
      %v2992 = vpop.f32.mrf.mxu0
      %v2993 = vadd.f32 %v2904, %v2992
      %v2994 = vpop.f32.mrf.mxu0
      %v2995 = vadd.f32 %v2906, %v2994
      %2996 = vmatmul.bf16.gmra.mxu0 %v2094
      %v2997 = vpop.f32.mrf.mxu0
      %v2998 = vadd.f32 %v2909, %v2997
      %v2999 = vpop.f32.mrf.mxu0
      %v3000 = vadd.f32 %v2911, %v2999
      %3001 = vmatmul.bf16.gmra.mxu0 %v2095
      %v3002 = vpop.f32.mrf.mxu0
      %v3003 = vadd.f32 %v2914, %v3002
      %v3004 = vpop.f32.mrf.mxu0
      %v3005 = vadd.f32 %v2916, %v3004
      %3006 = vmatmul.bf16.gmra.mxu0 %v2096
      %v3007 = vpop.f32.mrf.mxu0
      %v3008 = vadd.f32 %v2919, %v3007
      %v3009 = vpop.f32.mrf.mxu0
      %v3010 = vadd.f32 %v2921, %v3009
      %3011 = vmatmul.bf16.gmra.mxu0 %v2097
      %v3012 = vpop.f32.mrf.mxu0
      %v3013 = vadd.f32 %v2924, %v3012
      %v3014 = vpop.f32.mrf.mxu0
      %v3015 = vadd.f32 %v2926, %v3014
      %3016 = vmatmul.bf16.gmra.mxu0 %v2098
      %v3017 = vpop.f32.mrf.mxu0
      %v3018 = vadd.f32 %v2929, %v3017
      %v3019 = vpop.f32.mrf.mxu0
      %v3020 = vadd.f32 %v2931, %v3019
      %3021 = vmatmul.bf16.gmra.mxu0 %v2099
      %v3022 = vpop.f32.mrf.mxu0
      %v3023 = vadd.f32 %v2934, %v3022
      %v3024 = vpop.f32.mrf.mxu0
      %v3025 = vadd.f32 %v2936, %v3024
      %3026 = vmatmul.bf16.gmra.mxu0 %v2100
      %v3027 = vpop.f32.mrf.mxu0
      %v3028 = vadd.f32 %v2939, %v3027
      %v3029 = vpop.f32.mrf.mxu0
      %v3030 = vadd.f32 %v2941, %v3029
      %3031 = vmatmul.bf16.gmra.mxu0 %v2101
      %v3032 = vpop.f32.mrf.mxu0
      %v3033 = vadd.f32 %v2944, %v3032
      %v3034 = vpop.f32.mrf.mxu0
      %v3035 = vadd.f32 %v2946, %v3034
      %3036 = vmatmul.bf16.gmra.mxu0 %v2102
      %v3037 = vpop.f32.mrf.mxu0
      %v3038 = vadd.f32 %v2949, %v3037
      %v3039 = vpop.f32.mrf.mxu0
      %v3040 = vadd.f32 %v2951, %v3039
      %3041 = vdwg.mxu0
      %s3042 = scalar_lea.vmem %s5, 384
      %v3043 = vld [vmem:[%s3042] sm:$0xf]
      %v3044 = vld [vmem:[%s3042 + $0x4] sm:$0xf]
      %v3045 = vld [vmem:[%s3042 + $0x8] sm:$0xf]
      %v3046 = vld [vmem:[%s3042 + $0xc] sm:$0xf]
      %v3047 = vld [vmem:[%s3042 + $0x10] sm:$0xf]
      %v3048 = vld [vmem:[%s3042 + $0x14] sm:$0xf]
      %v3049 = vld [vmem:[%s3042 + $0x18] sm:$0xf]
      %v3050 = vld [vmem:[%s3042 + $0x1c] sm:$0xf]
      %v3051 = vld [vmem:[%s3042 + $0x20] sm:$0xf]
      %v3052 = vld [vmem:[%s3042 + $0x24] sm:$0xf]
      %v3053 = vld [vmem:[%s3042 + $0x28] sm:$0xf]
      %v3054 = vld [vmem:[%s3042 + $0x2c] sm:$0xf]
      %v3055 = vld [vmem:[%s3042 + $0x30] sm:$0xf]
      %v3056 = vld [vmem:[%s3042 + $0x34] sm:$0xf]
      %v3057 = vld [vmem:[%s3042 + $0x38] sm:$0xf]
      %v3058 = vld [vmem:[%s3042 + $0x3c] sm:$0xf]
      %v3059 = vld [vmem:[%s3042 + $0x40] sm:$0xf]
      %v3060 = vld [vmem:[%s3042 + $0x44] sm:$0xf]
      %v3061 = vld [vmem:[%s3042 + $0x48] sm:$0xf]
      %v3062 = vld [vmem:[%s3042 + $0x4c] sm:$0xf]
      %v3063 = vld [vmem:[%s3042 + $0x50] sm:$0xf]
      %v3064 = vld [vmem:[%s3042 + $0x54] sm:$0xf]
      %v3065 = vld [vmem:[%s3042 + $0x58] sm:$0xf]
      %v3066 = vld [vmem:[%s3042 + $0x5c] sm:$0xf]
      %v3067 = vld [vmem:[%s3042 + $0x60] sm:$0xf]
      %v3068 = vld [vmem:[%s3042 + $0x64] sm:$0xf]
      %v3069 = vld [vmem:[%s3042 + $0x68] sm:$0xf]
      %v3070 = vld [vmem:[%s3042 + $0x6c] sm:$0xf]
      %v3071 = vld [vmem:[%s3042 + $0x70] sm:$0xf]
      %v3072 = vld [vmem:[%s3042 + $0x74] sm:$0xf]
      %v3073 = vld [vmem:[%s3042 + $0x78] sm:$0xf]
      %v3074 = vld [vmem:[%s3042 + $0x7c] sm:$0xf]
      %v3075 = vld [vmem:[%s3042 + $0x80] sm:$0xf]
      %v3076 = vld [vmem:[%s3042 + $0x84] sm:$0xf]
      %v3077 = vld [vmem:[%s3042 + $0x88] sm:$0xf]
      %v3078 = vld [vmem:[%s3042 + $0x8c] sm:$0xf]
      %v3079 = vld [vmem:[%s3042 + $0x90] sm:$0xf]
      %v3080 = vld [vmem:[%s3042 + $0x94] sm:$0xf]
      %v3081 = vld [vmem:[%s3042 + $0x98] sm:$0xf]
      %v3082 = vld [vmem:[%s3042 + $0x9c] sm:$0xf]
      %v3083 = vld [vmem:[%s3042 + $0xa0] sm:$0xf]
      %v3084 = vld [vmem:[%s3042 + $0xa4] sm:$0xf]
      %v3085 = vld [vmem:[%s3042 + $0xa8] sm:$0xf]
      %v3086 = vld [vmem:[%s3042 + $0xac] sm:$0xf]
      %v3087 = vld [vmem:[%s3042 + $0xb0] sm:$0xf]
      %v3088 = vld [vmem:[%s3042 + $0xb4] sm:$0xf]
      %v3089 = vld [vmem:[%s3042 + $0xb8] sm:$0xf]
      %v3090 = vld [vmem:[%s3042 + $0xbc] sm:$0xf]
      %v3139 = vunpack.c.l.b16 %v3043
      %v3140 = vunpack.c.l.b16 %v3044
      %v3141 = vunpack.c.l.b16 %v3045
      %v3142 = vunpack.c.l.b16 %v3046
      %v3143 = vunpack.c.l.b16 %v3047
      %v3144 = vunpack.c.l.b16 %v3048
      %v3145 = vunpack.c.l.b16 %v3049
      %v3146 = vunpack.c.l.b16 %v3050
      %v3147 = vunpack.c.l.b16 %v3051
      %v3148 = vunpack.c.l.b16 %v3052
      %v3149 = vunpack.c.l.b16 %v3053
      %v3150 = vunpack.c.l.b16 %v3054
      %v3151 = vunpack.c.l.b16 %v3055
      %v3152 = vunpack.c.l.b16 %v3056
      %v3153 = vunpack.c.l.b16 %v3057
      %v3154 = vunpack.c.l.b16 %v3058
      %v3155 = vunpack.c.l.b16 %v3059
      %v3156 = vunpack.c.l.b16 %v3060
      %v3157 = vunpack.c.l.b16 %v3061
      %v3158 = vunpack.c.l.b16 %v3062
      %v3159 = vunpack.c.l.b16 %v3063
      %v3160 = vunpack.c.l.b16 %v3064
      %v3161 = vunpack.c.l.b16 %v3065
      %v3162 = vunpack.c.l.b16 %v3066
      %v3163 = vunpack.c.l.b16 %v3067
      %v3164 = vunpack.c.l.b16 %v3068
      %v3165 = vunpack.c.l.b16 %v3069
      %v3166 = vunpack.c.l.b16 %v3070
      %v3167 = vunpack.c.l.b16 %v3071
      %v3168 = vunpack.c.l.b16 %v3072
      %v3169 = vunpack.c.l.b16 %v3073
      %v3170 = vunpack.c.l.b16 %v3074
      %v3171 = vunpack.c.l.b16 %v3075
      %v3172 = vunpack.c.l.b16 %v3076
      %v3173 = vunpack.c.l.b16 %v3077
      %v3174 = vunpack.c.l.b16 %v3078
      %v3175 = vunpack.c.l.b16 %v3079
      %v3176 = vunpack.c.l.b16 %v3080
      %v3177 = vunpack.c.l.b16 %v3081
      %v3178 = vunpack.c.l.b16 %v3082
      %v3179 = vunpack.c.l.b16 %v3083
      %v3180 = vunpack.c.l.b16 %v3084
      %v3181 = vunpack.c.l.b16 %v3085
      %v3182 = vunpack.c.l.b16 %v3086
      %v3183 = vunpack.c.l.b16 %v3087
      %v3184 = vunpack.c.l.b16 %v3088
      %v3185 = vunpack.c.l.b16 %v3089
      %v3186 = vunpack.c.l.b16 %v3090
      %v3187 = vpack.c.b16 %v3140, %v3139
      %v3188 = vpack.c.b16 %v3142, %v3141
      %v3189 = vpack.c.b16 %v3144, %v3143
      %v3190 = vpack.c.b16 %v3146, %v3145
      %v3191 = vpack.c.b16 %v3148, %v3147
      %v3192 = vpack.c.b16 %v3150, %v3149
      %v3193 = vpack.c.b16 %v3152, %v3151
      %v3194 = vpack.c.b16 %v3154, %v3153
      %v3195 = vpack.c.b16 %v3156, %v3155
      %v3196 = vpack.c.b16 %v3158, %v3157
      %v3197 = vpack.c.b16 %v3160, %v3159
      %v3198 = vpack.c.b16 %v3162, %v3161
      %v3199 = vpack.c.b16 %v3164, %v3163
      %v3200 = vpack.c.b16 %v3166, %v3165
      %v3201 = vpack.c.b16 %v3168, %v3167
      %v3202 = vpack.c.b16 %v3170, %v3169
      %v3203 = vpack.c.b16 %v3172, %v3171
      %v3204 = vpack.c.b16 %v3174, %v3173
      %v3205 = vpack.c.b16 %v3176, %v3175
      %v3206 = vpack.c.b16 %v3178, %v3177
      %v3207 = vpack.c.b16 %v3180, %v3179
      %v3208 = vpack.c.b16 %v3182, %v3181
      %v3209 = vpack.c.b16 %v3184, %v3183
      %v3210 = vpack.c.b16 %v3186, %v3185
      %3235 = vmatpush.bf16.msra.mxu0 %v3194
      %3236 = vmatpush.bf16.msra.mxu0 %v3193
      %3237 = vmatpush.bf16.msra.mxu0 %v3192
      %3238 = vmatpush.bf16.msra.mxu0 %v3191
      %3239 = vmatpush.bf16.msra.mxu0 %v3190
      %3240 = vmatpush.bf16.msra.mxu0 %v3189
      %3241 = vmatpush.bf16.msra.mxu0 %v3188
      %3242 = vmatpush.bf16.msra.mxu0 %v3187
      %3243 = vmatmul.bf16.gmra.mxu0 %v1873
      %v3244 = vpop.f32.mrf.mxu0
      %v3245 = vadd.f32 0.0, %v3244
      %v3246 = vpop.f32.mrf.mxu0
      %v3247 = vadd.f32 0.0, %v3246
      %3248 = vmatmul.bf16.gmra.mxu0 %v1874
      %v3249 = vpop.f32.mrf.mxu0
      %v3250 = vadd.f32 0.0, %v3249
      %v3251 = vpop.f32.mrf.mxu0
      %v3252 = vadd.f32 0.0, %v3251
      %3253 = vmatmul.bf16.gmra.mxu0 %v1875
      %v3254 = vpop.f32.mrf.mxu0
      %v3255 = vadd.f32 0.0, %v3254
      %v3256 = vpop.f32.mrf.mxu0
      %v3257 = vadd.f32 0.0, %v3256
      %3258 = vmatmul.bf16.gmra.mxu0 %v1876
      %v3259 = vpop.f32.mrf.mxu0
      %v3260 = vadd.f32 0.0, %v3259
      %v3261 = vpop.f32.mrf.mxu0
      %v3262 = vadd.f32 0.0, %v3261
      %3263 = vmatmul.bf16.gmra.mxu0 %v1877
      %v3264 = vpop.f32.mrf.mxu0
      %v3265 = vadd.f32 0.0, %v3264
      %v3266 = vpop.f32.mrf.mxu0
      %v3267 = vadd.f32 0.0, %v3266
      %3268 = vmatmul.bf16.gmra.mxu0 %v1878
      %v3269 = vpop.f32.mrf.mxu0
      %v3270 = vadd.f32 0.0, %v3269
      %v3271 = vpop.f32.mrf.mxu0
      %v3272 = vadd.f32 0.0, %v3271
      %3273 = vmatmul.bf16.gmra.mxu0 %v1879
      %v3274 = vpop.f32.mrf.mxu0
      %v3275 = vadd.f32 0.0, %v3274
      %v3276 = vpop.f32.mrf.mxu0
      %v3277 = vadd.f32 0.0, %v3276
      %3278 = vmatmul.bf16.gmra.mxu0 %v1880
      %v3279 = vpop.f32.mrf.mxu0
      %v3280 = vadd.f32 0.0, %v3279
      %v3281 = vpop.f32.mrf.mxu0
      %v3282 = vadd.f32 0.0, %v3281
      %3283 = vmatmul.bf16.gmra.mxu0 %v1881
      %v3284 = vpop.f32.mrf.mxu0
      %v3285 = vadd.f32 0.0, %v3284
      %v3286 = vpop.f32.mrf.mxu0
      %v3287 = vadd.f32 0.0, %v3286
      %3288 = vmatmul.bf16.gmra.mxu0 %v1882
      %v3289 = vpop.f32.mrf.mxu0
      %v3290 = vadd.f32 0.0, %v3289
      %v3291 = vpop.f32.mrf.mxu0
      %v3292 = vadd.f32 0.0, %v3291
      %3293 = vmatmul.bf16.gmra.mxu0 %v1883
      %v3294 = vpop.f32.mrf.mxu0
      %v3295 = vadd.f32 0.0, %v3294
      %v3296 = vpop.f32.mrf.mxu0
      %v3297 = vadd.f32 0.0, %v3296
      %3298 = vmatmul.bf16.gmra.mxu0 %v1884
      %v3299 = vpop.f32.mrf.mxu0
      %v3300 = vadd.f32 0.0, %v3299
      %v3301 = vpop.f32.mrf.mxu0
      %v3302 = vadd.f32 0.0, %v3301
      %3303 = vmatmul.bf16.gmra.mxu0 %v1885
      %v3304 = vpop.f32.mrf.mxu0
      %v3305 = vadd.f32 0.0, %v3304
      %v3306 = vpop.f32.mrf.mxu0
      %v3307 = vadd.f32 0.0, %v3306
      %3308 = vmatmul.bf16.gmra.mxu0 %v1886
      %v3309 = vpop.f32.mrf.mxu0
      %v3310 = vadd.f32 0.0, %v3309
      %v3311 = vpop.f32.mrf.mxu0
      %v3312 = vadd.f32 0.0, %v3311
      %3313 = vmatmul.bf16.gmra.mxu0 %v1887
      %v3314 = vpop.f32.mrf.mxu0
      %v3315 = vadd.f32 0.0, %v3314
      %v3316 = vpop.f32.mrf.mxu0
      %v3317 = vadd.f32 0.0, %v3316
      %3318 = vmatmul.bf16.gmra.mxu0 %v1888
      %v3319 = vpop.f32.mrf.mxu0
      %v3320 = vadd.f32 0.0, %v3319
      %v3321 = vpop.f32.mrf.mxu0
      %v3322 = vadd.f32 0.0, %v3321
      %3323 = vdwg.mxu0
      %3324 = vmatpush.bf16.msra.mxu0 %v3202
      %3325 = vmatpush.bf16.msra.mxu0 %v3201
      %3326 = vmatpush.bf16.msra.mxu0 %v3200
      %3327 = vmatpush.bf16.msra.mxu0 %v3199
      %3328 = vmatpush.bf16.msra.mxu0 %v3198
      %3329 = vmatpush.bf16.msra.mxu0 %v3197
      %3330 = vmatpush.bf16.msra.mxu0 %v3196
      %3331 = vmatpush.bf16.msra.mxu0 %v3195
      %3332 = vmatmul.bf16.gmra.mxu0 %v1981
      %v3333 = vpop.f32.mrf.mxu0
      %v3334 = vadd.f32 %v3245, %v3333
      %v3335 = vpop.f32.mrf.mxu0
      %v3336 = vadd.f32 %v3247, %v3335
      %3337 = vmatmul.bf16.gmra.mxu0 %v1982
      %v3338 = vpop.f32.mrf.mxu0
      %v3339 = vadd.f32 %v3250, %v3338
      %v3340 = vpop.f32.mrf.mxu0
      %v3341 = vadd.f32 %v3252, %v3340
      %3342 = vmatmul.bf16.gmra.mxu0 %v1983
      %v3343 = vpop.f32.mrf.mxu0
      %v3344 = vadd.f32 %v3255, %v3343
      %v3345 = vpop.f32.mrf.mxu0
      %v3346 = vadd.f32 %v3257, %v3345
      %3347 = vmatmul.bf16.gmra.mxu0 %v1984
      %v3348 = vpop.f32.mrf.mxu0
      %v3349 = vadd.f32 %v3260, %v3348
      %v3350 = vpop.f32.mrf.mxu0
      %v3351 = vadd.f32 %v3262, %v3350
      %3352 = vmatmul.bf16.gmra.mxu0 %v1985
      %v3353 = vpop.f32.mrf.mxu0
      %v3354 = vadd.f32 %v3265, %v3353
      %v3355 = vpop.f32.mrf.mxu0
      %v3356 = vadd.f32 %v3267, %v3355
      %3357 = vmatmul.bf16.gmra.mxu0 %v1986
      %v3358 = vpop.f32.mrf.mxu0
      %v3359 = vadd.f32 %v3270, %v3358
      %v3360 = vpop.f32.mrf.mxu0
      %v3361 = vadd.f32 %v3272, %v3360
      %3362 = vmatmul.bf16.gmra.mxu0 %v1987
      %v3363 = vpop.f32.mrf.mxu0
      %v3364 = vadd.f32 %v3275, %v3363
      %v3365 = vpop.f32.mrf.mxu0
      %v3366 = vadd.f32 %v3277, %v3365
      %3367 = vmatmul.bf16.gmra.mxu0 %v1988
      %v3368 = vpop.f32.mrf.mxu0
      %v3369 = vadd.f32 %v3280, %v3368
      %v3370 = vpop.f32.mrf.mxu0
      %v3371 = vadd.f32 %v3282, %v3370
      %3372 = vmatmul.bf16.gmra.mxu0 %v1989
      %v3373 = vpop.f32.mrf.mxu0
      %v3374 = vadd.f32 %v3285, %v3373
      %v3375 = vpop.f32.mrf.mxu0
      %v3376 = vadd.f32 %v3287, %v3375
      %3377 = vmatmul.bf16.gmra.mxu0 %v1990
      %v3378 = vpop.f32.mrf.mxu0
      %v3379 = vadd.f32 %v3290, %v3378
      %v3380 = vpop.f32.mrf.mxu0
      %v3381 = vadd.f32 %v3292, %v3380
      %3382 = vmatmul.bf16.gmra.mxu0 %v1991
      %v3383 = vpop.f32.mrf.mxu0
      %v3384 = vadd.f32 %v3295, %v3383
      %v3385 = vpop.f32.mrf.mxu0
      %v3386 = vadd.f32 %v3297, %v3385
      %3387 = vmatmul.bf16.gmra.mxu0 %v1992
      %v3388 = vpop.f32.mrf.mxu0
      %v3389 = vadd.f32 %v3300, %v3388
      %v3390 = vpop.f32.mrf.mxu0
      %v3391 = vadd.f32 %v3302, %v3390
      %3392 = vmatmul.bf16.gmra.mxu0 %v1993
      %v3393 = vpop.f32.mrf.mxu0
      %v3394 = vadd.f32 %v3305, %v3393
      %v3395 = vpop.f32.mrf.mxu0
      %v3396 = vadd.f32 %v3307, %v3395
      %3397 = vmatmul.bf16.gmra.mxu0 %v1994
      %v3398 = vpop.f32.mrf.mxu0
      %v3399 = vadd.f32 %v3310, %v3398
      %v3400 = vpop.f32.mrf.mxu0
      %v3401 = vadd.f32 %v3312, %v3400
      %3402 = vmatmul.bf16.gmra.mxu0 %v1995
      %v3403 = vpop.f32.mrf.mxu0
      %v3404 = vadd.f32 %v3315, %v3403
      %v3405 = vpop.f32.mrf.mxu0
      %v3406 = vadd.f32 %v3317, %v3405
      %3407 = vmatmul.bf16.gmra.mxu0 %v1996
      %v3408 = vpop.f32.mrf.mxu0
      %v3409 = vadd.f32 %v3320, %v3408
      %v3410 = vpop.f32.mrf.mxu0
      %v3411 = vadd.f32 %v3322, %v3410
      %3412 = vdwg.mxu0
      %3413 = vmatpush.bf16.msra.mxu0 %v3210
      %3414 = vmatpush.bf16.msra.mxu0 %v3209
      %3415 = vmatpush.bf16.msra.mxu0 %v3208
      %3416 = vmatpush.bf16.msra.mxu0 %v3207
      %3417 = vmatpush.bf16.msra.mxu0 %v3206
      %3418 = vmatpush.bf16.msra.mxu0 %v3205
      %3419 = vmatpush.bf16.msra.mxu0 %v3204
      %3420 = vmatpush.bf16.msra.mxu0 %v3203
      %3421 = vmatmul.bf16.gmra.mxu0 %v2089
      %v3422 = vpop.f32.mrf.mxu0
      %v3423 = vadd.f32 %v3334, %v3422
      %v3424 = vpop.f32.mrf.mxu0
      %v3425 = vadd.f32 %v3336, %v3424
      %3426 = vmatmul.bf16.gmra.mxu0 %v2090
      %v3427 = vpop.f32.mrf.mxu0
      %v3428 = vadd.f32 %v3339, %v3427
      %v3429 = vpop.f32.mrf.mxu0
      %v3430 = vadd.f32 %v3341, %v3429
      %3431 = vmatmul.bf16.gmra.mxu0 %v2091
      %v3432 = vpop.f32.mrf.mxu0
      %v3433 = vadd.f32 %v3344, %v3432
      %v3434 = vpop.f32.mrf.mxu0
      %v3435 = vadd.f32 %v3346, %v3434
      %3436 = vmatmul.bf16.gmra.mxu0 %v2092
      %v3437 = vpop.f32.mrf.mxu0
      %v3438 = vadd.f32 %v3349, %v3437
      %v3439 = vpop.f32.mrf.mxu0
      %v3440 = vadd.f32 %v3351, %v3439
      %3441 = vmatmul.bf16.gmra.mxu0 %v2093
      %v3442 = vpop.f32.mrf.mxu0
      %v3443 = vadd.f32 %v3354, %v3442
      %v3444 = vpop.f32.mrf.mxu0
      %v3445 = vadd.f32 %v3356, %v3444
      %3446 = vmatmul.bf16.gmra.mxu0 %v2094
      %v3447 = vpop.f32.mrf.mxu0
      %v3448 = vadd.f32 %v3359, %v3447
      %v3449 = vpop.f32.mrf.mxu0
      %v3450 = vadd.f32 %v3361, %v3449
      %3451 = vmatmul.bf16.gmra.mxu0 %v2095
      %v3452 = vpop.f32.mrf.mxu0
      %v3453 = vadd.f32 %v3364, %v3452
      %v3454 = vpop.f32.mrf.mxu0
      %v3455 = vadd.f32 %v3366, %v3454
      %3456 = vmatmul.bf16.gmra.mxu0 %v2096
      %v3457 = vpop.f32.mrf.mxu0
      %v3458 = vadd.f32 %v3369, %v3457
      %v3459 = vpop.f32.mrf.mxu0
      %v3460 = vadd.f32 %v3371, %v3459
      %3461 = vmatmul.bf16.gmra.mxu0 %v2097
      %v3462 = vpop.f32.mrf.mxu0
      %v3463 = vadd.f32 %v3374, %v3462
      %v3464 = vpop.f32.mrf.mxu0
      %v3465 = vadd.f32 %v3376, %v3464
      %3466 = vmatmul.bf16.gmra.mxu0 %v2098
      %v3467 = vpop.f32.mrf.mxu0
      %v3468 = vadd.f32 %v3379, %v3467
      %v3469 = vpop.f32.mrf.mxu0
      %v3470 = vadd.f32 %v3381, %v3469
      %3471 = vmatmul.bf16.gmra.mxu0 %v2099
      %v3472 = vpop.f32.mrf.mxu0
      %v3473 = vadd.f32 %v3384, %v3472
      %v3474 = vpop.f32.mrf.mxu0
      %v3475 = vadd.f32 %v3386, %v3474
      %3476 = vmatmul.bf16.gmra.mxu0 %v2100
      %v3477 = vpop.f32.mrf.mxu0
      %v3478 = vadd.f32 %v3389, %v3477
      %v3479 = vpop.f32.mrf.mxu0
      %v3480 = vadd.f32 %v3391, %v3479
      %3481 = vmatmul.bf16.gmra.mxu0 %v2101
      %v3482 = vpop.f32.mrf.mxu0
      %v3483 = vadd.f32 %v3394, %v3482
      %v3484 = vpop.f32.mrf.mxu0
      %v3485 = vadd.f32 %v3396, %v3484
      %3486 = vmatmul.bf16.gmra.mxu0 %v2102
      %v3487 = vpop.f32.mrf.mxu0
      %v3488 = vadd.f32 %v3399, %v3487
      %v3489 = vpop.f32.mrf.mxu0
      %v3490 = vadd.f32 %v3401, %v3489
      %3491 = vmatmul.bf16.gmra.mxu0 %v2103
      %v3492 = vpop.f32.mrf.mxu0
      %v3493 = vadd.f32 %v3404, %v3492
      %v3494 = vpop.f32.mrf.mxu0
      %v3495 = vadd.f32 %v3406, %v3494
      %3496 = vmatmul.bf16.gmra.mxu0 %v2104
      %v3497 = vpop.f32.mrf.mxu0
      %v3498 = vadd.f32 %v3409, %v3497
      %v3499 = vpop.f32.mrf.mxu0
      %v3500 = vadd.f32 %v3411, %v3499
      %3501 = vdwg.mxu0
      %v3502 = vadd.f32 %v2963, %v3423
      %v3503 = vadd.f32 %v2965, %v3425
      %v3504 = vadd.f32 %v2968, %v3428
      %v3505 = vadd.f32 %v2970, %v3430
      %v3506 = vadd.f32 %v2973, %v3433
      %v3507 = vadd.f32 %v2975, %v3435
      %v3508 = vadd.f32 %v2978, %v3438
      %v3509 = vadd.f32 %v2980, %v3440
      %v3510 = vadd.f32 %v2983, %v3443
      %v3511 = vadd.f32 %v2985, %v3445
      %v3512 = vadd.f32 %v2988, %v3448
      %v3513 = vadd.f32 %v2990, %v3450
      %v3514 = vadd.f32 %v2993, %v3453
      %v3515 = vadd.f32 %v2995, %v3455
      %v3516 = vadd.f32 %v2998, %v3458
      %v3517 = vadd.f32 %v3000, %v3460
      %v3518 = vadd.f32 %v3003, %v3463
      %v3519 = vadd.f32 %v3005, %v3465
      %v3520 = vadd.f32 %v3008, %v3468
      %v3521 = vadd.f32 %v3010, %v3470
      %v3522 = vadd.f32 %v3013, %v3473
      %v3523 = vadd.f32 %v3015, %v3475
      %v3524 = vadd.f32 %v3018, %v3478
      %v3525 = vadd.f32 %v3020, %v3480
      %v3526 = vadd.f32 %v3023, %v3483
      %v3527 = vadd.f32 %v3025, %v3485
      %v3528 = vadd.f32 %v3028, %v3488
      %v3529 = vadd.f32 %v3030, %v3490
      %v3530 = vadd.f32 %v3033, %v3493
      %v3531 = vadd.f32 %v3035, %v3495
      %v3532 = vadd.f32 %v3038, %v3498
      %v3533 = vadd.f32 %v3040, %v3500
      %v3534 = vld [vmem:[%s6] sm:$0x1]
      %v3536 = vperm.slane %v3534, 0
      %v3538 = vadd.f32 %v3502, %v3536
      %v3539 = vadd.f32 %v3503, %v3536
      %v3540 = vadd.f32 %v3504, %v3536
      %v3541 = vadd.f32 %v3505, %v3536
      %v3542 = vadd.f32 %v3506, %v3536
      %v3543 = vadd.f32 %v3507, %v3536
      %v3544 = vadd.f32 %v3508, %v3536
      %v3545 = vadd.f32 %v3509, %v3536
      %v3546 = vadd.f32 %v3510, %v3536
      %v3547 = vadd.f32 %v3511, %v3536
      %v3548 = vadd.f32 %v3512, %v3536
      %v3549 = vadd.f32 %v3513, %v3536
      %v3550 = vadd.f32 %v3514, %v3536
      %v3551 = vadd.f32 %v3515, %v3536
      %v3552 = vadd.f32 %v3516, %v3536
      %v3553 = vadd.f32 %v3517, %v3536
      %v3554 = vadd.f32 %v3518, %v3536
      %v3555 = vadd.f32 %v3519, %v3536
      %v3556 = vadd.f32 %v3520, %v3536
      %v3557 = vadd.f32 %v3521, %v3536
      %v3558 = vadd.f32 %v3522, %v3536
      %v3559 = vadd.f32 %v3523, %v3536
      %v3560 = vadd.f32 %v3524, %v3536
      %v3561 = vadd.f32 %v3525, %v3536
      %v3562 = vadd.f32 %v3526, %v3536
      %v3563 = vadd.f32 %v3527, %v3536
      %v3564 = vadd.f32 %v3528, %v3536
      %v3565 = vadd.f32 %v3529, %v3536
      %v3566 = vadd.f32 %v3530, %v3536
      %v3567 = vadd.f32 %v3531, %v3536
      %v3568 = vadd.f32 %v3532, %v3536
      %v3569 = vadd.f32 %v3533, %v3536
      %v3570 = vmax.f32 %v3538, 0.0
      %v3571 = vmax.f32 %v3539, 0.0
      %v3572 = vmax.f32 %v3540, 0.0
      %v3573 = vmax.f32 %v3541, 0.0
      %v3574 = vmax.f32 %v3542, 0.0
      %v3575 = vmax.f32 %v3543, 0.0
      %v3576 = vmax.f32 %v3544, 0.0
      %v3577 = vmax.f32 %v3545, 0.0
      %v3578 = vmax.f32 %v3546, 0.0
      %v3579 = vmax.f32 %v3547, 0.0
      %v3580 = vmax.f32 %v3548, 0.0
      %v3581 = vmax.f32 %v3549, 0.0
      %v3582 = vmax.f32 %v3550, 0.0
      %v3583 = vmax.f32 %v3551, 0.0
      %v3584 = vmax.f32 %v3552, 0.0
      %v3585 = vmax.f32 %v3553, 0.0
      %v3586 = vmax.f32 %v3554, 0.0
      %v3587 = vmax.f32 %v3555, 0.0
      %v3588 = vmax.f32 %v3556, 0.0
      %v3589 = vmax.f32 %v3557, 0.0
      %v3590 = vmax.f32 %v3558, 0.0
      %v3591 = vmax.f32 %v3559, 0.0
      %v3592 = vmax.f32 %v3560, 0.0
      %v3593 = vmax.f32 %v3561, 0.0
      %v3594 = vmax.f32 %v3562, 0.0
      %v3595 = vmax.f32 %v3563, 0.0
      %v3596 = vmax.f32 %v3564, 0.0
      %v3597 = vmax.f32 %v3565, 0.0
      %v3598 = vmax.f32 %v3566, 0.0
      %v3599 = vmax.f32 %v3567, 0.0
      %v3600 = vmax.f32 %v3568, 0.0
      %v3601 = vmax.f32 %v3569, 0.0
      %v3602 = vpack.c.bf16 %v3571, %v3570
      %v3603 = vpack.c.bf16 %v3573, %v3572
      %v3604 = vpack.c.bf16 %v3575, %v3574
      %v3605 = vpack.c.bf16 %v3577, %v3576
      %v3606 = vpack.c.bf16 %v3579, %v3578
      %v3607 = vpack.c.bf16 %v3581, %v3580
      %v3608 = vpack.c.bf16 %v3583, %v3582
      %v3609 = vpack.c.bf16 %v3585, %v3584
      %v3610 = vpack.c.bf16 %v3587, %v3586
      %v3611 = vpack.c.bf16 %v3589, %v3588
      %v3612 = vpack.c.bf16 %v3591, %v3590
      %v3613 = vpack.c.bf16 %v3593, %v3592
      %v3614 = vpack.c.bf16 %v3595, %v3594
      %v3615 = vpack.c.bf16 %v3597, %v3596
      %v3616 = vpack.c.bf16 %v3599, %v3598
      %v3617 = vpack.c.bf16 %v3601, %v3600
      %v3618 = vld [vmem:[%s7] sm:$0xf]
      %v3619 = vld [vmem:[%s7 + $0x4] sm:$0xf]
      %v3620 = vld [vmem:[%s7 + $0x8] sm:$0xf]
      %v3621 = vld [vmem:[%s7 + $0xc] sm:$0xf]
      %v3622 = vld [vmem:[%s7 + $0x10] sm:$0xf]
      %v3623 = vld [vmem:[%s7 + $0x14] sm:$0xf]
      %v3624 = vld [vmem:[%s7 + $0x18] sm:$0xf]
      %v3625 = vld [vmem:[%s7 + $0x1c] sm:$0xf]
      %v3626 = vld [vmem:[%s7 + $0x20] sm:$0xf]
      %v3627 = vld [vmem:[%s7 + $0x24] sm:$0xf]
      %v3628 = vld [vmem:[%s7 + $0x28] sm:$0xf]
      %v3629 = vld [vmem:[%s7 + $0x2c] sm:$0xf]
      %v3630 = vld [vmem:[%s7 + $0x30] sm:$0xf]
      %v3631 = vld [vmem:[%s7 + $0x34] sm:$0xf]
      %v3632 = vld [vmem:[%s7 + $0x38] sm:$0xf]
      %v3633 = vld [vmem:[%s7 + $0x3c] sm:$0xf]
      %v3634 = vld [vmem:[%s8] sm:$0x1]
      %v3636 = vperm.slane %v3634, 0
      %v3654 = vunpack.c.l.b16 %v3618
      %v3655 = vunpack.c.l.b16 %v3619
      %v3656 = vunpack.c.l.b16 %v3620
      %v3657 = vunpack.c.l.b16 %v3621
      %v3658 = vunpack.c.l.b16 %v3622
      %v3659 = vunpack.c.l.b16 %v3623
      %v3660 = vunpack.c.l.b16 %v3624
      %v3661 = vunpack.c.l.b16 %v3625
      %v3662 = vunpack.c.l.b16 %v3626
      %v3663 = vunpack.c.l.b16 %v3627
      %v3664 = vunpack.c.l.b16 %v3628
      %v3665 = vunpack.c.l.b16 %v3629
      %v3666 = vunpack.c.l.b16 %v3630
      %v3667 = vunpack.c.l.b16 %v3631
      %v3668 = vunpack.c.l.b16 %v3632
      %v3669 = vunpack.c.l.b16 %v3633
      %v3670 = vpack.c.b16 %v3655, %v3654
      %v3671 = vpack.c.b16 %v3657, %v3656
      %v3672 = vpack.c.b16 %v3659, %v3658
      %v3673 = vpack.c.b16 %v3661, %v3660
      %v3674 = vpack.c.b16 %v3663, %v3662
      %v3675 = vpack.c.b16 %v3665, %v3664
      %v3676 = vpack.c.b16 %v3667, %v3666
      %v3677 = vpack.c.b16 %v3669, %v3668
      %3686 = vmatpush.bf16.msra.mxu0 %v3677
      %3687 = vmatpush.bf16.msra.mxu0 %v3676
      %3688 = vmatpush.bf16.msra.mxu0 %v3675
      %3689 = vmatpush.bf16.msra.mxu0 %v3674
      %3690 = vmatpush.bf16.msra.mxu0 %v3673
      %3691 = vmatpush.bf16.msra.mxu0 %v3672
      %3692 = vmatpush.bf16.msra.mxu0 %v3671
      %3693 = vmatpush.bf16.msra.mxu0 %v3670
      %3694 = vmatmul.bf16.gmra.mxu0 %v3602
      %v3695 = vpop.f32.mrf.mxu0
      %v3696 = vadd.f32 %v3636, %v3695
      %v3697 = vpop.f32.mrf.mxu0
      %v3698 = vadd.f32 %v3636, %v3697
      %3699 = vmatmul.bf16.gmra.mxu0 %v3603
      %v3700 = vpop.f32.mrf.mxu0
      %v3701 = vadd.f32 %v3636, %v3700
      %v3702 = vpop.f32.mrf.mxu0
      %v3703 = vadd.f32 %v3636, %v3702
      %3704 = vmatmul.bf16.gmra.mxu0 %v3604
      %v3705 = vpop.f32.mrf.mxu0
      %v3706 = vadd.f32 %v3636, %v3705
      %v3707 = vpop.f32.mrf.mxu0
      %v3708 = vadd.f32 %v3636, %v3707
      %3709 = vmatmul.bf16.gmra.mxu0 %v3605
      %v3710 = vpop.f32.mrf.mxu0
      %v3711 = vadd.f32 %v3636, %v3710
      %v3712 = vpop.f32.mrf.mxu0
      %v3713 = vadd.f32 %v3636, %v3712
      %3714 = vmatmul.bf16.gmra.mxu0 %v3606
      %v3715 = vpop.f32.mrf.mxu0
      %v3716 = vadd.f32 %v3636, %v3715
      %v3717 = vpop.f32.mrf.mxu0
      %v3718 = vadd.f32 %v3636, %v3717
      %3719 = vmatmul.bf16.gmra.mxu0 %v3607
      %v3720 = vpop.f32.mrf.mxu0
      %v3721 = vadd.f32 %v3636, %v3720
      %v3722 = vpop.f32.mrf.mxu0
      %v3723 = vadd.f32 %v3636, %v3722
      %3724 = vmatmul.bf16.gmra.mxu0 %v3608
      %v3725 = vpop.f32.mrf.mxu0
      %v3726 = vadd.f32 %v3636, %v3725
      %v3727 = vpop.f32.mrf.mxu0
      %v3728 = vadd.f32 %v3636, %v3727
      %3729 = vmatmul.bf16.gmra.mxu0 %v3609
      %v3730 = vpop.f32.mrf.mxu0
      %v3731 = vadd.f32 %v3636, %v3730
      %v3732 = vpop.f32.mrf.mxu0
      %v3733 = vadd.f32 %v3636, %v3732
      %3734 = vmatmul.bf16.gmra.mxu0 %v3610
      %v3735 = vpop.f32.mrf.mxu0
      %v3736 = vadd.f32 %v3636, %v3735
      %v3737 = vpop.f32.mrf.mxu0
      %v3738 = vadd.f32 %v3636, %v3737
      %3739 = vmatmul.bf16.gmra.mxu0 %v3611
      %v3740 = vpop.f32.mrf.mxu0
      %v3741 = vadd.f32 %v3636, %v3740
      %v3742 = vpop.f32.mrf.mxu0
      %v3743 = vadd.f32 %v3636, %v3742
      %3744 = vmatmul.bf16.gmra.mxu0 %v3612
      %v3745 = vpop.f32.mrf.mxu0
      %v3746 = vadd.f32 %v3636, %v3745
      %v3747 = vpop.f32.mrf.mxu0
      %v3748 = vadd.f32 %v3636, %v3747
      %3749 = vmatmul.bf16.gmra.mxu0 %v3613
      %v3750 = vpop.f32.mrf.mxu0
      %v3751 = vadd.f32 %v3636, %v3750
      %v3752 = vpop.f32.mrf.mxu0
      %v3753 = vadd.f32 %v3636, %v3752
      %3754 = vmatmul.bf16.gmra.mxu0 %v3614
      %v3755 = vpop.f32.mrf.mxu0
      %v3756 = vadd.f32 %v3636, %v3755
      %v3757 = vpop.f32.mrf.mxu0
      %v3758 = vadd.f32 %v3636, %v3757
      %3759 = vmatmul.bf16.gmra.mxu0 %v3615
      %v3760 = vpop.f32.mrf.mxu0
      %v3761 = vadd.f32 %v3636, %v3760
      %v3762 = vpop.f32.mrf.mxu0
      %v3763 = vadd.f32 %v3636, %v3762
      %3764 = vmatmul.bf16.gmra.mxu0 %v3616
      %v3765 = vpop.f32.mrf.mxu0
      %v3766 = vadd.f32 %v3636, %v3765
      %v3767 = vpop.f32.mrf.mxu0
      %v3768 = vadd.f32 %v3636, %v3767
      %3769 = vmatmul.bf16.gmra.mxu0 %v3617
      %v3770 = vpop.f32.mrf.mxu0
      %v3771 = vadd.f32 %v3636, %v3770
      %v3772 = vpop.f32.mrf.mxu0
      %v3773 = vadd.f32 %v3636, %v3772
      %3774 = vdwg.mxu0
      %v3775 = vadd.f32 %v518, %v3696
      %v3776 = vadd.f32 %v519, %v3698
      %v3777 = vadd.f32 %v520, %v3701
      %v3778 = vadd.f32 %v521, %v3703
      %v3779 = vadd.f32 %v522, %v3706
      %v3780 = vadd.f32 %v523, %v3708
      %v3781 = vadd.f32 %v524, %v3711
      %v3782 = vadd.f32 %v525, %v3713
      %v3783 = vadd.f32 %v526, %v3716
      %v3784 = vadd.f32 %v527, %v3718
      %v3785 = vadd.f32 %v528, %v3721
      %v3786 = vadd.f32 %v529, %v3723
      %v3787 = vadd.f32 %v530, %v3726
      %v3788 = vadd.f32 %v531, %v3728
      %v3789 = vadd.f32 %v532, %v3731
      %v3790 = vadd.f32 %v533, %v3733
      %v3791 = vadd.f32 %v534, %v3736
      %v3792 = vadd.f32 %v535, %v3738
      %v3793 = vadd.f32 %v536, %v3741
      %v3794 = vadd.f32 %v537, %v3743
      %v3795 = vadd.f32 %v538, %v3746
      %v3796 = vadd.f32 %v539, %v3748
      %v3797 = vadd.f32 %v540, %v3751
      %v3798 = vadd.f32 %v541, %v3753
      %v3799 = vadd.f32 %v542, %v3756
      %v3800 = vadd.f32 %v543, %v3758
      %v3801 = vadd.f32 %v544, %v3761
      %v3802 = vadd.f32 %v545, %v3763
      %v3803 = vadd.f32 %v546, %v3766
      %v3804 = vadd.f32 %v547, %v3768
      %v3805 = vadd.f32 %v548, %v3771
      %v3806 = vadd.f32 %v549, %v3773
      %3807 = vst [vmem:[%s499] sm:$0xff] %v3775
      %3808 = vst [vmem:[%s499 + $0x8] sm:$0xff] %v3776
      %3809 = vst [vmem:[%s499 + $0x10] sm:$0xff] %v3777
      %3810 = vst [vmem:[%s499 + $0x18] sm:$0xff] %v3778
      %3811 = vst [vmem:[%s499 + $0x20] sm:$0xff] %v3779
      %3812 = vst [vmem:[%s499 + $0x28] sm:$0xff] %v3780
      %3813 = vst [vmem:[%s499 + $0x30] sm:$0xff] %v3781
      %3814 = vst [vmem:[%s499 + $0x38] sm:$0xff] %v3782
      %3815 = vst [vmem:[%s499 + $0x40] sm:$0xff] %v3783
      %3816 = vst [vmem:[%s499 + $0x48] sm:$0xff] %v3784
      %3817 = vst [vmem:[%s499 + $0x50] sm:$0xff] %v3785
      %3818 = vst [vmem:[%s499 + $0x58] sm:$0xff] %v3786
      %3819 = vst [vmem:[%s499 + $0x60] sm:$0xff] %v3787
      %3820 = vst [vmem:[%s499 + $0x68] sm:$0xff] %v3788
      %3821 = vst [vmem:[%s499 + $0x70] sm:$0xff] %v3789
      %3822 = vst [vmem:[%s499 + $0x78] sm:$0xff] %v3790
      %3823 = vst [vmem:[%s499 + $0x80] sm:$0xff] %v3791
      %3824 = vst [vmem:[%s499 + $0x88] sm:$0xff] %v3792
      %3825 = vst [vmem:[%s499 + $0x90] sm:$0xff] %v3793
      %3826 = vst [vmem:[%s499 + $0x98] sm:$0xff] %v3794
      %3827 = vst [vmem:[%s499 + $0xa0] sm:$0xff] %v3795
      %3828 = vst [vmem:[%s499 + $0xa8] sm:$0xff] %v3796
      %3829 = vst [vmem:[%s499 + $0xb0] sm:$0xff] %v3797
      %3830 = vst [vmem:[%s499 + $0xb8] sm:$0xff] %v3798
      %3831 = vst [vmem:[%s499 + $0xc0] sm:$0xff] %v3799
      %3832 = vst [vmem:[%s499 + $0xc8] sm:$0xff] %v3800
      %3833 = vst [vmem:[%s499 + $0xd0] sm:$0xff] %v3801
      %3834 = vst [vmem:[%s499 + $0xd8] sm:$0xff] %v3802
      %3835 = vst [vmem:[%s499 + $0xe0] sm:$0xff] %v3803
      %3836 = vst [vmem:[%s499 + $0xe8] sm:$0xff] %v3804
      %3837 = vst [vmem:[%s499 + $0xf0] sm:$0xff] %v3805
      %3838 = vst [vmem:[%s499 + $0xf8] sm:$0xff] %v3806
      %s3839 = smul.u32 16, %s25
      %p3840 = scmp.lt.s32.totalorder %s24, 1
      %s3841 = scalar_select %p3840, %s24, 1
      %p3842 = scmp.lt.s32.totalorder %s3839, 15
      %s3843 = scalar_select %p3842, %s3839, 15
      %s3844 = smul.addr %s3843, 2
      %s3845 = smul.addr %s3841, 32
      %s3846 = sadd.s32 %s3844, %s3845
      %s3847 = smul.addr %s3846, 8
      %s3848 = scalar_lea.vmem %s9, %s3847
      // Predicated region
      $region57: #{residual_block_forward_nhwc.1} parent=55 // pred_check
        %p3849 = pneg %p278
      $region58: #{residual_block_forward_nhwc.1} parent=55 // pred_check_branch
        %3851 = sbr.rel (%p3849) target = $region60
      $region59: #{residual_block_forward_nhwc.1} parent=55 // pred_region
        %s3852 = smul.u32 16, %s25
      $region60: #{residual_block_forward_nhwc.1} parent=55 // pred_fallthru
        _
    $region56: #{residual_block_forward_nhwc.1} parent=5 // pred_fallthru
      _
    %p3853 = scmp.le.s32.totalorder 2, %s15
    // Predicated region
    $region61: #{residual_block_forward_nhwc.1} parent=5 // pred_check
      %p3854 = pneg %p3853
    $region62: #{residual_block_forward_nhwc.1} parent=5 // pred_check_branch
      %3856 = sbr.rel (%p3854) target = $region64
    $region63: #{residual_block_forward_nhwc.1} parent=5 // pred_region
      %s3857 = ssub.s32 %s15, 2
      // Predicated region
      $region65: #{residual_block_forward_nhwc.1} parent=63 // pred_check
        %p3858 = pneg %p284
      $region66: #{residual_block_forward_nhwc.1} parent=63 // pred_check_branch
        %3860 = sbr.rel (%p3858) target = $region68
      $region67: #{residual_block_forward_nhwc.1} parent=63 // pred_region
        %s3861 = smul.u32 16, %s27
        %p3862 = scmp.lt.s32.totalorder %s26, 1
        %s3863 = scalar_select %p3862, %s26, 1
        %p3864 = scmp.lt.s32.totalorder %s3861, 15
        %s3865 = scalar_select %p3864, %s3861, 15
        %s3866 = smul.addr %s3865, 2
        %s3867 = smul.addr %s3863, 32
        %s3868 = sadd.s32 %s3866, %s3867
        %s3869 = smul.addr %s3868, 8
        %s3870 = scalar_lea.vmem %s9, %s3869
      $region68: #{residual_block_forward_nhwc.1} parent=63 // pred_fallthru
        _
    $region64: #{residual_block_forward_nhwc.1} parent=5 // pred_fallthru
      _
  $region6: #{residual_block_forward_nhwc.1} parent=0 // loop_footer
    %s19 = sadd.s32 1, %s15
  $region7: #{residual_block_forward_nhwc.1} parent=0 // loop_footer_branch
    %14 = sbr.rel target = $region3
  $region8: #{residual_block_forward_nhwc.1} parent=0 // loop_exit
    _

</llo_original>
